<compile_context>
chip_gen: v7x
topology: tpu7x:2x2x1
jax: 0.10.0
libtpu: 0.0.40
codegen_flags: <defaults>
</compile_context>

<pallas_src>
import math

import jax
import jax.numpy as jnp
from jax.experimental import pallas as pl
from jax.experimental.pallas import tpu as pltpu

_LANE = 128


def _lstm_kernel(x_ref,                         # (T, B, I)   f32
                 wih0_ref, b0_ref,              # (I, 4HP) f32, (1, 4HP) f32
                 whh0_ref,                      # (HP, 4HP)   bf16
                 w1_ref, b1_ref,                # (2HP, 4HP) bf16, (1, 4HP) f32
                 fcw_ref, fcb_ref,              # (1, HP) f32, (1, 1) f32
                 out_ref):                      # (B, 1)      f32
    T, B, I = x_ref.shape
    HP = whh0_ref.shape[0]

    # ---- Hoisted layer-0 input projection, kept in vregs (no VMEM scratch).
    # With I == 1 this is a single vectorized broadcast-multiply over all T.
    x = x_ref[...]
    if I == 1:
        xg0 = x * wih0_ref[...] + b0_ref[...]                         # (T, B, 4HP)
    else:
        xg0 = (jnp.einsum("tbi,ig->tbg", x, wih0_ref[...],
                          preferred_element_type=jnp.float32)
               + b0_ref[...])

    # Hoisted bias broadcast for layer 1 (JAX does not CSE broadcast_in_dim).
    b1_b = jnp.broadcast_to(b1_ref[...], (B, 4 * HP))

    def sigmoid(v):
        # One EUP tanh + VPU scale/add instead of exp + reciprocal (two serial
        # EUP ops). The nonlinearities sit on the recurrent critical path.
        return 0.5 * jnp.tanh(0.5 * v) + 0.5

    def gate_apply(gates, c):
        # Gate boundaries are multiples of 128 lanes -> whole-vreg slices.
        i = sigmoid(gates[:, 0 * HP:1 * HP])
        f = sigmoid(gates[:, 1 * HP:2 * HP])
        g = jnp.tanh(gates[:, 2 * HP:3 * HP])
        o = sigmoid(gates[:, 3 * HP:4 * HP])
        c_new = f * c + i * g
        h_new = o * jnp.tanh(c_new)
        return h_new, c_new

    zeros = jnp.zeros((B, HP), jnp.float32)
    h0, c0, h1, c1 = zeros, zeros, zeros, zeros

    # Fully unrolled time loop (T is small & static); static slice of xg0 per step.
    # Weight ref reads stay inside the loop body (hoisting ~192 vregs would spill).
    for t in range(T):
        # layer 0: only the recurrent matmul remains on the serial path
        g0 = xg0[t] + jnp.dot(h0.astype(jnp.bfloat16), whh0_ref[...],
                              preferred_element_type=jnp.float32)
        h0, c0 = gate_apply(g0, c0)
        # layer 1: fused [W_ih1; W_hh1] -> single MXU pass per step
        h_cat = jnp.concatenate([h0, h1], axis=-1).astype(jnp.bfloat16)
        g1 = jnp.dot(h_cat, w1_ref[...],
                     preferred_element_type=jnp.float32) + b1_b
        h1, c1 = gate_apply(g1, c1)

    # fc on out[:, -1, :]: VPU multiply + lane reduction (padded fc_w lanes are zero).
    out_ref[...] = (jnp.sum(h1 * fcw_ref[...], axis=-1, keepdims=True)
                    + fcb_ref[...])


def _pad_gate_cols(w, H, HP):
    """(K, 4H) -> (K, 4HP); gate g occupies columns [g*HP, g*HP + H), rest zero."""
    cols = []
    for g in range(4):
        cols.append(jnp.pad(w[:, g * H:(g + 1) * H], ((0, 0), (0, HP - H))))
    return jnp.concatenate(cols, axis=1)


def init_params(key, input_size=1, hidden_size=50):
    """Deterministic init matching PyTorch default U(-1/sqrt(H), 1/sqrt(H))."""
    H = hidden_size
    bound = 1.0 / math.sqrt(H)
    ks = jax.random.split(key, 11)
    u = lambda k, shape: jax.random.uniform(k, shape, jnp.float32, -bound, bound)
    return {
        # layer 0
        "w_ih_l0": u(ks[0], (4 * H, input_size)),
        "w_hh_l0": u(ks[1], (4 * H, H)),
        "b_ih_l0": u(ks[2], (4 * H,)),
        "b_hh_l0": u(ks[3], (4 * H,)),
        # layer 1
        "w_ih_l1": u(ks[4], (4 * H, H)),
        "w_hh_l1": u(ks[5], (4 * H, H)),
        "b_ih_l1": u(ks[6], (4 * H,)),
        "b_hh_l1": u(ks[7], (4 * H,)),
        # fc
        "fc_w": u(ks[8], (1, H)),
        "fc_b": u(ks[9], (1,)),
    }


def lstm_model_forward(x, params):
    """x: (B, T, I) float32 -> (B, 1) float32 (matches LSTMModel.forward, eval mode)."""
    B, T, I = x.shape
    H = params["w_hh_l0"].shape[1]
    HP = ((H + _LANE - 1) // _LANE) * _LANE     # per-gate slab width (lane aligned)

    x_tbi = jnp.transpose(x, (1, 0, 2)).astype(jnp.float32)            # (T, B, I)

    def pad_w(w, pad_rows_to=None):
        """PyTorch (4H, K) weight -> transposed, gate-slab padded (K[, ->pad], 4HP)."""
        wp = _pad_gate_cols(w.T.astype(jnp.float32), H, HP)            # (K, 4HP)
        if pad_rows_to is not None:
            # padded h lanes may carry nonzero data -> their weight rows must be zero
            wp = jnp.pad(wp, ((0, pad_rows_to - wp.shape[0]), (0, 0)))
        return wp

    def pad_bias(bih, bhh):
        return _pad_gate_cols((bih + bhh).reshape(1, 4 * H).astype(jnp.float32), H, HP)

    # layer 0: input projection stays f32 (pure VPU path), recurrent weight bf16 (MXU)
    wih0 = pad_w(params["w_ih_l0"])                                    # (I, 4HP)  f32
    whh0 = pad_w(params["w_hh_l0"], HP).astype(jnp.bfloat16)           # (HP, 4HP) bf16
    b0 = pad_bias(params["b_ih_l0"], params["b_hh_l0"])                # (1, 4HP)  f32

    # layer 1: fuse [W_ih1; W_hh1] into a single (2HP, 4HP) bf16 weight
    wih1 = pad_w(params["w_ih_l1"], HP)                                # (HP, 4HP)
    whh1 = pad_w(params["w_hh_l1"], HP)                                # (HP, 4HP)
    w1 = jnp.concatenate([wih1, whh1], axis=0).astype(jnp.bfloat16)    # (2HP, 4HP) bf16
    b1 = pad_bias(params["b_ih_l1"], params["b_hh_l1"])                # (1, 4HP)  f32

    fcw = jnp.pad(params["fc_w"].astype(jnp.float32), ((0, 0), (0, HP - H)))   # (1, HP)
    fcb = params["fc_b"].reshape(1, 1).astype(jnp.float32)                     # (1, 1)

    vmem = pl.BlockSpec(memory_space=pltpu.MemorySpace.VMEM)
    out = pl.pallas_call(
        _lstm_kernel,
        out_shape=jax.ShapeDtypeStruct((B, 1), jnp.float32),
        in_specs=[vmem] * 8,
        out_specs=vmem,
    )(x_tbi, wih0, b0, whh0, w1, b1, fcw, fcb)
    return out


if __name__ == "__main__":
    key = jax.random.PRNGKey(0)
    k_param, k_x = jax.random.split(key)

    B, T, I, H = 2, 8, 1, 50
    params = init_params(k_param, input_size=I, hidden_size=H)
    x = jax.random.normal(k_x, (B, T, I), dtype=jnp.float32)

    out = lstm_model_forward(x, params)
    jax.block_until_ready(out)
    assert out.shape == (B, 1) and out.dtype == jnp.float32
    assert bool(jnp.all(jnp.isfinite(out)))
    print("KERNEL_OK")
</pallas_src>

<mosaic_0001>
module attributes {stable_mosaic.version = 11 : i64} {
  func.func @_lstm_kernel(%arg0: memref<8x2x1xf32, #tpu.memory_space<vmem>>, %arg1: memref<1x512xf32, #tpu.memory_space<vmem>>, %arg2: memref<1x512xf32, #tpu.memory_space<vmem>>, %arg3: memref<128x512xbf16, #tpu.memory_space<vmem>>, %arg4: memref<256x512xbf16, #tpu.memory_space<vmem>>, %arg5: memref<1x512xf32, #tpu.memory_space<vmem>>, %arg6: memref<1x128xf32, #tpu.memory_space<vmem>>, %arg7: memref<1x1xf32, #tpu.memory_space<vmem>>, %arg8: memref<2x1xf32, #tpu.memory_space<vmem>>) attributes {dimension_semantics = [], scalar_prefetch = 0 : i64, scratch_operands = 0 : i64, tpu.core_type = #tpu.core_type<tc>} {
    %c0 = arith.constant 0 : index
    %c0_0 = arith.constant 0 : index
    %c0_1 = arith.constant 0 : index
    %0 = vector.load %arg0[%c0, %c0_0, %c0_1] : memref<8x2x1xf32, #tpu.memory_space<vmem>>, vector<8x2x1xf32>
    %c0_2 = arith.constant 0 : index
    %c0_3 = arith.constant 0 : index
    %1 = vector.load %arg1[%c0_2, %c0_3] : memref<1x512xf32, #tpu.memory_space<vmem>>, vector<1x512xf32>
    %2 = vector.shape_cast %1 : vector<1x512xf32> to vector<1x1x512xf32>
    %3 = vector.broadcast %0 : vector<8x2x1xf32> to vector<8x2x512xf32>
    %4 = vector.broadcast %2 : vector<1x1x512xf32> to vector<8x2x512xf32>
    %5 = arith.mulf %3, %4 : vector<8x2x512xf32>
    %c0_4 = arith.constant 0 : index
    %c0_5 = arith.constant 0 : index
    %6 = vector.load %arg2[%c0_4, %c0_5] : memref<1x512xf32, #tpu.memory_space<vmem>>, vector<1x512xf32>
    %7 = vector.shape_cast %6 : vector<1x512xf32> to vector<1x1x512xf32>
    %8 = vector.broadcast %7 : vector<1x1x512xf32> to vector<8x2x512xf32>
    %9 = arith.addf %5, %8 : vector<8x2x512xf32>
    %c0_6 = arith.constant 0 : index
    %c0_7 = arith.constant 0 : index
    %10 = vector.load %arg5[%c0_6, %c0_7] : memref<1x512xf32, #tpu.memory_space<vmem>>, vector<1x512xf32>
    %11 = vector.shape_cast %10 : vector<1x512xf32> to vector<1x512xf32>
    %12 = vector.broadcast %11 : vector<1x512xf32> to vector<2x512xf32>
    %cst = arith.constant 0.000000e+00 : f32
    %13 = vector.broadcast %cst : f32 to vector<2x128xf32>
    %14 = vector.extract_strided_slice %9 {offsets = [0, 0, 0], sizes = [1, 2, 512], strides = [1, 1, 1]} : vector<8x2x512xf32> to vector<1x2x512xf32>
    %15 = vector.shape_cast %14 : vector<1x2x512xf32> to vector<2x512xf32>
    %16 = arith.truncf %13 : vector<2x128xf32> to vector<2x128xbf16>
    %c0_8 = arith.constant 0 : index
    %c0_9 = arith.constant 0 : index
    %17 = vector.load %arg3[%c0_8, %c0_9] : memref<128x512xbf16, #tpu.memory_space<vmem>>, vector<128x512xbf16>
    %cst_10 = arith.constant dense<0.000000e+00> : vector<2x512xf32>
    %18 = tpu.matmul %16, %17, %cst_10 {dimension_numbers = #tpu.dot_dimension_numbers<[1], [0], [0], [1], [0, 0, 1, 1], [], []>} : vector<2x128xbf16>, vector<128x512xbf16>, vector<2x512xf32> -> vector<2x512xf32>
    %19 = arith.addf %15, %18 : vector<2x512xf32>
    %20 = vector.extract_strided_slice %19 {offsets = [0, 0], sizes = [2, 128], strides = [1, 1]} : vector<2x512xf32> to vector<2x128xf32>
    %cst_11 = arith.constant 5.000000e-01 : f32
    %21 = vector.broadcast %cst_11 : f32 to vector<2x128xf32>
    %22 = arith.mulf %21, %20 : vector<2x128xf32>
    %23 = math.tanh %22 : vector<2x128xf32>
    %cst_12 = arith.constant 5.000000e-01 : f32
    %24 = vector.broadcast %cst_12 : f32 to vector<2x128xf32>
    %25 = arith.mulf %24, %23 : vector<2x128xf32>
    %cst_13 = arith.constant 5.000000e-01 : f32
    %26 = vector.broadcast %cst_13 : f32 to vector<2x128xf32>
    %27 = arith.addf %25, %26 : vector<2x128xf32>
    %28 = vector.extract_strided_slice %19 {offsets = [0, 128], sizes = [2, 128], strides = [1, 1]} : vector<2x512xf32> to vector<2x128xf32>
    %cst_14 = arith.constant 5.000000e-01 : f32
    %29 = vector.broadcast %cst_14 : f32 to vector<2x128xf32>
    %30 = arith.mulf %29, %28 : vector<2x128xf32>
    %31 = math.tanh %30 : vector<2x128xf32>
    %cst_15 = arith.constant 5.000000e-01 : f32
    %32 = vector.broadcast %cst_15 : f32 to vector<2x128xf32>
    %33 = arith.mulf %32, %31 : vector<2x128xf32>
    %cst_16 = arith.constant 5.000000e-01 : f32
    %34 = vector.broadcast %cst_16 : f32 to vector<2x128xf32>
    %35 = arith.addf %33, %34 : vector<2x128xf32>
    %36 = vector.extract_strided_slice %19 {offsets = [0, 256], sizes = [2, 128], strides = [1, 1]} : vector<2x512xf32> to vector<2x128xf32>
    %37 = math.tanh %36 : vector<2x128xf32>
    %38 = vector.extract_strided_slice %19 {offsets = [0, 384], sizes = [2, 128], strides = [1, 1]} : vector<2x512xf32> to vector<2x128xf32>
    %cst_17 = arith.constant 5.000000e-01 : f32
    %39 = vector.broadcast %cst_17 : f32 to vector<2x128xf32>
    %40 = arith.mulf %39, %38 : vector<2x128xf32>
    %41 = math.tanh %40 : vector<2x128xf32>
    %cst_18 = arith.constant 5.000000e-01 : f32
    %42 = vector.broadcast %cst_18 : f32 to vector<2x128xf32>
    %43 = arith.mulf %42, %41 : vector<2x128xf32>
    %cst_19 = arith.constant 5.000000e-01 : f32
    %44 = vector.broadcast %cst_19 : f32 to vector<2x128xf32>
    %45 = arith.addf %43, %44 : vector<2x128xf32>
    %46 = arith.mulf %35, %13 : vector<2x128xf32>
    %47 = arith.mulf %27, %37 : vector<2x128xf32>
    %48 = arith.addf %46, %47 : vector<2x128xf32>
    %49 = math.tanh %48 : vector<2x128xf32>
    %50 = arith.mulf %45, %49 : vector<2x128xf32>
    %51 = tpu.concatenate %50, %13 in 1 : vector<2x128xf32>, vector<2x128xf32> -> vector<2x256xf32>
    %52 = arith.truncf %51 : vector<2x256xf32> to vector<2x256xbf16>
    %c0_20 = arith.constant 0 : index
    %c0_21 = arith.constant 0 : index
    %53 = vector.load %arg4[%c0_20, %c0_21] : memref<256x512xbf16, #tpu.memory_space<vmem>>, vector<256x512xbf16>
    %cst_22 = arith.constant dense<0.000000e+00> : vector<2x512xf32>
    %54 = tpu.matmul %52, %53, %cst_22 {dimension_numbers = #tpu.dot_dimension_numbers<[1], [0], [0], [1], [0, 0, 1, 1], [], []>} : vector<2x256xbf16>, vector<256x512xbf16>, vector<2x512xf32> -> vector<2x512xf32>
    %55 = arith.addf %54, %12 : vector<2x512xf32>
    %56 = vector.extract_strided_slice %55 {offsets = [0, 0], sizes = [2, 128], strides = [1, 1]} : vector<2x512xf32> to vector<2x128xf32>
    %cst_23 = arith.constant 5.000000e-01 : f32
    %57 = vector.broadcast %cst_23 : f32 to vector<2x128xf32>
    %58 = arith.mulf %57, %56 : vector<2x128xf32>
    %59 = math.tanh %58 : vector<2x128xf32>
    %cst_24 = arith.constant 5.000000e-01 : f32
    %60 = vector.broadcast %cst_24 : f32 to vector<2x128xf32>
    %61 = arith.mulf %60, %59 : vector<2x128xf32>
    %cst_25 = arith.constant 5.000000e-01 : f32
    %62 = vector.broadcast %cst_25 : f32 to vector<2x128xf32>
    %63 = arith.addf %61, %62 : vector<2x128xf32>
    %64 = vector.extract_strided_slice %55 {offsets = [0, 128], sizes = [2, 128], strides = [1, 1]} : vector<2x512xf32> to vector<2x128xf32>
    %cst_26 = arith.constant 5.000000e-01 : f32
    %65 = vector.broadcast %cst_26 : f32 to vector<2x128xf32>
    %66 = arith.mulf %65, %64 : vector<2x128xf32>
    %67 = math.tanh %66 : vector<2x128xf32>
    %cst_27 = arith.constant 5.000000e-01 : f32
    %68 = vector.broadcast %cst_27 : f32 to vector<2x128xf32>
    %69 = arith.mulf %68, %67 : vector<2x128xf32>
    %cst_28 = arith.constant 5.000000e-01 : f32
    %70 = vector.broadcast %cst_28 : f32 to vector<2x128xf32>
    %71 = arith.addf %69, %70 : vector<2x128xf32>
    %72 = vector.extract_strided_slice %55 {offsets = [0, 256], sizes = [2, 128], strides = [1, 1]} : vector<2x512xf32> to vector<2x128xf32>
    %73 = math.tanh %72 : vector<2x128xf32>
    %74 = vector.extract_strided_slice %55 {offsets = [0, 384], sizes = [2, 128], strides = [1, 1]} : vector<2x512xf32> to vector<2x128xf32>
    %cst_29 = arith.constant 5.000000e-01 : f32
    %75 = vector.broadcast %cst_29 : f32 to vector<2x128xf32>
    %76 = arith.mulf %75, %74 : vector<2x128xf32>
    %77 = math.tanh %76 : vector<2x128xf32>
    %cst_30 = arith.constant 5.000000e-01 : f32
    %78 = vector.broadcast %cst_30 : f32 to vector<2x128xf32>
    %79 = arith.mulf %78, %77 : vector<2x128xf32>
    %cst_31 = arith.constant 5.000000e-01 : f32
    %80 = vector.broadcast %cst_31 : f32 to vector<2x128xf32>
    %81 = arith.addf %79, %80 : vector<2x128xf32>
    %82 = arith.mulf %71, %13 : vector<2x128xf32>
    %83 = arith.mulf %63, %73 : vector<2x128xf32>
    %84 = arith.addf %82, %83 : vector<2x128xf32>
    %85 = math.tanh %84 : vector<2x128xf32>
    %86 = arith.mulf %81, %85 : vector<2x128xf32>
    %87 = vector.extract_strided_slice %9 {offsets = [1, 0, 0], sizes = [1, 2, 512], strides = [1, 1, 1]} : vector<8x2x512xf32> to vector<1x2x512xf32>
    %88 = vector.shape_cast %87 : vector<1x2x512xf32> to vector<2x512xf32>
    %89 = arith.truncf %50 : vector<2x128xf32> to vector<2x128xbf16>
    %c0_32 = arith.constant 0 : index
    %c0_33 = arith.constant 0 : index
    %90 = vector.load %arg3[%c0_32, %c0_33] : memref<128x512xbf16, #tpu.memory_space<vmem>>, vector<128x512xbf16>
    %cst_34 = arith.constant dense<0.000000e+00> : vector<2x512xf32>
    %91 = tpu.matmul %89, %90, %cst_34 {dimension_numbers = #tpu.dot_dimension_numbers<[1], [0], [0], [1], [0, 0, 1, 1], [], []>} : vector<2x128xbf16>, vector<128x512xbf16>, vector<2x512xf32> -> vector<2x512xf32>
    %92 = arith.addf %88, %91 : vector<2x512xf32>
    %93 = vector.extract_strided_slice %92 {offsets = [0, 0], sizes = [2, 128], strides = [1, 1]} : vector<2x512xf32> to vector<2x128xf32>
    %cst_35 = arith.constant 5.000000e-01 : f32
    %94 = vector.broadcast %cst_35 : f32 to vector<2x128xf32>
    %95 = arith.mulf %94, %93 : vector<2x128xf32>
    %96 = math.tanh %95 : vector<2x128xf32>
    %cst_36 = arith.constant 5.000000e-01 : f32
    %97 = vector.broadcast %cst_36 : f32 to vector<2x128xf32>
    %98 = arith.mulf %97, %96 : vector<2x128xf32>
    %cst_37 = arith.constant 5.000000e-01 : f32
    %99 = vector.broadcast %cst_37 : f32 to vector<2x128xf32>
    %100 = arith.addf %98, %99 : vector<2x128xf32>
    %101 = vector.extract_strided_slice %92 {offsets = [0, 128], sizes = [2, 128], strides = [1, 1]} : vector<2x512xf32> to vector<2x128xf32>
    %cst_38 = arith.constant 5.000000e-01 : f32
    %102 = vector.broadcast %cst_38 : f32 to vector<2x128xf32>
    %103 = arith.mulf %102, %101 : vector<2x128xf32>
    %104 = math.tanh %103 : vector<2x128xf32>
    %cst_39 = arith.constant 5.000000e-01 : f32
    %105 = vector.broadcast %cst_39 : f32 to vector<2x128xf32>
    %106 = arith.mulf %105, %104 : vector<2x128xf32>
    %cst_40 = arith.constant 5.000000e-01 : f32
    %107 = vector.broadcast %cst_40 : f32 to vector<2x128xf32>
    %108 = arith.addf %106, %107 : vector<2x128xf32>
    %109 = vector.extract_strided_slice %92 {offsets = [0, 256], sizes = [2, 128], strides = [1, 1]} : vector<2x512xf32> to vector<2x128xf32>
    %110 = math.tanh %109 : vector<2x128xf32>
    %111 = vector.extract_strided_slice %92 {offsets = [0, 384], sizes = [2, 128], strides = [1, 1]} : vector<2x512xf32> to vector<2x128xf32>
    %cst_41 = arith.constant 5.000000e-01 : f32
    %112 = vector.broadcast %cst_41 : f32 to vector<2x128xf32>
    %113 = arith.mulf %112, %111 : vector<2x128xf32>
    %114 = math.tanh %113 : vector<2x128xf32>
    %cst_42 = arith.constant 5.000000e-01 : f32
    %115 = vector.broadcast %cst_42 : f32 to vector<2x128xf32>
    %116 = arith.mulf %115, %114 : vector<2x128xf32>
    %cst_43 = arith.constant 5.000000e-01 : f32
    %117 = vector.broadcast %cst_43 : f32 to vector<2x128xf32>
    %118 = arith.addf %116, %117 : vector<2x128xf32>
    %119 = arith.mulf %108, %48 : vector<2x128xf32>
    %120 = arith.mulf %100, %110 : vector<2x128xf32>
    %121 = arith.addf %119, %120 : vector<2x128xf32>
    %122 = math.tanh %121 : vector<2x128xf32>
    %123 = arith.mulf %118, %122 : vector<2x128xf32>
    %124 = tpu.concatenate %123, %86 in 1 : vector<2x128xf32>, vector<2x128xf32> -> vector<2x256xf32>
    %125 = arith.truncf %124 : vector<2x256xf32> to vector<2x256xbf16>
    %c0_44 = arith.constant 0 : index
    %c0_45 = arith.constant 0 : index
    %126 = vector.load %arg4[%c0_44, %c0_45] : memref<256x512xbf16, #tpu.memory_space<vmem>>, vector<256x512xbf16>
    %cst_46 = arith.constant dense<0.000000e+00> : vector<2x512xf32>
    %127 = tpu.matmul %125, %126, %cst_46 {dimension_numbers = #tpu.dot_dimension_numbers<[1], [0], [0], [1], [0, 0, 1, 1], [], []>} : vector<2x256xbf16>, vector<256x512xbf16>, vector<2x512xf32> -> vector<2x512xf32>
    %128 = arith.addf %127, %12 : vector<2x512xf32>
    %129 = vector.extract_strided_slice %128 {offsets = [0, 0], sizes = [2, 128], strides = [1, 1]} : vector<2x512xf32> to vector<2x128xf32>
    %cst_47 = arith.constant 5.000000e-01 : f32
    %130 = vector.broadcast %cst_47 : f32 to vector<2x128xf32>
    %131 = arith.mulf %130, %129 : vector<2x128xf32>
    %132 = math.tanh %131 : vector<2x128xf32>
    %cst_48 = arith.constant 5.000000e-01 : f32
    %133 = vector.broadcast %cst_48 : f32 to vector<2x128xf32>
    %134 = arith.mulf %133, %132 : vector<2x128xf32>
    %cst_49 = arith.constant 5.000000e-01 : f32
    %135 = vector.broadcast %cst_49 : f32 to vector<2x128xf32>
    %136 = arith.addf %134, %135 : vector<2x128xf32>
    %137 = vector.extract_strided_slice %128 {offsets = [0, 128], sizes = [2, 128], strides = [1, 1]} : vector<2x512xf32> to vector<2x128xf32>
    %cst_50 = arith.constant 5.000000e-01 : f32
    %138 = vector.broadcast %cst_50 : f32 to vector<2x128xf32>
    %139 = arith.mulf %138, %137 : vector<2x128xf32>
    %140 = math.tanh %139 : vector<2x128xf32>
    %cst_51 = arith.constant 5.000000e-01 : f32
    %141 = vector.broadcast %cst_51 : f32 to vector<2x128xf32>
    %142 = arith.mulf %141, %140 : vector<2x128xf32>
    %cst_52 = arith.constant 5.000000e-01 : f32
    %143 = vector.broadcast %cst_52 : f32 to vector<2x128xf32>
    %144 = arith.addf %142, %143 : vector<2x128xf32>
    %145 = vector.extract_strided_slice %128 {offsets = [0, 256], sizes = [2, 128], strides = [1, 1]} : vector<2x512xf32> to vector<2x128xf32>
    %146 = math.tanh %145 : vector<2x128xf32>
    %147 = vector.extract_strided_slice %128 {offsets = [0, 384], sizes = [2, 128], strides = [1, 1]} : vector<2x512xf32> to vector<2x128xf32>
    %cst_53 = arith.constant 5.000000e-01 : f32
    %148 = vector.broadcast %cst_53 : f32 to vector<2x128xf32>
    %149 = arith.mulf %148, %147 : vector<2x128xf32>
    %150 = math.tanh %149 : vector<2x128xf32>
    %cst_54 = arith.constant 5.000000e-01 : f32
    %151 = vector.broadcast %cst_54 : f32 to vector<2x128xf32>
    %152 = arith.mulf %151, %150 : vector<2x128xf32>
    %cst_55 = arith.constant 5.000000e-01 : f32
    %153 = vector.broadcast %cst_55 : f32 to vector<2x128xf32>
    %154 = arith.addf %152, %153 : vector<2x128xf32>
    %155 = arith.mulf %144, %84 : vector<2x128xf32>
    %156 = arith.mulf %136, %146 : vector<2x128xf32>
    %157 = arith.addf %155, %156 : vector<2x128xf32>
    %158 = math.tanh %157 : vector<2x128xf32>
    %159 = arith.mulf %154, %158 : vector<2x128xf32>
    %160 = vector.extract_strided_slice %9 {offsets = [2, 0, 0], sizes = [1, 2, 512], strides = [1, 1, 1]} : vector<8x2x512xf32> to vector<1x2x512xf32>
    %161 = vector.shape_cast %160 : vector<1x2x512xf32> to vector<2x512xf32>
    %162 = arith.truncf %123 : vector<2x128xf32> to vector<2x128xbf16>
    %c0_56 = arith.constant 0 : index
    %c0_57 = arith.constant 0 : index
    %163 = vector.load %arg3[%c0_56, %c0_57] : memref<128x512xbf16, #tpu.memory_space<vmem>>, vector<128x512xbf16>
    %cst_58 = arith.constant dense<0.000000e+00> : vector<2x512xf32>
    %164 = tpu.matmul %162, %163, %cst_58 {dimension_numbers = #tpu.dot_dimension_numbers<[1], [0], [0], [1], [0, 0, 1, 1], [], []>} : vector<2x128xbf16>, vector<128x512xbf16>, vector<2x512xf32> -> vector<2x512xf32>
    %165 = arith.addf %161, %164 : vector<2x512xf32>
    %166 = vector.extract_strided_slice %165 {offsets = [0, 0], sizes = [2, 128], strides = [1, 1]} : vector<2x512xf32> to vector<2x128xf32>
    %cst_59 = arith.constant 5.000000e-01 : f32
    %167 = vector.broadcast %cst_59 : f32 to vector<2x128xf32>
    %168 = arith.mulf %167, %166 : vector<2x128xf32>
    %169 = math.tanh %168 : vector<2x128xf32>
    %cst_60 = arith.constant 5.000000e-01 : f32
    %170 = vector.broadcast %cst_60 : f32 to vector<2x128xf32>
    %171 = arith.mulf %170, %169 : vector<2x128xf32>
    %cst_61 = arith.constant 5.000000e-01 : f32
    %172 = vector.broadcast %cst_61 : f32 to vector<2x128xf32>
    %173 = arith.addf %171, %172 : vector<2x128xf32>
    %174 = vector.extract_strided_slice %165 {offsets = [0, 128], sizes = [2, 128], strides = [1, 1]} : vector<2x512xf32> to vector<2x128xf32>
    %cst_62 = arith.constant 5.000000e-01 : f32
    %175 = vector.broadcast %cst_62 : f32 to vector<2x128xf32>
    %176 = arith.mulf %175, %174 : vector<2x128xf32>
    %177 = math.tanh %176 : vector<2x128xf32>
    %cst_63 = arith.constant 5.000000e-01 : f32
    %178 = vector.broadcast %cst_63 : f32 to vector<2x128xf32>
    %179 = arith.mulf %178, %177 : vector<2x128xf32>
    %cst_64 = arith.constant 5.000000e-01 : f32
    %180 = vector.broadcast %cst_64 : f32 to vector<2x128xf32>
    %181 = arith.addf %179, %180 : vector<2x128xf32>
    %182 = vector.extract_strided_slice %165 {offsets = [0, 256], sizes = [2, 128], strides = [1, 1]} : vector<2x512xf32> to vector<2x128xf32>
    %183 = math.tanh %182 : vector<2x128xf32>
    %184 = vector.extract_strided_slice %165 {offsets = [0, 384], sizes = [2, 128], strides = [1, 1]} : vector<2x512xf32> to vector<2x128xf32>
    %cst_65 = arith.constant 5.000000e-01 : f32
    %185 = vector.broadcast %cst_65 : f32 to vector<2x128xf32>
    %186 = arith.mulf %185, %184 : vector<2x128xf32>
    %187 = math.tanh %186 : vector<2x128xf32>
    %cst_66 = arith.constant 5.000000e-01 : f32
    %188 = vector.broadcast %cst_66 : f32 to vector<2x128xf32>
    %189 = arith.mulf %188, %187 : vector<2x128xf32>
    %cst_67 = arith.constant 5.000000e-01 : f32
    %190 = vector.broadcast %cst_67 : f32 to vector<2x128xf32>
    %191 = arith.addf %189, %190 : vector<2x128xf32>
    %192 = arith.mulf %181, %121 : vector<2x128xf32>
    %193 = arith.mulf %173, %183 : vector<2x128xf32>
    %194 = arith.addf %192, %193 : vector<2x128xf32>
    %195 = math.tanh %194 : vector<2x128xf32>
    %196 = arith.mulf %191, %195 : vector<2x128xf32>
    %197 = tpu.concatenate %196, %159 in 1 : vector<2x128xf32>, vector<2x128xf32> -> vector<2x256xf32>
    %198 = arith.truncf %197 : vector<2x256xf32> to vector<2x256xbf16>
    %c0_68 = arith.constant 0 : index
    %c0_69 = arith.constant 0 : index
    %199 = vector.load %arg4[%c0_68, %c0_69] : memref<256x512xbf16, #tpu.memory_space<vmem>>, vector<256x512xbf16>
    %cst_70 = arith.constant dense<0.000000e+00> : vector<2x512xf32>
    %200 = tpu.matmul %198, %199, %cst_70 {dimension_numbers = #tpu.dot_dimension_numbers<[1], [0], [0], [1], [0, 0, 1, 1], [], []>} : vector<2x256xbf16>, vector<256x512xbf16>, vector<2x512xf32> -> vector<2x512xf32>
    %201 = arith.addf %200, %12 : vector<2x512xf32>
    %202 = vector.extract_strided_slice %201 {offsets = [0, 0], sizes = [2, 128], strides = [1, 1]} : vector<2x512xf32> to vector<2x128xf32>
    %cst_71 = arith.constant 5.000000e-01 : f32
    %203 = vector.broadcast %cst_71 : f32 to vector<2x128xf32>
    %204 = arith.mulf %203, %202 : vector<2x128xf32>
    %205 = math.tanh %204 : vector<2x128xf32>
    %cst_72 = arith.constant 5.000000e-01 : f32
    %206 = vector.broadcast %cst_72 : f32 to vector<2x128xf32>
    %207 = arith.mulf %206, %205 : vector<2x128xf32>
    %cst_73 = arith.constant 5.000000e-01 : f32
    %208 = vector.broadcast %cst_73 : f32 to vector<2x128xf32>
    %209 = arith.addf %207, %208 : vector<2x128xf32>
    %210 = vector.extract_strided_slice %201 {offsets = [0, 128], sizes = [2, 128], strides = [1, 1]} : vector<2x512xf32> to vector<2x128xf32>
    %cst_74 = arith.constant 5.000000e-01 : f32
    %211 = vector.broadcast %cst_74 : f32 to vector<2x128xf32>
    %212 = arith.mulf %211, %210 : vector<2x128xf32>
    %213 = math.tanh %212 : vector<2x128xf32>
    %cst_75 = arith.constant 5.000000e-01 : f32
    %214 = vector.broadcast %cst_75 : f32 to vector<2x128xf32>
    %215 = arith.mulf %214, %213 : vector<2x128xf32>
    %cst_76 = arith.constant 5.000000e-01 : f32
    %216 = vector.broadcast %cst_76 : f32 to vector<2x128xf32>
    %217 = arith.addf %215, %216 : vector<2x128xf32>
    %218 = vector.extract_strided_slice %201 {offsets = [0, 256], sizes = [2, 128], strides = [1, 1]} : vector<2x512xf32> to vector<2x128xf32>
    %219 = math.tanh %218 : vector<2x128xf32>
    %220 = vector.extract_strided_slice %201 {offsets = [0, 384], sizes = [2, 128], strides = [1, 1]} : vector<2x512xf32> to vector<2x128xf32>
    %cst_77 = arith.constant 5.000000e-01 : f32
    %221 = vector.broadcast %cst_77 : f32 to vector<2x128xf32>
    %222 = arith.mulf %221, %220 : vector<2x128xf32>
    %223 = math.tanh %222 : vector<2x128xf32>
    %cst_78 = arith.constant 5.000000e-01 : f32
    %224 = vector.broadcast %cst_78 : f32 to vector<2x128xf32>
    %225 = arith.mulf %224, %223 : vector<2x128xf32>
    %cst_79 = arith.constant 5.000000e-01 : f32
    %226 = vector.broadcast %cst_79 : f32 to vector<2x128xf32>
    %227 = arith.addf %225, %226 : vector<2x128xf32>
    %228 = arith.mulf %217, %157 : vector<2x128xf32>
    %229 = arith.mulf %209, %219 : vector<2x128xf32>
    %230 = arith.addf %228, %229 : vector<2x128xf32>
    %231 = math.tanh %230 : vector<2x128xf32>
    %232 = arith.mulf %227, %231 : vector<2x128xf32>
    %233 = vector.extract_strided_slice %9 {offsets = [3, 0, 0], sizes = [1, 2, 512], strides = [1, 1, 1]} : vector<8x2x512xf32> to vector<1x2x512xf32>
    %234 = vector.shape_cast %233 : vector<1x2x512xf32> to vector<2x512xf32>
    %235 = arith.truncf %196 : vector<2x128xf32> to vector<2x128xbf16>
    %c0_80 = arith.constant 0 : index
    %c0_81 = arith.constant 0 : index
    %236 = vector.load %arg3[%c0_80, %c0_81] : memref<128x512xbf16, #tpu.memory_space<vmem>>, vector<128x512xbf16>
    %cst_82 = arith.constant dense<0.000000e+00> : vector<2x512xf32>
    %237 = tpu.matmul %235, %236, %cst_82 {dimension_numbers = #tpu.dot_dimension_numbers<[1], [0], [0], [1], [0, 0, 1, 1], [], []>} : vector<2x128xbf16>, vector<128x512xbf16>, vector<2x512xf32> -> vector<2x512xf32>
    %238 = arith.addf %234, %237 : vector<2x512xf32>
    %239 = vector.extract_strided_slice %238 {offsets = [0, 0], sizes = [2, 128], strides = [1, 1]} : vector<2x512xf32> to vector<2x128xf32>
    %cst_83 = arith.constant 5.000000e-01 : f32
    %240 = vector.broadcast %cst_83 : f32 to vector<2x128xf32>
    %241 = arith.mulf %240, %239 : vector<2x128xf32>
    %242 = math.tanh %241 : vector<2x128xf32>
    %cst_84 = arith.constant 5.000000e-01 : f32
    %243 = vector.broadcast %cst_84 : f32 to vector<2x128xf32>
    %244 = arith.mulf %243, %242 : vector<2x128xf32>
    %cst_85 = arith.constant 5.000000e-01 : f32
    %245 = vector.broadcast %cst_85 : f32 to vector<2x128xf32>
    %246 = arith.addf %244, %245 : vector<2x128xf32>
    %247 = vector.extract_strided_slice %238 {offsets = [0, 128], sizes = [2, 128], strides = [1, 1]} : vector<2x512xf32> to vector<2x128xf32>
    %cst_86 = arith.constant 5.000000e-01 : f32
    %248 = vector.broadcast %cst_86 : f32 to vector<2x128xf32>
    %249 = arith.mulf %248, %247 : vector<2x128xf32>
    %250 = math.tanh %249 : vector<2x128xf32>
    %cst_87 = arith.constant 5.000000e-01 : f32
    %251 = vector.broadcast %cst_87 : f32 to vector<2x128xf32>
    %252 = arith.mulf %251, %250 : vector<2x128xf32>
    %cst_88 = arith.constant 5.000000e-01 : f32
    %253 = vector.broadcast %cst_88 : f32 to vector<2x128xf32>
    %254 = arith.addf %252, %253 : vector<2x128xf32>
    %255 = vector.extract_strided_slice %238 {offsets = [0, 256], sizes = [2, 128], strides = [1, 1]} : vector<2x512xf32> to vector<2x128xf32>
    %256 = math.tanh %255 : vector<2x128xf32>
    %257 = vector.extract_strided_slice %238 {offsets = [0, 384], sizes = [2, 128], strides = [1, 1]} : vector<2x512xf32> to vector<2x128xf32>
    %cst_89 = arith.constant 5.000000e-01 : f32
    %258 = vector.broadcast %cst_89 : f32 to vector<2x128xf32>
    %259 = arith.mulf %258, %257 : vector<2x128xf32>
    %260 = math.tanh %259 : vector<2x128xf32>
    %cst_90 = arith.constant 5.000000e-01 : f32
    %261 = vector.broadcast %cst_90 : f32 to vector<2x128xf32>
    %262 = arith.mulf %261, %260 : vector<2x128xf32>
    %cst_91 = arith.constant 5.000000e-01 : f32
    %263 = vector.broadcast %cst_91 : f32 to vector<2x128xf32>
    %264 = arith.addf %262, %263 : vector<2x128xf32>
    %265 = arith.mulf %254, %194 : vector<2x128xf32>
    %266 = arith.mulf %246, %256 : vector<2x128xf32>
    %267 = arith.addf %265, %266 : vector<2x128xf32>
    %268 = math.tanh %267 : vector<2x128xf32>
    %269 = arith.mulf %264, %268 : vector<2x128xf32>
    %270 = tpu.concatenate %269, %232 in 1 : vector<2x128xf32>, vector<2x128xf32> -> vector<2x256xf32>
    %271 = arith.truncf %270 : vector<2x256xf32> to vector<2x256xbf16>
    %c0_92 = arith.constant 0 : index
    %c0_93 = arith.constant 0 : index
    %272 = vector.load %arg4[%c0_92, %c0_93] : memref<256x512xbf16, #tpu.memory_space<vmem>>, vector<256x512xbf16>
    %cst_94 = arith.constant dense<0.000000e+00> : vector<2x512xf32>
    %273 = tpu.matmul %271, %272, %cst_94 {dimension_numbers = #tpu.dot_dimension_numbers<[1], [0], [0], [1], [0, 0, 1, 1], [], []>} : vector<2x256xbf16>, vector<256x512xbf16>, vector<2x512xf32> -> vector<2x512xf32>
    %274 = arith.addf %273, %12 : vector<2x512xf32>
    %275 = vector.extract_strided_slice %274 {offsets = [0, 0], sizes = [2, 128], strides = [1, 1]} : vector<2x512xf32> to vector<2x128xf32>
    %cst_95 = arith.constant 5.000000e-01 : f32
    %276 = vector.broadcast %cst_95 : f32 to vector<2x128xf32>
    %277 = arith.mulf %276, %275 : vector<2x128xf32>
    %278 = math.tanh %277 : vector<2x128xf32>
    %cst_96 = arith.constant 5.000000e-01 : f32
    %279 = vector.broadcast %cst_96 : f32 to vector<2x128xf32>
    %280 = arith.mulf %279, %278 : vector<2x128xf32>
    %cst_97 = arith.constant 5.000000e-01 : f32
    %281 = vector.broadcast %cst_97 : f32 to vector<2x128xf32>
    %282 = arith.addf %280, %281 : vector<2x128xf32>
    %283 = vector.extract_strided_slice %274 {offsets = [0, 128], sizes = [2, 128], strides = [1, 1]} : vector<2x512xf32> to vector<2x128xf32>
    %cst_98 = arith.constant 5.000000e-01 : f32
    %284 = vector.broadcast %cst_98 : f32 to vector<2x128xf32>
    %285 = arith.mulf %284, %283 : vector<2x128xf32>
    %286 = math.tanh %285 : vector<2x128xf32>
    %cst_99 = arith.constant 5.000000e-01 : f32
    %287 = vector.broadcast %cst_99 : f32 to vector<2x128xf32>
    %288 = arith.mulf %287, %286 : vector<2x128xf32>
    %cst_100 = arith.constant 5.000000e-01 : f32
    %289 = vector.broadcast %cst_100 : f32 to vector<2x128xf32>
    %290 = arith.addf %288, %289 : vector<2x128xf32>
    %291 = vector.extract_strided_slice %274 {offsets = [0, 256], sizes = [2, 128], strides = [1, 1]} : vector<2x512xf32> to vector<2x128xf32>
    %292 = math.tanh %291 : vector<2x128xf32>
    %293 = vector.extract_strided_slice %274 {offsets = [0, 384], sizes = [2, 128], strides = [1, 1]} : vector<2x512xf32> to vector<2x128xf32>
    %cst_101 = arith.constant 5.000000e-01 : f32
    %294 = vector.broadcast %cst_101 : f32 to vector<2x128xf32>
    %295 = arith.mulf %294, %293 : vector<2x128xf32>
    %296 = math.tanh %295 : vector<2x128xf32>
    %cst_102 = arith.constant 5.000000e-01 : f32
    %297 = vector.broadcast %cst_102 : f32 to vector<2x128xf32>
    %298 = arith.mulf %297, %296 : vector<2x128xf32>
    %cst_103 = arith.constant 5.000000e-01 : f32
    %299 = vector.broadcast %cst_103 : f32 to vector<2x128xf32>
    %300 = arith.addf %298, %299 : vector<2x128xf32>
    %301 = arith.mulf %290, %230 : vector<2x128xf32>
    %302 = arith.mulf %282, %292 : vector<2x128xf32>
    %303 = arith.addf %301, %302 : vector<2x128xf32>
    %304 = math.tanh %303 : vector<2x128xf32>
    %305 = arith.mulf %300, %304 : vector<2x128xf32>
    %306 = vector.extract_strided_slice %9 {offsets = [4, 0, 0], sizes = [1, 2, 512], strides = [1, 1, 1]} : vector<8x2x512xf32> to vector<1x2x512xf32>
    %307 = vector.shape_cast %306 : vector<1x2x512xf32> to vector<2x512xf32>
    %308 = arith.truncf %269 : vector<2x128xf32> to vector<2x128xbf16>
    %c0_104 = arith.constant 0 : index
    %c0_105 = arith.constant 0 : index
    %309 = vector.load %arg3[%c0_104, %c0_105] : memref<128x512xbf16, #tpu.memory_space<vmem>>, vector<128x512xbf16>
    %cst_106 = arith.constant dense<0.000000e+00> : vector<2x512xf32>
    %310 = tpu.matmul %308, %309, %cst_106 {dimension_numbers = #tpu.dot_dimension_numbers<[1], [0], [0], [1], [0, 0, 1, 1], [], []>} : vector<2x128xbf16>, vector<128x512xbf16>, vector<2x512xf32> -> vector<2x512xf32>
    %311 = arith.addf %307, %310 : vector<2x512xf32>
    %312 = vector.extract_strided_slice %311 {offsets = [0, 0], sizes = [2, 128], strides = [1, 1]} : vector<2x512xf32> to vector<2x128xf32>
    %cst_107 = arith.constant 5.000000e-01 : f32
    %313 = vector.broadcast %cst_107 : f32 to vector<2x128xf32>
    %314 = arith.mulf %313, %312 : vector<2x128xf32>
    %315 = math.tanh %314 : vector<2x128xf32>
    %cst_108 = arith.constant 5.000000e-01 : f32
    %316 = vector.broadcast %cst_108 : f32 to vector<2x128xf32>
    %317 = arith.mulf %316, %315 : vector<2x128xf32>
    %cst_109 = arith.constant 5.000000e-01 : f32
    %318 = vector.broadcast %cst_109 : f32 to vector<2x128xf32>
    %319 = arith.addf %317, %318 : vector<2x128xf32>
    %320 = vector.extract_strided_slice %311 {offsets = [0, 128], sizes = [2, 128], strides = [1, 1]} : vector<2x512xf32> to vector<2x128xf32>
    %cst_110 = arith.constant 5.000000e-01 : f32
    %321 = vector.broadcast %cst_110 : f32 to vector<2x128xf32>
    %322 = arith.mulf %321, %320 : vector<2x128xf32>
    %323 = math.tanh %322 : vector<2x128xf32>
    %cst_111 = arith.constant 5.000000e-01 : f32
    %324 = vector.broadcast %cst_111 : f32 to vector<2x128xf32>
    %325 = arith.mulf %324, %323 : vector<2x128xf32>
    %cst_112 = arith.constant 5.000000e-01 : f32
    %326 = vector.broadcast %cst_112 : f32 to vector<2x128xf32>
    %327 = arith.addf %325, %326 : vector<2x128xf32>
    %328 = vector.extract_strided_slice %311 {offsets = [0, 256], sizes = [2, 128], strides = [1, 1]} : vector<2x512xf32> to vector<2x128xf32>
    %329 = math.tanh %328 : vector<2x128xf32>
    %330 = vector.extract_strided_slice %311 {offsets = [0, 384], sizes = [2, 128], strides = [1, 1]} : vector<2x512xf32> to vector<2x128xf32>
    %cst_113 = arith.constant 5.000000e-01 : f32
    %331 = vector.broadcast %cst_113 : f32 to vector<2x128xf32>
    %332 = arith.mulf %331, %330 : vector<2x128xf32>
    %333 = math.tanh %332 : vector<2x128xf32>
    %cst_114 = arith.constant 5.000000e-01 : f32
    %334 = vector.broadcast %cst_114 : f32 to vector<2x128xf32>
    %335 = arith.mulf %334, %333 : vector<2x128xf32>
    %cst_115 = arith.constant 5.000000e-01 : f32
    %336 = vector.broadcast %cst_115 : f32 to vector<2x128xf32>
    %337 = arith.addf %335, %336 : vector<2x128xf32>
    %338 = arith.mulf %327, %267 : vector<2x128xf32>
    %339 = arith.mulf %319, %329 : vector<2x128xf32>
    %340 = arith.addf %338, %339 : vector<2x128xf32>
    %341 = math.tanh %340 : vector<2x128xf32>
    %342 = arith.mulf %337, %341 : vector<2x128xf32>
    %343 = tpu.concatenate %342, %305 in 1 : vector<2x128xf32>, vector<2x128xf32> -> vector<2x256xf32>
    %344 = arith.truncf %343 : vector<2x256xf32> to vector<2x256xbf16>
    %c0_116 = arith.constant 0 : index
    %c0_117 = arith.constant 0 : index
    %345 = vector.load %arg4[%c0_116, %c0_117] : memref<256x512xbf16, #tpu.memory_space<vmem>>, vector<256x512xbf16>
    %cst_118 = arith.constant dense<0.000000e+00> : vector<2x512xf32>
    %346 = tpu.matmul %344, %345, %cst_118 {dimension_numbers = #tpu.dot_dimension_numbers<[1], [0], [0], [1], [0, 0, 1, 1], [], []>} : vector<2x256xbf16>, vector<256x512xbf16>, vector<2x512xf32> -> vector<2x512xf32>
    %347 = arith.addf %346, %12 : vector<2x512xf32>
    %348 = vector.extract_strided_slice %347 {offsets = [0, 0], sizes = [2, 128], strides = [1, 1]} : vector<2x512xf32> to vector<2x128xf32>
    %cst_119 = arith.constant 5.000000e-01 : f32
    %349 = vector.broadcast %cst_119 : f32 to vector<2x128xf32>
    %350 = arith.mulf %349, %348 : vector<2x128xf32>
    %351 = math.tanh %350 : vector<2x128xf32>
    %cst_120 = arith.constant 5.000000e-01 : f32
    %352 = vector.broadcast %cst_120 : f32 to vector<2x128xf32>
    %353 = arith.mulf %352, %351 : vector<2x128xf32>
    %cst_121 = arith.constant 5.000000e-01 : f32
    %354 = vector.broadcast %cst_121 : f32 to vector<2x128xf32>
    %355 = arith.addf %353, %354 : vector<2x128xf32>
    %356 = vector.extract_strided_slice %347 {offsets = [0, 128], sizes = [2, 128], strides = [1, 1]} : vector<2x512xf32> to vector<2x128xf32>
    %cst_122 = arith.constant 5.000000e-01 : f32
    %357 = vector.broadcast %cst_122 : f32 to vector<2x128xf32>
    %358 = arith.mulf %357, %356 : vector<2x128xf32>
    %359 = math.tanh %358 : vector<2x128xf32>
    %cst_123 = arith.constant 5.000000e-01 : f32
    %360 = vector.broadcast %cst_123 : f32 to vector<2x128xf32>
    %361 = arith.mulf %360, %359 : vector<2x128xf32>
    %cst_124 = arith.constant 5.000000e-01 : f32
    %362 = vector.broadcast %cst_124 : f32 to vector<2x128xf32>
    %363 = arith.addf %361, %362 : vector<2x128xf32>
    %364 = vector.extract_strided_slice %347 {offsets = [0, 256], sizes = [2, 128], strides = [1, 1]} : vector<2x512xf32> to vector<2x128xf32>
    %365 = math.tanh %364 : vector<2x128xf32>
    %366 = vector.extract_strided_slice %347 {offsets = [0, 384], sizes = [2, 128], strides = [1, 1]} : vector<2x512xf32> to vector<2x128xf32>
    %cst_125 = arith.constant 5.000000e-01 : f32
    %367 = vector.broadcast %cst_125 : f32 to vector<2x128xf32>
    %368 = arith.mulf %367, %366 : vector<2x128xf32>
    %369 = math.tanh %368 : vector<2x128xf32>
    %cst_126 = arith.constant 5.000000e-01 : f32
    %370 = vector.broadcast %cst_126 : f32 to vector<2x128xf32>
    %371 = arith.mulf %370, %369 : vector<2x128xf32>
    %cst_127 = arith.constant 5.000000e-01 : f32
    %372 = vector.broadcast %cst_127 : f32 to vector<2x128xf32>
    %373 = arith.addf %371, %372 : vector<2x128xf32>
    %374 = arith.mulf %363, %303 : vector<2x128xf32>
    %375 = arith.mulf %355, %365 : vector<2x128xf32>
    %376 = arith.addf %374, %375 : vector<2x128xf32>
    %377 = math.tanh %376 : vector<2x128xf32>
    %378 = arith.mulf %373, %377 : vector<2x128xf32>
    %379 = vector.extract_strided_slice %9 {offsets = [5, 0, 0], sizes = [1, 2, 512], strides = [1, 1, 1]} : vector<8x2x512xf32> to vector<1x2x512xf32>
    %380 = vector.shape_cast %379 : vector<1x2x512xf32> to vector<2x512xf32>
    %381 = arith.truncf %342 : vector<2x128xf32> to vector<2x128xbf16>
    %c0_128 = arith.constant 0 : index
    %c0_129 = arith.constant 0 : index
    %382 = vector.load %arg3[%c0_128, %c0_129] : memref<128x512xbf16, #tpu.memory_space<vmem>>, vector<128x512xbf16>
    %cst_130 = arith.constant dense<0.000000e+00> : vector<2x512xf32>
    %383 = tpu.matmul %381, %382, %cst_130 {dimension_numbers = #tpu.dot_dimension_numbers<[1], [0], [0], [1], [0, 0, 1, 1], [], []>} : vector<2x128xbf16>, vector<128x512xbf16>, vector<2x512xf32> -> vector<2x512xf32>
    %384 = arith.addf %380, %383 : vector<2x512xf32>
    %385 = vector.extract_strided_slice %384 {offsets = [0, 0], sizes = [2, 128], strides = [1, 1]} : vector<2x512xf32> to vector<2x128xf32>
    %cst_131 = arith.constant 5.000000e-01 : f32
    %386 = vector.broadcast %cst_131 : f32 to vector<2x128xf32>
    %387 = arith.mulf %386, %385 : vector<2x128xf32>
    %388 = math.tanh %387 : vector<2x128xf32>
    %cst_132 = arith.constant 5.000000e-01 : f32
    %389 = vector.broadcast %cst_132 : f32 to vector<2x128xf32>
    %390 = arith.mulf %389, %388 : vector<2x128xf32>
    %cst_133 = arith.constant 5.000000e-01 : f32
    %391 = vector.broadcast %cst_133 : f32 to vector<2x128xf32>
    %392 = arith.addf %390, %391 : vector<2x128xf32>
    %393 = vector.extract_strided_slice %384 {offsets = [0, 128], sizes = [2, 128], strides = [1, 1]} : vector<2x512xf32> to vector<2x128xf32>
    %cst_134 = arith.constant 5.000000e-01 : f32
    %394 = vector.broadcast %cst_134 : f32 to vector<2x128xf32>
    %395 = arith.mulf %394, %393 : vector<2x128xf32>
    %396 = math.tanh %395 : vector<2x128xf32>
    %cst_135 = arith.constant 5.000000e-01 : f32
    %397 = vector.broadcast %cst_135 : f32 to vector<2x128xf32>
    %398 = arith.mulf %397, %396 : vector<2x128xf32>
    %cst_136 = arith.constant 5.000000e-01 : f32
    %399 = vector.broadcast %cst_136 : f32 to vector<2x128xf32>
    %400 = arith.addf %398, %399 : vector<2x128xf32>
    %401 = vector.extract_strided_slice %384 {offsets = [0, 256], sizes = [2, 128], strides = [1, 1]} : vector<2x512xf32> to vector<2x128xf32>
    %402 = math.tanh %401 : vector<2x128xf32>
    %403 = vector.extract_strided_slice %384 {offsets = [0, 384], sizes = [2, 128], strides = [1, 1]} : vector<2x512xf32> to vector<2x128xf32>
    %cst_137 = arith.constant 5.000000e-01 : f32
    %404 = vector.broadcast %cst_137 : f32 to vector<2x128xf32>
    %405 = arith.mulf %404, %403 : vector<2x128xf32>
    %406 = math.tanh %405 : vector<2x128xf32>
    %cst_138 = arith.constant 5.000000e-01 : f32
    %407 = vector.broadcast %cst_138 : f32 to vector<2x128xf32>
    %408 = arith.mulf %407, %406 : vector<2x128xf32>
    %cst_139 = arith.constant 5.000000e-01 : f32
    %409 = vector.broadcast %cst_139 : f32 to vector<2x128xf32>
    %410 = arith.addf %408, %409 : vector<2x128xf32>
    %411 = arith.mulf %400, %340 : vector<2x128xf32>
    %412 = arith.mulf %392, %402 : vector<2x128xf32>
    %413 = arith.addf %411, %412 : vector<2x128xf32>
    %414 = math.tanh %413 : vector<2x128xf32>
    %415 = arith.mulf %410, %414 : vector<2x128xf32>
    %416 = tpu.concatenate %415, %378 in 1 : vector<2x128xf32>, vector<2x128xf32> -> vector<2x256xf32>
    %417 = arith.truncf %416 : vector<2x256xf32> to vector<2x256xbf16>
    %c0_140 = arith.constant 0 : index
    %c0_141 = arith.constant 0 : index
    %418 = vector.load %arg4[%c0_140, %c0_141] : memref<256x512xbf16, #tpu.memory_space<vmem>>, vector<256x512xbf16>
    %cst_142 = arith.constant dense<0.000000e+00> : vector<2x512xf32>
    %419 = tpu.matmul %417, %418, %cst_142 {dimension_numbers = #tpu.dot_dimension_numbers<[1], [0], [0], [1], [0, 0, 1, 1], [], []>} : vector<2x256xbf16>, vector<256x512xbf16>, vector<2x512xf32> -> vector<2x512xf32>
    %420 = arith.addf %419, %12 : vector<2x512xf32>
    %421 = vector.extract_strided_slice %420 {offsets = [0, 0], sizes = [2, 128], strides = [1, 1]} : vector<2x512xf32> to vector<2x128xf32>
    %cst_143 = arith.constant 5.000000e-01 : f32
    %422 = vector.broadcast %cst_143 : f32 to vector<2x128xf32>
    %423 = arith.mulf %422, %421 : vector<2x128xf32>
    %424 = math.tanh %423 : vector<2x128xf32>
    %cst_144 = arith.constant 5.000000e-01 : f32
    %425 = vector.broadcast %cst_144 : f32 to vector<2x128xf32>
    %426 = arith.mulf %425, %424 : vector<2x128xf32>
    %cst_145 = arith.constant 5.000000e-01 : f32
    %427 = vector.broadcast %cst_145 : f32 to vector<2x128xf32>
    %428 = arith.addf %426, %427 : vector<2x128xf32>
    %429 = vector.extract_strided_slice %420 {offsets = [0, 128], sizes = [2, 128], strides = [1, 1]} : vector<2x512xf32> to vector<2x128xf32>
    %cst_146 = arith.constant 5.000000e-01 : f32
    %430 = vector.broadcast %cst_146 : f32 to vector<2x128xf32>
    %431 = arith.mulf %430, %429 : vector<2x128xf32>
    %432 = math.tanh %431 : vector<2x128xf32>
    %cst_147 = arith.constant 5.000000e-01 : f32
    %433 = vector.broadcast %cst_147 : f32 to vector<2x128xf32>
    %434 = arith.mulf %433, %432 : vector<2x128xf32>
    %cst_148 = arith.constant 5.000000e-01 : f32
    %435 = vector.broadcast %cst_148 : f32 to vector<2x128xf32>
    %436 = arith.addf %434, %435 : vector<2x128xf32>
    %437 = vector.extract_strided_slice %420 {offsets = [0, 256], sizes = [2, 128], strides = [1, 1]} : vector<2x512xf32> to vector<2x128xf32>
    %438 = math.tanh %437 : vector<2x128xf32>
    %439 = vector.extract_strided_slice %420 {offsets = [0, 384], sizes = [2, 128], strides = [1, 1]} : vector<2x512xf32> to vector<2x128xf32>
    %cst_149 = arith.constant 5.000000e-01 : f32
    %440 = vector.broadcast %cst_149 : f32 to vector<2x128xf32>
    %441 = arith.mulf %440, %439 : vector<2x128xf32>
    %442 = math.tanh %441 : vector<2x128xf32>
    %cst_150 = arith.constant 5.000000e-01 : f32
    %443 = vector.broadcast %cst_150 : f32 to vector<2x128xf32>
    %444 = arith.mulf %443, %442 : vector<2x128xf32>
    %cst_151 = arith.constant 5.000000e-01 : f32
    %445 = vector.broadcast %cst_151 : f32 to vector<2x128xf32>
    %446 = arith.addf %444, %445 : vector<2x128xf32>
    %447 = arith.mulf %436, %376 : vector<2x128xf32>
    %448 = arith.mulf %428, %438 : vector<2x128xf32>
    %449 = arith.addf %447, %448 : vector<2x128xf32>
    %450 = math.tanh %449 : vector<2x128xf32>
    %451 = arith.mulf %446, %450 : vector<2x128xf32>
    %452 = vector.extract_strided_slice %9 {offsets = [6, 0, 0], sizes = [1, 2, 512], strides = [1, 1, 1]} : vector<8x2x512xf32> to vector<1x2x512xf32>
    %453 = vector.shape_cast %452 : vector<1x2x512xf32> to vector<2x512xf32>
    %454 = arith.truncf %415 : vector<2x128xf32> to vector<2x128xbf16>
    %c0_152 = arith.constant 0 : index
    %c0_153 = arith.constant 0 : index
    %455 = vector.load %arg3[%c0_152, %c0_153] : memref<128x512xbf16, #tpu.memory_space<vmem>>, vector<128x512xbf16>
    %cst_154 = arith.constant dense<0.000000e+00> : vector<2x512xf32>
    %456 = tpu.matmul %454, %455, %cst_154 {dimension_numbers = #tpu.dot_dimension_numbers<[1], [0], [0], [1], [0, 0, 1, 1], [], []>} : vector<2x128xbf16>, vector<128x512xbf16>, vector<2x512xf32> -> vector<2x512xf32>
    %457 = arith.addf %453, %456 : vector<2x512xf32>
    %458 = vector.extract_strided_slice %457 {offsets = [0, 0], sizes = [2, 128], strides = [1, 1]} : vector<2x512xf32> to vector<2x128xf32>
    %cst_155 = arith.constant 5.000000e-01 : f32
    %459 = vector.broadcast %cst_155 : f32 to vector<2x128xf32>
    %460 = arith.mulf %459, %458 : vector<2x128xf32>
    %461 = math.tanh %460 : vector<2x128xf32>
    %cst_156 = arith.constant 5.000000e-01 : f32
    %462 = vector.broadcast %cst_156 : f32 to vector<2x128xf32>
    %463 = arith.mulf %462, %461 : vector<2x128xf32>
    %cst_157 = arith.constant 5.000000e-01 : f32
    %464 = vector.broadcast %cst_157 : f32 to vector<2x128xf32>
    %465 = arith.addf %463, %464 : vector<2x128xf32>
    %466 = vector.extract_strided_slice %457 {offsets = [0, 128], sizes = [2, 128], strides = [1, 1]} : vector<2x512xf32> to vector<2x128xf32>
    %cst_158 = arith.constant 5.000000e-01 : f32
    %467 = vector.broadcast %cst_158 : f32 to vector<2x128xf32>
    %468 = arith.mulf %467, %466 : vector<2x128xf32>
    %469 = math.tanh %468 : vector<2x128xf32>
    %cst_159 = arith.constant 5.000000e-01 : f32
    %470 = vector.broadcast %cst_159 : f32 to vector<2x128xf32>
    %471 = arith.mulf %470, %469 : vector<2x128xf32>
    %cst_160 = arith.constant 5.000000e-01 : f32
    %472 = vector.broadcast %cst_160 : f32 to vector<2x128xf32>
    %473 = arith.addf %471, %472 : vector<2x128xf32>
    %474 = vector.extract_strided_slice %457 {offsets = [0, 256], sizes = [2, 128], strides = [1, 1]} : vector<2x512xf32> to vector<2x128xf32>
    %475 = math.tanh %474 : vector<2x128xf32>
    %476 = vector.extract_strided_slice %457 {offsets = [0, 384], sizes = [2, 128], strides = [1, 1]} : vector<2x512xf32> to vector<2x128xf32>
    %cst_161 = arith.constant 5.000000e-01 : f32
    %477 = vector.broadcast %cst_161 : f32 to vector<2x128xf32>
    %478 = arith.mulf %477, %476 : vector<2x128xf32>
    %479 = math.tanh %478 : vector<2x128xf32>
    %cst_162 = arith.constant 5.000000e-01 : f32
    %480 = vector.broadcast %cst_162 : f32 to vector<2x128xf32>
    %481 = arith.mulf %480, %479 : vector<2x128xf32>
    %cst_163 = arith.constant 5.000000e-01 : f32
    %482 = vector.broadcast %cst_163 : f32 to vector<2x128xf32>
    %483 = arith.addf %481, %482 : vector<2x128xf32>
    %484 = arith.mulf %473, %413 : vector<2x128xf32>
    %485 = arith.mulf %465, %475 : vector<2x128xf32>
    %486 = arith.addf %484, %485 : vector<2x128xf32>
    %487 = math.tanh %486 : vector<2x128xf32>
    %488 = arith.mulf %483, %487 : vector<2x128xf32>
    %489 = tpu.concatenate %488, %451 in 1 : vector<2x128xf32>, vector<2x128xf32> -> vector<2x256xf32>
    %490 = arith.truncf %489 : vector<2x256xf32> to vector<2x256xbf16>
    %c0_164 = arith.constant 0 : index
    %c0_165 = arith.constant 0 : index
    %491 = vector.load %arg4[%c0_164, %c0_165] : memref<256x512xbf16, #tpu.memory_space<vmem>>, vector<256x512xbf16>
    %cst_166 = arith.constant dense<0.000000e+00> : vector<2x512xf32>
    %492 = tpu.matmul %490, %491, %cst_166 {dimension_numbers = #tpu.dot_dimension_numbers<[1], [0], [0], [1], [0, 0, 1, 1], [], []>} : vector<2x256xbf16>, vector<256x512xbf16>, vector<2x512xf32> -> vector<2x512xf32>
    %493 = arith.addf %492, %12 : vector<2x512xf32>
    %494 = vector.extract_strided_slice %493 {offsets = [0, 0], sizes = [2, 128], strides = [1, 1]} : vector<2x512xf32> to vector<2x128xf32>
    %cst_167 = arith.constant 5.000000e-01 : f32
    %495 = vector.broadcast %cst_167 : f32 to vector<2x128xf32>
    %496 = arith.mulf %495, %494 : vector<2x128xf32>
    %497 = math.tanh %496 : vector<2x128xf32>
    %cst_168 = arith.constant 5.000000e-01 : f32
    %498 = vector.broadcast %cst_168 : f32 to vector<2x128xf32>
    %499 = arith.mulf %498, %497 : vector<2x128xf32>
    %cst_169 = arith.constant 5.000000e-01 : f32
    %500 = vector.broadcast %cst_169 : f32 to vector<2x128xf32>
    %501 = arith.addf %499, %500 : vector<2x128xf32>
    %502 = vector.extract_strided_slice %493 {offsets = [0, 128], sizes = [2, 128], strides = [1, 1]} : vector<2x512xf32> to vector<2x128xf32>
    %cst_170 = arith.constant 5.000000e-01 : f32
    %503 = vector.broadcast %cst_170 : f32 to vector<2x128xf32>
    %504 = arith.mulf %503, %502 : vector<2x128xf32>
    %505 = math.tanh %504 : vector<2x128xf32>
    %cst_171 = arith.constant 5.000000e-01 : f32
    %506 = vector.broadcast %cst_171 : f32 to vector<2x128xf32>
    %507 = arith.mulf %506, %505 : vector<2x128xf32>
    %cst_172 = arith.constant 5.000000e-01 : f32
    %508 = vector.broadcast %cst_172 : f32 to vector<2x128xf32>
    %509 = arith.addf %507, %508 : vector<2x128xf32>
    %510 = vector.extract_strided_slice %493 {offsets = [0, 256], sizes = [2, 128], strides = [1, 1]} : vector<2x512xf32> to vector<2x128xf32>
    %511 = math.tanh %510 : vector<2x128xf32>
    %512 = vector.extract_strided_slice %493 {offsets = [0, 384], sizes = [2, 128], strides = [1, 1]} : vector<2x512xf32> to vector<2x128xf32>
    %cst_173 = arith.constant 5.000000e-01 : f32
    %513 = vector.broadcast %cst_173 : f32 to vector<2x128xf32>
    %514 = arith.mulf %513, %512 : vector<2x128xf32>
    %515 = math.tanh %514 : vector<2x128xf32>
    %cst_174 = arith.constant 5.000000e-01 : f32
    %516 = vector.broadcast %cst_174 : f32 to vector<2x128xf32>
    %517 = arith.mulf %516, %515 : vector<2x128xf32>
    %cst_175 = arith.constant 5.000000e-01 : f32
    %518 = vector.broadcast %cst_175 : f32 to vector<2x128xf32>
    %519 = arith.addf %517, %518 : vector<2x128xf32>
    %520 = arith.mulf %509, %449 : vector<2x128xf32>
    %521 = arith.mulf %501, %511 : vector<2x128xf32>
    %522 = arith.addf %520, %521 : vector<2x128xf32>
    %523 = math.tanh %522 : vector<2x128xf32>
    %524 = arith.mulf %519, %523 : vector<2x128xf32>
    %525 = vector.extract_strided_slice %9 {offsets = [7, 0, 0], sizes = [1, 2, 512], strides = [1, 1, 1]} : vector<8x2x512xf32> to vector<1x2x512xf32>
    %526 = vector.shape_cast %525 : vector<1x2x512xf32> to vector<2x512xf32>
    %527 = arith.truncf %488 : vector<2x128xf32> to vector<2x128xbf16>
    %c0_176 = arith.constant 0 : index
    %c0_177 = arith.constant 0 : index
    %528 = vector.load %arg3[%c0_176, %c0_177] : memref<128x512xbf16, #tpu.memory_space<vmem>>, vector<128x512xbf16>
    %cst_178 = arith.constant dense<0.000000e+00> : vector<2x512xf32>
    %529 = tpu.matmul %527, %528, %cst_178 {dimension_numbers = #tpu.dot_dimension_numbers<[1], [0], [0], [1], [0, 0, 1, 1], [], []>} : vector<2x128xbf16>, vector<128x512xbf16>, vector<2x512xf32> -> vector<2x512xf32>
    %530 = arith.addf %526, %529 : vector<2x512xf32>
    %531 = vector.extract_strided_slice %530 {offsets = [0, 0], sizes = [2, 128], strides = [1, 1]} : vector<2x512xf32> to vector<2x128xf32>
    %cst_179 = arith.constant 5.000000e-01 : f32
    %532 = vector.broadcast %cst_179 : f32 to vector<2x128xf32>
    %533 = arith.mulf %532, %531 : vector<2x128xf32>
    %534 = math.tanh %533 : vector<2x128xf32>
    %cst_180 = arith.constant 5.000000e-01 : f32
    %535 = vector.broadcast %cst_180 : f32 to vector<2x128xf32>
    %536 = arith.mulf %535, %534 : vector<2x128xf32>
    %cst_181 = arith.constant 5.000000e-01 : f32
    %537 = vector.broadcast %cst_181 : f32 to vector<2x128xf32>
    %538 = arith.addf %536, %537 : vector<2x128xf32>
    %539 = vector.extract_strided_slice %530 {offsets = [0, 128], sizes = [2, 128], strides = [1, 1]} : vector<2x512xf32> to vector<2x128xf32>
    %cst_182 = arith.constant 5.000000e-01 : f32
    %540 = vector.broadcast %cst_182 : f32 to vector<2x128xf32>
    %541 = arith.mulf %540, %539 : vector<2x128xf32>
    %542 = math.tanh %541 : vector<2x128xf32>
    %cst_183 = arith.constant 5.000000e-01 : f32
    %543 = vector.broadcast %cst_183 : f32 to vector<2x128xf32>
    %544 = arith.mulf %543, %542 : vector<2x128xf32>
    %cst_184 = arith.constant 5.000000e-01 : f32
    %545 = vector.broadcast %cst_184 : f32 to vector<2x128xf32>
    %546 = arith.addf %544, %545 : vector<2x128xf32>
    %547 = vector.extract_strided_slice %530 {offsets = [0, 256], sizes = [2, 128], strides = [1, 1]} : vector<2x512xf32> to vector<2x128xf32>
    %548 = math.tanh %547 : vector<2x128xf32>
    %549 = vector.extract_strided_slice %530 {offsets = [0, 384], sizes = [2, 128], strides = [1, 1]} : vector<2x512xf32> to vector<2x128xf32>
    %cst_185 = arith.constant 5.000000e-01 : f32
    %550 = vector.broadcast %cst_185 : f32 to vector<2x128xf32>
    %551 = arith.mulf %550, %549 : vector<2x128xf32>
    %552 = math.tanh %551 : vector<2x128xf32>
    %cst_186 = arith.constant 5.000000e-01 : f32
    %553 = vector.broadcast %cst_186 : f32 to vector<2x128xf32>
    %554 = arith.mulf %553, %552 : vector<2x128xf32>
    %cst_187 = arith.constant 5.000000e-01 : f32
    %555 = vector.broadcast %cst_187 : f32 to vector<2x128xf32>
    %556 = arith.addf %554, %555 : vector<2x128xf32>
    %557 = arith.mulf %546, %486 : vector<2x128xf32>
    %558 = arith.mulf %538, %548 : vector<2x128xf32>
    %559 = arith.addf %557, %558 : vector<2x128xf32>
    %560 = math.tanh %559 : vector<2x128xf32>
    %561 = arith.mulf %556, %560 : vector<2x128xf32>
    %562 = tpu.concatenate %561, %524 in 1 : vector<2x128xf32>, vector<2x128xf32> -> vector<2x256xf32>
    %563 = arith.truncf %562 : vector<2x256xf32> to vector<2x256xbf16>
    %c0_188 = arith.constant 0 : index
    %c0_189 = arith.constant 0 : index
    %564 = vector.load %arg4[%c0_188, %c0_189] : memref<256x512xbf16, #tpu.memory_space<vmem>>, vector<256x512xbf16>
    %cst_190 = arith.constant dense<0.000000e+00> : vector<2x512xf32>
    %565 = tpu.matmul %563, %564, %cst_190 {dimension_numbers = #tpu.dot_dimension_numbers<[1], [0], [0], [1], [0, 0, 1, 1], [], []>} : vector<2x256xbf16>, vector<256x512xbf16>, vector<2x512xf32> -> vector<2x512xf32>
    %566 = arith.addf %565, %12 : vector<2x512xf32>
    %567 = vector.extract_strided_slice %566 {offsets = [0, 0], sizes = [2, 128], strides = [1, 1]} : vector<2x512xf32> to vector<2x128xf32>
    %cst_191 = arith.constant 5.000000e-01 : f32
    %568 = vector.broadcast %cst_191 : f32 to vector<2x128xf32>
    %569 = arith.mulf %568, %567 : vector<2x128xf32>
    %570 = math.tanh %569 : vector<2x128xf32>
    %cst_192 = arith.constant 5.000000e-01 : f32
    %571 = vector.broadcast %cst_192 : f32 to vector<2x128xf32>
    %572 = arith.mulf %571, %570 : vector<2x128xf32>
    %cst_193 = arith.constant 5.000000e-01 : f32
    %573 = vector.broadcast %cst_193 : f32 to vector<2x128xf32>
    %574 = arith.addf %572, %573 : vector<2x128xf32>
    %575 = vector.extract_strided_slice %566 {offsets = [0, 128], sizes = [2, 128], strides = [1, 1]} : vector<2x512xf32> to vector<2x128xf32>
    %cst_194 = arith.constant 5.000000e-01 : f32
    %576 = vector.broadcast %cst_194 : f32 to vector<2x128xf32>
    %577 = arith.mulf %576, %575 : vector<2x128xf32>
    %578 = math.tanh %577 : vector<2x128xf32>
    %cst_195 = arith.constant 5.000000e-01 : f32
    %579 = vector.broadcast %cst_195 : f32 to vector<2x128xf32>
    %580 = arith.mulf %579, %578 : vector<2x128xf32>
    %cst_196 = arith.constant 5.000000e-01 : f32
    %581 = vector.broadcast %cst_196 : f32 to vector<2x128xf32>
    %582 = arith.addf %580, %581 : vector<2x128xf32>
    %583 = vector.extract_strided_slice %566 {offsets = [0, 256], sizes = [2, 128], strides = [1, 1]} : vector<2x512xf32> to vector<2x128xf32>
    %584 = math.tanh %583 : vector<2x128xf32>
    %585 = vector.extract_strided_slice %566 {offsets = [0, 384], sizes = [2, 128], strides = [1, 1]} : vector<2x512xf32> to vector<2x128xf32>
    %cst_197 = arith.constant 5.000000e-01 : f32
    %586 = vector.broadcast %cst_197 : f32 to vector<2x128xf32>
    %587 = arith.mulf %586, %585 : vector<2x128xf32>
    %588 = math.tanh %587 : vector<2x128xf32>
    %cst_198 = arith.constant 5.000000e-01 : f32
    %589 = vector.broadcast %cst_198 : f32 to vector<2x128xf32>
    %590 = arith.mulf %589, %588 : vector<2x128xf32>
    %cst_199 = arith.constant 5.000000e-01 : f32
    %591 = vector.broadcast %cst_199 : f32 to vector<2x128xf32>
    %592 = arith.addf %590, %591 : vector<2x128xf32>
    %593 = arith.mulf %582, %522 : vector<2x128xf32>
    %594 = arith.mulf %574, %584 : vector<2x128xf32>
    %595 = arith.addf %593, %594 : vector<2x128xf32>
    %596 = math.tanh %595 : vector<2x128xf32>
    %597 = arith.mulf %592, %596 : vector<2x128xf32>
    %c0_200 = arith.constant 0 : index
    %c0_201 = arith.constant 0 : index
    %598 = vector.load %arg6[%c0_200, %c0_201] : memref<1x128xf32, #tpu.memory_space<vmem>>, vector<1x128xf32>
    %599 = vector.broadcast %598 : vector<1x128xf32> to vector<2x128xf32>
    %600 = arith.mulf %597, %599 : vector<2x128xf32>
    %cst_202 = arith.constant dense<0.000000e+00> : vector<2xf32>
    %601 = vector.multi_reduction <add>, %600, %cst_202 [1] : vector<2x128xf32> to vector<2xf32>
    %602 = vector.shape_cast %601 : vector<2xf32> to vector<2x1xf32>
    %c0_203 = arith.constant 0 : index
    %c0_204 = arith.constant 0 : index
    %603 = vector.load %arg7[%c0_203, %c0_204] : memref<1x1xf32, #tpu.memory_space<vmem>>, vector<1x1xf32>
    %604 = vector.broadcast %603 : vector<1x1xf32> to vector<2x1xf32>
    %605 = arith.addf %602, %604 : vector<2x1xf32>
    %c0_205 = arith.constant 0 : index
    %c0_206 = arith.constant 0 : index
    %606 = vector.load %arg8[%c0_205, %c0_206] : memref<2x1xf32, #tpu.memory_space<vmem>>, vector<2x1xf32>
    tpu.vector_store %arg8[%c0_205, %c0_206], %605 {strides = array<i32>} : memref<2x1xf32, #tpu.memory_space<vmem>>, vector<2x1xf32>,
    return
  }
}

</mosaic_0001>

<llo_original>
// kernel: tpu_custom_call.1
$region0: #{tpu_custom_call.1}
  #allocation0 [shape = 'u32[]', space=smem, size = 0x4, offset = 0x4, fixed_abs, tag = 'smem constant byte address 0x4 - core index']
  #allocation1 [shape = 'u32[144,128]{1,0:T(1,128)}', space=vmem, size = 0x12000, scoped, tag = 'internal scratch']
  #allocation2 [shape = 'f32[1,1]{1,0:T(1,128)S(1)}', space=vmem, size = 0x200, scoped, tag = 'scoped memory for tpu_custom_call.1']
  %s0 = inlined_call_operand.vmem [shape: f32[8,2,1], index: 0, kind: input, shape index: {}]
  %s1 = inlined_call_operand.vmem [shape: f32[1,512], index: 1, kind: input, shape index: {}]
  %s2 = inlined_call_operand.vmem [shape: f32[1,512], index: 2, kind: input, shape index: {}]
  %s3 = inlined_call_operand.hbm [shape: bf16[128,512], index: 3, kind: input, shape index: {}]
  %s4 = inlined_call_operand.hbm [shape: bf16[256,512], index: 4, kind: input, shape index: {}]
  %s5 = inlined_call_operand.vmem [shape: f32[1,512], index: 5, kind: input, shape index: {}]
  %s6 = inlined_call_operand.vmem [shape: f32[1,128], index: 6, kind: input, shape index: {}]
  %s7 = inlined_call_operand.<no memory space> [shape: f32[1,1], index: 7, kind: input, shape index: {}]
  %s8 = inlined_call_operand.vmem [shape: f32[2,1], index: 8, kind: output, shape index: {}]
  %s9 = sld [smem:[#allocation0]]
  $region50: #{tpu_custom_call.1} parent=0
    _
  %s11 = ssub.s32 1, %s9
  %s12 = scalar_select 0, %s11, %s9
  %v13 = vstv %s7
  %14 = vst [vmem:[#allocation2] sm:$0x1] %v13
  $region1: #{tpu_custom_call.1} parent=0
    #allocation3 [shape = 'u8[131072]{0}', space=vmem, size = 0x20000, scoped, tag = 'input window, operand 3, single buffered']
    #allocation4 [shape = 's32[1]{0}', space=sflag, size = 0x4, scoped, tag = 'scoped memory for tpu_custom_call.1']
    #allocation5 [shape = 'u8[262144]{0}', space=vmem, size = 0x40000, scoped, tag = 'input window, operand 4, single buffered']
    #allocation6 [shape = 's32[1]{0}', space=sflag, size = 0x4, scoped, tag = 'scoped memory for tpu_custom_call.1']
    %15 = vsyncpa [#allocation4], 0
    %16 = vsyncpa [#allocation6], 0
    // Predicated region
    $region2: #{tpu_custom_call.1} parent=1 // pred_check
      _
    $region3: #{tpu_custom_call.1} parent=1 // pred_check_branch
      %18 = sbr.rel (0) target = $region5
    $region4: #{tpu_custom_call.1} parent=1 // pred_region
      _
    $region5: #{tpu_custom_call.1} parent=1 // pred_fallthru
      _
    // Predicated region
    $region6: #{tpu_custom_call.1} parent=1 // pred_check
      _
    $region7: #{tpu_custom_call.1} parent=1 // pred_check_branch
      %20 = sbr.rel (0) target = $region9
    $region8: #{tpu_custom_call.1} parent=1 // pred_region
      _
    $region9: #{tpu_custom_call.1} parent=1 // pred_fallthru
      _
    // Predicated region
    $region10: #{tpu_custom_call.1} parent=1 // pred_check
      _
    $region11: #{tpu_custom_call.1} parent=1 // pred_check_branch
      %22 = sbr.rel (0) target = $region13
    $region12: #{tpu_custom_call.1} parent=1 // pred_region
      _
    $region13: #{tpu_custom_call.1} parent=1 // pred_fallthru
      _
    // Predicated region
    $region14: #{tpu_custom_call.1} parent=1 // pred_check
      _
    $region15: #{tpu_custom_call.1} parent=1 // pred_check_branch
      %24 = sbr.rel (0) target = $region17
    $region16: #{tpu_custom_call.1} parent=1 // pred_region
      %s26 = ssub.s32 4096, 4096
      %27 = vsyncadd [#allocation4], %s26
      %s28 = sshll.u32 [#allocation3], 4
      %s29 = int_to_ptr.vmem [resolvable:$true] %s28
      %34 = dma.hbm_to_vmem [thread:$0]  %s3, 4096, %s29, [#allocation4], 256, 256, 16
    $region17: #{tpu_custom_call.1} parent=1 // pred_fallthru
      _
    // Predicated region
    $region18: #{tpu_custom_call.1} parent=1 // pred_check
      _
    $region19: #{tpu_custom_call.1} parent=1 // pred_check_branch
      %36 = sbr.rel (0) target = $region21
    $region20: #{tpu_custom_call.1} parent=1 // pred_region
      %s38 = ssub.s32 8192, 8192
      %39 = vsyncadd [#allocation6], %s38
      %s40 = sshll.u32 [#allocation5], 4
      %s41 = int_to_ptr.vmem [resolvable:$true] %s40
      %46 = dma.hbm_to_vmem [thread:$0]  %s4, 8192, %s41, [#allocation6], 256, 256, 16
    $region21: #{tpu_custom_call.1} parent=1 // pred_fallthru
      _
    // Predicated region
    $region22: #{tpu_custom_call.1} parent=1 // pred_check
      _
    $region23: #{tpu_custom_call.1} parent=1 // pred_check_branch
      %48 = sbr.rel (0) target = $region25
    $region24: #{tpu_custom_call.1} parent=1 // pred_region
      _
    $region25: #{tpu_custom_call.1} parent=1 // pred_fallthru
      _
    // Predicated region
    $region26: #{tpu_custom_call.1} parent=1 // pred_check
      _
    $region27: #{tpu_custom_call.1} parent=1 // pred_check_branch
      %50 = sbr.rel (0) target = $region29
    $region28: #{tpu_custom_call.1} parent=1 // pred_region
      _
    $region29: #{tpu_custom_call.1} parent=1 // pred_fallthru
      _
    // Predicated region
    $region30: #{tpu_custom_call.1} parent=1 // pred_check
      _
    $region31: #{tpu_custom_call.1} parent=1 // pred_check_branch
      %52 = sbr.rel (0) target = $region33
    $region32: #{tpu_custom_call.1} parent=1 // pred_region
      _
    $region33: #{tpu_custom_call.1} parent=1 // pred_fallthru
      _
    // Predicated region
    $region34: #{tpu_custom_call.1} parent=1 // pred_check
      _
    $region35: #{tpu_custom_call.1} parent=1 // pred_check_branch
      %54 = sbr.rel (0) target = $region37
    $region36: #{tpu_custom_call.1} parent=1 // pred_region
      %55 = dma.done [#allocation4], 4096
    $region37: #{tpu_custom_call.1} parent=1 // pred_fallthru
      _
    // Predicated region
    $region38: #{tpu_custom_call.1} parent=1 // pred_check
      _
    $region39: #{tpu_custom_call.1} parent=1 // pred_check_branch
      %57 = sbr.rel (0) target = $region41
    $region40: #{tpu_custom_call.1} parent=1 // pred_region
      %58 = dma.done [#allocation6], 8192
    $region41: #{tpu_custom_call.1} parent=1 // pred_fallthru
      _
    %v60 = vld [vmem:[%s0] sm:$0x3]
    %v61 = vld [vmem:[%s0 + $0x2] sm:$0x3]
    %v62 = vld [vmem:[%s0 + $0x4] sm:$0x3]
    %v63 = vld [vmem:[%s0 + $0x6] sm:$0x3]
    %v64 = vld [vmem:[%s0 + $0x8] sm:$0x3]
    %v65 = vld [vmem:[%s0 + $0xa] sm:$0x3]
    %v66 = vld [vmem:[%s0 + $0xc] sm:$0x3]
    %v67 = vld [vmem:[%s0 + $0xe] sm:$0x3]
    %v68 = vld [vmem:[%s1] sm:$0xf]
    %70 = vset.pattern.permute.xlu0 0
    %71 = vperm.xlu0 %70, %v60
    %v72 = vpop.permute.xlu0 %71
    %75 = vset.pattern.permute.xlu0 0
    %76 = vperm.xlu0 %75, %v61
    %v77 = vpop.permute.xlu0 %76
    %80 = vset.pattern.permute.xlu0 0
    %81 = vperm.xlu0 %80, %v62
    %v82 = vpop.permute.xlu0 %81
    %85 = vset.pattern.permute.xlu0 0
    %86 = vperm.xlu0 %85, %v63
    %v87 = vpop.permute.xlu0 %86
    %90 = vset.pattern.permute.xlu0 0
    %91 = vperm.xlu0 %90, %v64
    %v92 = vpop.permute.xlu0 %91
    %95 = vset.pattern.permute.xlu0 0
    %96 = vperm.xlu0 %95, %v65
    %v97 = vpop.permute.xlu0 %96
    %100 = vset.pattern.permute.xlu0 0
    %101 = vperm.xlu0 %100, %v66
    %v102 = vpop.permute.xlu0 %101
    %105 = vset.pattern.permute.xlu0 0
    %106 = vperm.xlu0 %105, %v67
    %v107 = vpop.permute.xlu0 %106
    %v110 = vlaneseq
    %v111 = vshrl.u32 %v110, 7
    %v112 = vsub.s32 0, %v111
    %v113 = vrot.slane %v68, %v112
    %v114 = vlaneseq
    %v115 = vshrl.u32 %v114, 7
    %v116 = vsub.s32 1, %v115
    %v117 = vrot.slane %v68, %v116
    %v118 = vlaneseq
    %v119 = vshrl.u32 %v118, 7
    %v120 = vsub.s32 2, %v119
    %v121 = vrot.slane %v68, %v120
    %v122 = vlaneseq
    %v123 = vshrl.u32 %v122, 7
    %v124 = vsub.s32 3, %v123
    %v125 = vrot.slane %v68, %v124
    %v130 = vmul.f32 %v72, %v113
    %v131 = vmul.f32 %v72, %v117
    %v132 = vmul.f32 %v72, %v121
    %v133 = vmul.f32 %v72, %v125
    %v134 = vmul.f32 %v77, %v113
    %v135 = vmul.f32 %v77, %v117
    %v136 = vmul.f32 %v77, %v121
    %v137 = vmul.f32 %v77, %v125
    %v138 = vmul.f32 %v82, %v113
    %v139 = vmul.f32 %v82, %v117
    %v140 = vmul.f32 %v82, %v121
    %v141 = vmul.f32 %v82, %v125
    %v142 = vmul.f32 %v87, %v113
    %v143 = vmul.f32 %v87, %v117
    %v144 = vmul.f32 %v87, %v121
    %v145 = vmul.f32 %v87, %v125
    %v146 = vmul.f32 %v92, %v113
    %v147 = vmul.f32 %v92, %v117
    %v148 = vmul.f32 %v92, %v121
    %v149 = vmul.f32 %v92, %v125
    %v150 = vmul.f32 %v97, %v113
    %v151 = vmul.f32 %v97, %v117
    %v152 = vmul.f32 %v97, %v121
    %v153 = vmul.f32 %v97, %v125
    %v154 = vmul.f32 %v102, %v113
    %v155 = vmul.f32 %v102, %v117
    %v156 = vmul.f32 %v102, %v121
    %v157 = vmul.f32 %v102, %v125
    %v158 = vmul.f32 %v107, %v113
    %v159 = vmul.f32 %v107, %v117
    %v160 = vmul.f32 %v107, %v121
    %v161 = vmul.f32 %v107, %v125
    %v162 = vld [vmem:[%s2] sm:$0xf]
    %v164 = vlaneseq
    %v165 = vshrl.u32 %v164, 7
    %v166 = vsub.s32 0, %v165
    %v167 = vrot.slane %v162, %v166
    %v168 = vlaneseq
    %v169 = vshrl.u32 %v168, 7
    %v170 = vsub.s32 1, %v169
    %v171 = vrot.slane %v162, %v170
    %v172 = vlaneseq
    %v173 = vshrl.u32 %v172, 7
    %v174 = vsub.s32 2, %v173
    %v175 = vrot.slane %v162, %v174
    %v176 = vlaneseq
    %v177 = vshrl.u32 %v176, 7
    %v178 = vsub.s32 3, %v177
    %v179 = vrot.slane %v162, %v178
    %v184 = vadd.f32 %v130, %v167
    %v185 = vadd.f32 %v131, %v171
    %v186 = vadd.f32 %v132, %v175
    %v187 = vadd.f32 %v133, %v179
    %v188 = vadd.f32 %v134, %v167
    %v189 = vadd.f32 %v135, %v171
    %v190 = vadd.f32 %v136, %v175
    %v191 = vadd.f32 %v137, %v179
    %v192 = vadd.f32 %v138, %v167
    %v193 = vadd.f32 %v139, %v171
    %v194 = vadd.f32 %v140, %v175
    %v195 = vadd.f32 %v141, %v179
    %v196 = vadd.f32 %v142, %v167
    %v197 = vadd.f32 %v143, %v171
    %v198 = vadd.f32 %v144, %v175
    %v199 = vadd.f32 %v145, %v179
    %v200 = vadd.f32 %v146, %v167
    %v201 = vadd.f32 %v147, %v171
    %v202 = vadd.f32 %v148, %v175
    %v203 = vadd.f32 %v149, %v179
    %v204 = vadd.f32 %v150, %v167
    %v205 = vadd.f32 %v151, %v171
    %v206 = vadd.f32 %v152, %v175
    %v207 = vadd.f32 %v153, %v179
    %v208 = vadd.f32 %v154, %v167
    %v209 = vadd.f32 %v155, %v171
    %v210 = vadd.f32 %v156, %v175
    %v211 = vadd.f32 %v157, %v179
    %v212 = vadd.f32 %v158, %v167
    %v213 = vadd.f32 %v159, %v171
    %v214 = vadd.f32 %v160, %v175
    %v215 = vadd.f32 %v161, %v179
    %v216 = vld [vmem:[%s5] sm:$0xf]
    %v218 = vlaneseq
    %v219 = vshrl.u32 %v218, 7
    %v220 = vsub.s32 0, %v219
    %v221 = vrot.slane %v216, %v220
    %v222 = vlaneseq
    %v223 = vshrl.u32 %v222, 7
    %v224 = vsub.s32 1, %v223
    %v225 = vrot.slane %v216, %v224
    %v226 = vlaneseq
    %v227 = vshrl.u32 %v226, 7
    %v228 = vsub.s32 2, %v227
    %v229 = vrot.slane %v216, %v228
    %v230 = vlaneseq
    %v231 = vshrl.u32 %v230, 7
    %v232 = vsub.s32 3, %v231
    %v233 = vrot.slane %v216, %v232
    %v238 = vld [vmem:[#allocation3] sm:$0xff]
    %v239 = vld [vmem:[#allocation3 + $0x8] sm:$0xff]
    %v240 = vld [vmem:[#allocation3 + $0x10] sm:$0xff]
    %v241 = vld [vmem:[#allocation3 + $0x18] sm:$0xff]
    %v242 = vld [vmem:[#allocation3 + $0x20] sm:$0xff]
    %v243 = vld [vmem:[#allocation3 + $0x28] sm:$0xff]
    %v244 = vld [vmem:[#allocation3 + $0x30] sm:$0xff]
    %v245 = vld [vmem:[#allocation3 + $0x38] sm:$0xff]
    %v246 = vld [vmem:[#allocation3 + $0x40] sm:$0xff]
    %v247 = vld [vmem:[#allocation3 + $0x48] sm:$0xff]
    %v248 = vld [vmem:[#allocation3 + $0x50] sm:$0xff]
    %v249 = vld [vmem:[#allocation3 + $0x58] sm:$0xff]
    %v250 = vld [vmem:[#allocation3 + $0x60] sm:$0xff]
    %v251 = vld [vmem:[#allocation3 + $0x68] sm:$0xff]
    %v252 = vld [vmem:[#allocation3 + $0x70] sm:$0xff]
    %v253 = vld [vmem:[#allocation3 + $0x78] sm:$0xff]
    %v254 = vld [vmem:[#allocation3 + $0x80] sm:$0xff]
    %v255 = vld [vmem:[#allocation3 + $0x88] sm:$0xff]
    %v256 = vld [vmem:[#allocation3 + $0x90] sm:$0xff]
    %v257 = vld [vmem:[#allocation3 + $0x98] sm:$0xff]
    %v258 = vld [vmem:[#allocation3 + $0xa0] sm:$0xff]
    %v259 = vld [vmem:[#allocation3 + $0xa8] sm:$0xff]
    %v260 = vld [vmem:[#allocation3 + $0xb0] sm:$0xff]
    %v261 = vld [vmem:[#allocation3 + $0xb8] sm:$0xff]
    %v262 = vld [vmem:[#allocation3 + $0xc0] sm:$0xff]
    %v263 = vld [vmem:[#allocation3 + $0xc8] sm:$0xff]
    %v264 = vld [vmem:[#allocation3 + $0xd0] sm:$0xff]
    %v265 = vld [vmem:[#allocation3 + $0xd8] sm:$0xff]
    %v266 = vld [vmem:[#allocation3 + $0xe0] sm:$0xff]
    %v267 = vld [vmem:[#allocation3 + $0xe8] sm:$0xff]
    %v268 = vld [vmem:[#allocation3 + $0xf0] sm:$0xff]
    %v269 = vld [vmem:[#allocation3 + $0xf8] sm:$0xff]
    %v302 = vunpack.c.l.b16 %v238
    %v303 = vunpack.c.h.b16 %v238
    %v304 = vunpack.c.l.b16 %v239
    %v305 = vunpack.c.h.b16 %v239
    %v306 = vunpack.c.l.b16 %v240
    %v307 = vunpack.c.h.b16 %v240
    %v308 = vunpack.c.l.b16 %v241
    %v309 = vunpack.c.h.b16 %v241
    %v310 = vunpack.c.l.b16 %v242
    %v311 = vunpack.c.h.b16 %v242
    %v312 = vunpack.c.l.b16 %v243
    %v313 = vunpack.c.h.b16 %v243
    %v314 = vunpack.c.l.b16 %v244
    %v315 = vunpack.c.h.b16 %v244
    %v316 = vunpack.c.l.b16 %v245
    %v317 = vunpack.c.h.b16 %v245
    %v318 = vunpack.c.l.b16 %v246
    %v319 = vunpack.c.h.b16 %v246
    %v320 = vunpack.c.l.b16 %v247
    %v321 = vunpack.c.h.b16 %v247
    %v322 = vunpack.c.l.b16 %v248
    %v323 = vunpack.c.h.b16 %v248
    %v324 = vunpack.c.l.b16 %v249
    %v325 = vunpack.c.h.b16 %v249
    %v326 = vunpack.c.l.b16 %v250
    %v327 = vunpack.c.h.b16 %v250
    %v328 = vunpack.c.l.b16 %v251
    %v329 = vunpack.c.h.b16 %v251
    %v330 = vunpack.c.l.b16 %v252
    %v331 = vunpack.c.h.b16 %v252
    %v332 = vunpack.c.l.b16 %v253
    %v333 = vunpack.c.h.b16 %v253
    %v334 = vunpack.c.l.b16 %v254
    %v335 = vunpack.c.h.b16 %v254
    %v336 = vunpack.c.l.b16 %v255
    %v337 = vunpack.c.h.b16 %v255
    %v338 = vunpack.c.l.b16 %v256
    %v339 = vunpack.c.h.b16 %v256
    %v340 = vunpack.c.l.b16 %v257
    %v341 = vunpack.c.h.b16 %v257
    %v342 = vunpack.c.l.b16 %v258
    %v343 = vunpack.c.h.b16 %v258
    %v344 = vunpack.c.l.b16 %v259
    %v345 = vunpack.c.h.b16 %v259
    %v346 = vunpack.c.l.b16 %v260
    %v347 = vunpack.c.h.b16 %v260
    %v348 = vunpack.c.l.b16 %v261
    %v349 = vunpack.c.h.b16 %v261
    %v350 = vunpack.c.l.b16 %v262
    %v351 = vunpack.c.h.b16 %v262
    %v352 = vunpack.c.l.b16 %v263
    %v353 = vunpack.c.h.b16 %v263
    %v354 = vunpack.c.l.b16 %v264
    %v355 = vunpack.c.h.b16 %v264
    %v356 = vunpack.c.l.b16 %v265
    %v357 = vunpack.c.h.b16 %v265
    %v358 = vunpack.c.l.b16 %v266
    %v359 = vunpack.c.h.b16 %v266
    %v360 = vunpack.c.l.b16 %v267
    %v361 = vunpack.c.h.b16 %v267
    %v362 = vunpack.c.l.b16 %v268
    %v363 = vunpack.c.h.b16 %v268
    %v364 = vunpack.c.l.b16 %v269
    %v365 = vunpack.c.h.b16 %v269
    %v366 = vpack.c.b16 %v306, %v302
    %v367 = vpack.c.b16 %v307, %v303
    %v368 = vpack.c.b16 %v308, %v304
    %v369 = vpack.c.b16 %v309, %v305
    %v370 = vpack.c.b16 %v314, %v310
    %v371 = vpack.c.b16 %v315, %v311
    %v372 = vpack.c.b16 %v316, %v312
    %v373 = vpack.c.b16 %v317, %v313
    %v374 = vpack.c.b16 %v322, %v318
    %v375 = vpack.c.b16 %v323, %v319
    %v376 = vpack.c.b16 %v324, %v320
    %v377 = vpack.c.b16 %v325, %v321
    %v378 = vpack.c.b16 %v330, %v326
    %v379 = vpack.c.b16 %v331, %v327
    %v380 = vpack.c.b16 %v332, %v328
    %v381 = vpack.c.b16 %v333, %v329
    %v382 = vpack.c.b16 %v338, %v334
    %v383 = vpack.c.b16 %v339, %v335
    %v384 = vpack.c.b16 %v340, %v336
    %v385 = vpack.c.b16 %v341, %v337
    %v386 = vpack.c.b16 %v346, %v342
    %v387 = vpack.c.b16 %v347, %v343
    %v388 = vpack.c.b16 %v348, %v344
    %v389 = vpack.c.b16 %v349, %v345
    %v390 = vpack.c.b16 %v354, %v350
    %v391 = vpack.c.b16 %v355, %v351
    %v392 = vpack.c.b16 %v356, %v352
    %v393 = vpack.c.b16 %v357, %v353
    %v394 = vpack.c.b16 %v362, %v358
    %v395 = vpack.c.b16 %v363, %v359
    %v396 = vpack.c.b16 %v364, %v360
    %v397 = vpack.c.b16 %v365, %v361
    %430 = vmatprep.subr.bf16.mxu0 %v367
    %431 = vmatpush1.bf16.msra.mxu0 %v366
    %432 = vmatprep.subr.bf16.mxu0 %v371
    %433 = vmatpush1.bf16.msra.mxu0 %v370
    %434 = vmatprep.subr.bf16.mxu0 %v375
    %435 = vmatpush1.bf16.msra.mxu0 %v374
    %436 = vmatprep.subr.bf16.mxu0 %v379
    %437 = vmatpush1.bf16.msra.mxu0 %v378
    %438 = vmatprep.subr.bf16.mxu0 %v383
    %439 = vmatpush1.bf16.msra.mxu0 %v382
    %440 = vmatprep.subr.bf16.mxu0 %v387
    %441 = vmatpush1.bf16.msra.mxu0 %v386
    %442 = vmatprep.subr.bf16.mxu0 %v391
    %443 = vmatpush1.bf16.msra.mxu0 %v390
    %444 = vmatprep.subr.bf16.mxu0 %v395
    %445 = vmatpush1.bf16.msra.mxu0 %v394
    %446 = vmatprep.subr.bf16.mxu0 0
    %447 = vmatpush1.bf16.msra.mxu0 0
    %448 = vmatprep.subr.bf16.mxu0 0
    %449 = vmatpush1.bf16.msra.mxu0 0
    %450 = vmatprep.subr.bf16.mxu0 0
    %451 = vmatpush1.bf16.msra.mxu0 0
    %452 = vmatprep.subr.bf16.mxu0 0
    %453 = vmatpush1.bf16.msra.mxu0 0
    %454 = vmatprep.subr.bf16.mxu0 0
    %455 = vmatpush1.bf16.msra.mxu0 0
    %456 = vmatprep.subr.bf16.mxu0 0
    %457 = vmatpush1.bf16.msra.mxu0 0
    %458 = vmatprep.subr.bf16.mxu0 0
    %459 = vmatpush1.bf16.msra.mxu0 0
    %460 = vmatprep.subr.bf16.mxu0 0
    %461 = vmatpush1.bf16.msra.mxu0 0
    %462 = vmatprep.mubr.bf16.mxu0 0
    %463 = vmatmul.mubr.bf16.gmra.mrb[0].mxu0 0
    %v464 = vpop.f32.mrb[0].mxu0
    %v465 = vadd.f32 0.0, %v464
    %v466 = vpop.f32.mrb[0].mxu0
    %v467 = vadd.f32 0.0, %v466
    %v468 = vpop.f32.mrb[0].mxu0
    %v469 = vpop.f32.mrb[0].mxu0
    %470 = vdwg.mxu0
    %471 = vmatprep.subr.bf16.mxu0 %v369
    %472 = vmatpush1.bf16.msra.mxu0 %v368
    %473 = vmatprep.subr.bf16.mxu0 %v373
    %474 = vmatpush1.bf16.msra.mxu0 %v372
    %475 = vmatprep.subr.bf16.mxu0 %v377
    %476 = vmatpush1.bf16.msra.mxu0 %v376
    %477 = vmatprep.subr.bf16.mxu0 %v381
    %478 = vmatpush1.bf16.msra.mxu0 %v380
    %479 = vmatprep.subr.bf16.mxu0 %v385
    %480 = vmatpush1.bf16.msra.mxu0 %v384
    %481 = vmatprep.subr.bf16.mxu0 %v389
    %482 = vmatpush1.bf16.msra.mxu0 %v388
    %483 = vmatprep.subr.bf16.mxu0 %v393
    %484 = vmatpush1.bf16.msra.mxu0 %v392
    %485 = vmatprep.subr.bf16.mxu0 %v397
    %486 = vmatpush1.bf16.msra.mxu0 %v396
    %487 = vmatprep.subr.bf16.mxu0 0
    %488 = vmatpush1.bf16.msra.mxu0 0
    %489 = vmatprep.subr.bf16.mxu0 0
    %490 = vmatpush1.bf16.msra.mxu0 0
    %491 = vmatprep.subr.bf16.mxu0 0
    %492 = vmatpush1.bf16.msra.mxu0 0
    %493 = vmatprep.subr.bf16.mxu0 0
    %494 = vmatpush1.bf16.msra.mxu0 0
    %495 = vmatprep.subr.bf16.mxu0 0
    %496 = vmatpush1.bf16.msra.mxu0 0
    %497 = vmatprep.subr.bf16.mxu0 0
    %498 = vmatpush1.bf16.msra.mxu0 0
    %499 = vmatprep.subr.bf16.mxu0 0
    %500 = vmatpush1.bf16.msra.mxu0 0
    %501 = vmatprep.subr.bf16.mxu0 0
    %502 = vmatpush1.bf16.msra.mxu0 0
    %503 = vmatprep.mubr.bf16.mxu0 0
    %504 = vmatmul.mubr.bf16.gmra.mrb[0].mxu0 0
    %v505 = vpop.f32.mrb[0].mxu0
    %v506 = vadd.f32 0.0, %v505
    %v507 = vpop.f32.mrb[0].mxu0
    %v508 = vadd.f32 0.0, %v507
    %v509 = vpop.f32.mrb[0].mxu0
    %v510 = vpop.f32.mrb[0].mxu0
    %511 = vdwg.mxu0
    %v512 = vadd.f32 %v184, %v465
    %v513 = vadd.f32 %v185, %v467
    %v514 = vadd.f32 %v186, %v506
    %v515 = vadd.f32 %v187, %v508
    %v516 = vmul.f32 %v512, 0.5
    %v517 = vtanh.pop %v516
    %v518 = vmul.f32 %v517, 0.5
    %v519 = vadd.f32 %v518, 0.5
    %v520 = vmul.f32 %v513, 0.5
    %v521 = vtanh.pop %v520
    %v522 = vmul.f32 %v521, 0.5
    %v523 = vadd.f32 %v522, 0.5
    %v524 = vtanh.pop %v514
    %v525 = vmul.f32 %v515, 0.5
    %v526 = vtanh.pop %v525
    %v527 = vmul.f32 %v526, 0.5
    %v528 = vadd.f32 %v527, 0.5
    %v529 = vmul.f32 %v523, 0.0
    %v530 = vmul.f32 %v519, %v524
    %v531 = vadd.f32 %v529, %v530
    %v532 = vtanh.pop %v531
    %v533 = vmul.f32 %v528, %v532
    %v534 = vpack.c.bf16 %v533, %v533
    %v535 = vpack.c.bf16 0.0, 0.0
    %v536 = vld [vmem:[#allocation5] sm:$0xff]
    %v537 = vld [vmem:[#allocation5 + $0x8] sm:$0xff]
    %v538 = vld [vmem:[#allocation5 + $0x10] sm:$0xff]
    %v539 = vld [vmem:[#allocation5 + $0x18] sm:$0xff]
    %v540 = vld [vmem:[#allocation5 + $0x20] sm:$0xff]
    %v541 = vld [vmem:[#allocation5 + $0x28] sm:$0xff]
    %v542 = vld [vmem:[#allocation5 + $0x30] sm:$0xff]
    %v543 = vld [vmem:[#allocation5 + $0x38] sm:$0xff]
    %v544 = vld [vmem:[#allocation5 + $0x40] sm:$0xff]
    %v545 = vld [vmem:[#allocation5 + $0x48] sm:$0xff]
    %v546 = vld [vmem:[#allocation5 + $0x50] sm:$0xff]
    %v547 = vld [vmem:[#allocation5 + $0x58] sm:$0xff]
    %v548 = vld [vmem:[#allocation5 + $0x60] sm:$0xff]
    %v549 = vld [vmem:[#allocation5 + $0x68] sm:$0xff]
    %v550 = vld [vmem:[#allocation5 + $0x70] sm:$0xff]
    %v551 = vld [vmem:[#allocation5 + $0x78] sm:$0xff]
    %v552 = vld [vmem:[#allocation5 + $0x80] sm:$0xff]
    %v553 = vld [vmem:[#allocation5 + $0x88] sm:$0xff]
    %v554 = vld [vmem:[#allocation5 + $0x90] sm:$0xff]
    %v555 = vld [vmem:[#allocation5 + $0x98] sm:$0xff]
    %v556 = vld [vmem:[#allocation5 + $0xa0] sm:$0xff]
    %v557 = vld [vmem:[#allocation5 + $0xa8] sm:$0xff]
    %v558 = vld [vmem:[#allocation5 + $0xb0] sm:$0xff]
    %v559 = vld [vmem:[#allocation5 + $0xb8] sm:$0xff]
    %v560 = vld [vmem:[#allocation5 + $0xc0] sm:$0xff]
    %v561 = vld [vmem:[#allocation5 + $0xc8] sm:$0xff]
    %v562 = vld [vmem:[#allocation5 + $0xd0] sm:$0xff]
    %v563 = vld [vmem:[#allocation5 + $0xd8] sm:$0xff]
    %v564 = vld [vmem:[#allocation5 + $0xe0] sm:$0xff]
    %v565 = vld [vmem:[#allocation5 + $0xe8] sm:$0xff]
    %v566 = vld [vmem:[#allocation5 + $0xf0] sm:$0xff]
    %v567 = vld [vmem:[#allocation5 + $0xf8] sm:$0xff]
    %v568 = vld [vmem:[#allocation5 + $0x100] sm:$0xff]
    %v569 = vld [vmem:[#allocation5 + $0x108] sm:$0xff]
    %v570 = vld [vmem:[#allocation5 + $0x110] sm:$0xff]
    %v571 = vld [vmem:[#allocation5 + $0x118] sm:$0xff]
    %v572 = vld [vmem:[#allocation5 + $0x120] sm:$0xff]
    %v573 = vld [vmem:[#allocation5 + $0x128] sm:$0xff]
    %v574 = vld [vmem:[#allocation5 + $0x130] sm:$0xff]
    %v575 = vld [vmem:[#allocation5 + $0x138] sm:$0xff]
    %v576 = vld [vmem:[#allocation5 + $0x140] sm:$0xff]
    %v577 = vld [vmem:[#allocation5 + $0x148] sm:$0xff]
    %v578 = vld [vmem:[#allocation5 + $0x150] sm:$0xff]
    %v579 = vld [vmem:[#allocation5 + $0x158] sm:$0xff]
    %v580 = vld [vmem:[#allocation5 + $0x160] sm:$0xff]
    %v581 = vld [vmem:[#allocation5 + $0x168] sm:$0xff]
    %v582 = vld [vmem:[#allocation5 + $0x170] sm:$0xff]
    %v583 = vld [vmem:[#allocation5 + $0x178] sm:$0xff]
    %v584 = vld [vmem:[#allocation5 + $0x180] sm:$0xff]
    %v585 = vld [vmem:[#allocation5 + $0x188] sm:$0xff]
    %v586 = vld [vmem:[#allocation5 + $0x190] sm:$0xff]
    %v587 = vld [vmem:[#allocation5 + $0x198] sm:$0xff]
    %v588 = vld [vmem:[#allocation5 + $0x1a0] sm:$0xff]
    %v589 = vld [vmem:[#allocation5 + $0x1a8] sm:$0xff]
    %v590 = vld [vmem:[#allocation5 + $0x1b0] sm:$0xff]
    %v591 = vld [vmem:[#allocation5 + $0x1b8] sm:$0xff]
    %v592 = vld [vmem:[#allocation5 + $0x1c0] sm:$0xff]
    %v593 = vld [vmem:[#allocation5 + $0x1c8] sm:$0xff]
    %v594 = vld [vmem:[#allocation5 + $0x1d0] sm:$0xff]
    %v595 = vld [vmem:[#allocation5 + $0x1d8] sm:$0xff]
    %v596 = vld [vmem:[#allocation5 + $0x1e0] sm:$0xff]
    %v597 = vld [vmem:[#allocation5 + $0x1e8] sm:$0xff]
    %v598 = vld [vmem:[#allocation5 + $0x1f0] sm:$0xff]
    %v599 = vld [vmem:[#allocation5 + $0x1f8] sm:$0xff]
    %v664 = vunpack.c.l.b16 %v536
    %v665 = vunpack.c.h.b16 %v536
    %v666 = vunpack.c.l.b16 %v537
    %v667 = vunpack.c.h.b16 %v537
    %v668 = vunpack.c.l.b16 %v538
    %v669 = vunpack.c.h.b16 %v538
    %v670 = vunpack.c.l.b16 %v539
    %v671 = vunpack.c.h.b16 %v539
    %v672 = vunpack.c.l.b16 %v540
    %v673 = vunpack.c.h.b16 %v540
    %v674 = vunpack.c.l.b16 %v541
    %v675 = vunpack.c.h.b16 %v541
    %v676 = vunpack.c.l.b16 %v542
    %v677 = vunpack.c.h.b16 %v542
    %v678 = vunpack.c.l.b16 %v543
    %v679 = vunpack.c.h.b16 %v543
    %v680 = vunpack.c.l.b16 %v544
    %v681 = vunpack.c.h.b16 %v544
    %v682 = vunpack.c.l.b16 %v545
    %v683 = vunpack.c.h.b16 %v545
    %v684 = vunpack.c.l.b16 %v546
    %v685 = vunpack.c.h.b16 %v546
    %v686 = vunpack.c.l.b16 %v547
    %v687 = vunpack.c.h.b16 %v547
    %v688 = vunpack.c.l.b16 %v548
    %v689 = vunpack.c.h.b16 %v548
    %v690 = vunpack.c.l.b16 %v549
    %v691 = vunpack.c.h.b16 %v549
    %v692 = vunpack.c.l.b16 %v550
    %v693 = vunpack.c.h.b16 %v550
    %v694 = vunpack.c.l.b16 %v551
    %v695 = vunpack.c.h.b16 %v551
    %v696 = vunpack.c.l.b16 %v552
    %v697 = vunpack.c.h.b16 %v552
    %v698 = vunpack.c.l.b16 %v553
    %v699 = vunpack.c.h.b16 %v553
    %v700 = vunpack.c.l.b16 %v554
    %v701 = vunpack.c.h.b16 %v554
    %v702 = vunpack.c.l.b16 %v555
    %v703 = vunpack.c.h.b16 %v555
    %v704 = vunpack.c.l.b16 %v556
    %v705 = vunpack.c.h.b16 %v556
    %v706 = vunpack.c.l.b16 %v557
    %v707 = vunpack.c.h.b16 %v557
    %v708 = vunpack.c.l.b16 %v558
    %v709 = vunpack.c.h.b16 %v558
    %v710 = vunpack.c.l.b16 %v559
    %v711 = vunpack.c.h.b16 %v559
    %v712 = vunpack.c.l.b16 %v560
    %v713 = vunpack.c.h.b16 %v560
    %v714 = vunpack.c.l.b16 %v561
    %v715 = vunpack.c.h.b16 %v561
    %v716 = vunpack.c.l.b16 %v562
    %v717 = vunpack.c.h.b16 %v562
    %v718 = vunpack.c.l.b16 %v563
    %v719 = vunpack.c.h.b16 %v563
    %v720 = vunpack.c.l.b16 %v564
    %v721 = vunpack.c.h.b16 %v564
    %v722 = vunpack.c.l.b16 %v565
    %v723 = vunpack.c.h.b16 %v565
    %v724 = vunpack.c.l.b16 %v566
    %v725 = vunpack.c.h.b16 %v566
    %v726 = vunpack.c.l.b16 %v567
    %v727 = vunpack.c.h.b16 %v567
    %v728 = vunpack.c.l.b16 %v568
    %v729 = vunpack.c.h.b16 %v568
    %v730 = vunpack.c.l.b16 %v569
    %v731 = vunpack.c.h.b16 %v569
    %v732 = vunpack.c.l.b16 %v570
    %v733 = vunpack.c.h.b16 %v570
    %v734 = vunpack.c.l.b16 %v571
    %v735 = vunpack.c.h.b16 %v571
    %v736 = vunpack.c.l.b16 %v572
    %v737 = vunpack.c.h.b16 %v572
    %v738 = vunpack.c.l.b16 %v573
    %v739 = vunpack.c.h.b16 %v573
    %v740 = vunpack.c.l.b16 %v574
    %v741 = vunpack.c.h.b16 %v574
    %v742 = vunpack.c.l.b16 %v575
    %v743 = vunpack.c.h.b16 %v575
    %v744 = vunpack.c.l.b16 %v576
    %v745 = vunpack.c.h.b16 %v576
    %v746 = vunpack.c.l.b16 %v577
    %v747 = vunpack.c.h.b16 %v577
    %v748 = vunpack.c.l.b16 %v578
    %v749 = vunpack.c.h.b16 %v578
    %v750 = vunpack.c.l.b16 %v579
    %v751 = vunpack.c.h.b16 %v579
    %v752 = vunpack.c.l.b16 %v580
    %v753 = vunpack.c.h.b16 %v580
    %v754 = vunpack.c.l.b16 %v581
    %v755 = vunpack.c.h.b16 %v581
    %v756 = vunpack.c.l.b16 %v582
    %v757 = vunpack.c.h.b16 %v582
    %v758 = vunpack.c.l.b16 %v583
    %v759 = vunpack.c.h.b16 %v583
    %v760 = vunpack.c.l.b16 %v584
    %v761 = vunpack.c.h.b16 %v584
    %v762 = vunpack.c.l.b16 %v585
    %v763 = vunpack.c.h.b16 %v585
    %v764 = vunpack.c.l.b16 %v586
    %v765 = vunpack.c.h.b16 %v586
    %v766 = vunpack.c.l.b16 %v587
    %v767 = vunpack.c.h.b16 %v587
    %v768 = vunpack.c.l.b16 %v588
    %v769 = vunpack.c.h.b16 %v588
    %v770 = vunpack.c.l.b16 %v589
    %v771 = vunpack.c.h.b16 %v589
    %v772 = vunpack.c.l.b16 %v590
    %v773 = vunpack.c.h.b16 %v590
    %v774 = vunpack.c.l.b16 %v591
    %v775 = vunpack.c.h.b16 %v591
    %v776 = vunpack.c.l.b16 %v592
    %v777 = vunpack.c.h.b16 %v592
    %v778 = vunpack.c.l.b16 %v593
    %v779 = vunpack.c.h.b16 %v593
    %v780 = vunpack.c.l.b16 %v594
    %v781 = vunpack.c.h.b16 %v594
    %v782 = vunpack.c.l.b16 %v595
    %v783 = vunpack.c.h.b16 %v595
    %v784 = vunpack.c.l.b16 %v596
    %v785 = vunpack.c.h.b16 %v596
    %v786 = vunpack.c.l.b16 %v597
    %v787 = vunpack.c.h.b16 %v597
    %v788 = vunpack.c.l.b16 %v598
    %v789 = vunpack.c.h.b16 %v598
    %v790 = vunpack.c.l.b16 %v599
    %v791 = vunpack.c.h.b16 %v599
    %v792 = vpack.c.b16 %v668, %v664
    %v793 = vpack.c.b16 %v669, %v665
    %v794 = vpack.c.b16 %v670, %v666
    %v795 = vpack.c.b16 %v671, %v667
    %v796 = vpack.c.b16 %v676, %v672
    %v797 = vpack.c.b16 %v677, %v673
    %v798 = vpack.c.b16 %v678, %v674
    %v799 = vpack.c.b16 %v679, %v675
    %v800 = vpack.c.b16 %v684, %v680
    %v801 = vpack.c.b16 %v685, %v681
    %v802 = vpack.c.b16 %v686, %v682
    %v803 = vpack.c.b16 %v687, %v683
    %v804 = vpack.c.b16 %v692, %v688
    %v805 = vpack.c.b16 %v693, %v689
    %v806 = vpack.c.b16 %v694, %v690
    %v807 = vpack.c.b16 %v695, %v691
    %v808 = vpack.c.b16 %v700, %v696
    %v809 = vpack.c.b16 %v701, %v697
    %v810 = vpack.c.b16 %v702, %v698
    %v811 = vpack.c.b16 %v703, %v699
    %v812 = vpack.c.b16 %v708, %v704
    %v813 = vpack.c.b16 %v709, %v705
    %v814 = vpack.c.b16 %v710, %v706
    %v815 = vpack.c.b16 %v711, %v707
    %v816 = vpack.c.b16 %v716, %v712
    %v817 = vpack.c.b16 %v717, %v713
    %v818 = vpack.c.b16 %v718, %v714
    %v819 = vpack.c.b16 %v719, %v715
    %v820 = vpack.c.b16 %v724, %v720
    %v821 = vpack.c.b16 %v725, %v721
    %v822 = vpack.c.b16 %v726, %v722
    %v823 = vpack.c.b16 %v727, %v723
    %v824 = vpack.c.b16 %v732, %v728
    %v825 = vpack.c.b16 %v733, %v729
    %v826 = vpack.c.b16 %v734, %v730
    %v827 = vpack.c.b16 %v735, %v731
    %v828 = vpack.c.b16 %v740, %v736
    %v829 = vpack.c.b16 %v741, %v737
    %v830 = vpack.c.b16 %v742, %v738
    %v831 = vpack.c.b16 %v743, %v739
    %v832 = vpack.c.b16 %v748, %v744
    %v833 = vpack.c.b16 %v749, %v745
    %v834 = vpack.c.b16 %v750, %v746
    %v835 = vpack.c.b16 %v751, %v747
    %v836 = vpack.c.b16 %v756, %v752
    %v837 = vpack.c.b16 %v757, %v753
    %v838 = vpack.c.b16 %v758, %v754
    %v839 = vpack.c.b16 %v759, %v755
    %v840 = vpack.c.b16 %v764, %v760
    %v841 = vpack.c.b16 %v765, %v761
    %v842 = vpack.c.b16 %v766, %v762
    %v843 = vpack.c.b16 %v767, %v763
    %v844 = vpack.c.b16 %v772, %v768
    %v845 = vpack.c.b16 %v773, %v769
    %v846 = vpack.c.b16 %v774, %v770
    %v847 = vpack.c.b16 %v775, %v771
    %v848 = vpack.c.b16 %v780, %v776
    %v849 = vpack.c.b16 %v781, %v777
    %v850 = vpack.c.b16 %v782, %v778
    %v851 = vpack.c.b16 %v783, %v779
    %v852 = vpack.c.b16 %v788, %v784
    %v853 = vpack.c.b16 %v789, %v785
    %v854 = vpack.c.b16 %v790, %v786
    %v855 = vpack.c.b16 %v791, %v787
    %920 = vmatprep.subr.bf16.mxu0 %v793
    %921 = vmatpush1.bf16.msra.mxu0 %v792
    %922 = vmatprep.subr.bf16.mxu0 %v797
    %923 = vmatpush1.bf16.msra.mxu0 %v796
    %924 = vmatprep.subr.bf16.mxu0 %v801
    %925 = vmatpush1.bf16.msra.mxu0 %v800
    %926 = vmatprep.subr.bf16.mxu0 %v805
    %927 = vmatpush1.bf16.msra.mxu0 %v804
    %928 = vmatprep.subr.bf16.mxu0 %v809
    %929 = vmatpush1.bf16.msra.mxu0 %v808
    %930 = vmatprep.subr.bf16.mxu0 %v813
    %931 = vmatpush1.bf16.msra.mxu0 %v812
    %932 = vmatprep.subr.bf16.mxu0 %v817
    %933 = vmatpush1.bf16.msra.mxu0 %v816
    %934 = vmatprep.subr.bf16.mxu0 %v821
    %935 = vmatpush1.bf16.msra.mxu0 %v820
    %936 = vmatprep.subr.bf16.mxu0 %v825
    %937 = vmatpush1.bf16.msra.mxu0 %v824
    %938 = vmatprep.subr.bf16.mxu0 %v829
    %939 = vmatpush1.bf16.msra.mxu0 %v828
    %940 = vmatprep.subr.bf16.mxu0 %v833
    %941 = vmatpush1.bf16.msra.mxu0 %v832
    %942 = vmatprep.subr.bf16.mxu0 %v837
    %943 = vmatpush1.bf16.msra.mxu0 %v836
    %944 = vmatprep.subr.bf16.mxu0 %v841
    %945 = vmatpush1.bf16.msra.mxu0 %v840
    %946 = vmatprep.subr.bf16.mxu0 %v845
    %947 = vmatpush1.bf16.msra.mxu0 %v844
    %948 = vmatprep.subr.bf16.mxu0 %v849
    %949 = vmatpush1.bf16.msra.mxu0 %v848
    %950 = vmatprep.subr.bf16.mxu0 %v853
    %951 = vmatpush1.bf16.msra.mxu0 %v852
    %952 = vmatprep.mubr.bf16.mxu0 %v535
    %953 = vmatmul.mubr.bf16.gmra.mrb[0].mxu0 %v534
    %v954 = vpop.f32.mrb[0].mxu0
    %v955 = vadd.f32 %v221, %v954
    %v956 = vpop.f32.mrb[0].mxu0
    %v957 = vadd.f32 %v225, %v956
    %v958 = vpop.f32.mrb[0].mxu0
    %v959 = vpop.f32.mrb[0].mxu0
    %960 = vdwg.mxu0
    %961 = vmatprep.subr.bf16.mxu0 %v795
    %962 = vmatpush1.bf16.msra.mxu0 %v794
    %963 = vmatprep.subr.bf16.mxu0 %v799
    %964 = vmatpush1.bf16.msra.mxu0 %v798
    %965 = vmatprep.subr.bf16.mxu0 %v803
    %966 = vmatpush1.bf16.msra.mxu0 %v802
    %967 = vmatprep.subr.bf16.mxu0 %v807
    %968 = vmatpush1.bf16.msra.mxu0 %v806
    %969 = vmatprep.subr.bf16.mxu0 %v811
    %970 = vmatpush1.bf16.msra.mxu0 %v810
    %971 = vmatprep.subr.bf16.mxu0 %v815
    %972 = vmatpush1.bf16.msra.mxu0 %v814
    %973 = vmatprep.subr.bf16.mxu0 %v819
    %974 = vmatpush1.bf16.msra.mxu0 %v818
    %975 = vmatprep.subr.bf16.mxu0 %v823
    %976 = vmatpush1.bf16.msra.mxu0 %v822
    %977 = vmatprep.subr.bf16.mxu0 %v827
    %978 = vmatpush1.bf16.msra.mxu0 %v826
    %979 = vmatprep.subr.bf16.mxu0 %v831
    %980 = vmatpush1.bf16.msra.mxu0 %v830
    %981 = vmatprep.subr.bf16.mxu0 %v835
    %982 = vmatpush1.bf16.msra.mxu0 %v834
    %983 = vmatprep.subr.bf16.mxu0 %v839
    %984 = vmatpush1.bf16.msra.mxu0 %v838
    %985 = vmatprep.subr.bf16.mxu0 %v843
    %986 = vmatpush1.bf16.msra.mxu0 %v842
    %987 = vmatprep.subr.bf16.mxu0 %v847
    %988 = vmatpush1.bf16.msra.mxu0 %v846
    %989 = vmatprep.subr.bf16.mxu0 %v851
    %990 = vmatpush1.bf16.msra.mxu0 %v850
    %991 = vmatprep.subr.bf16.mxu0 %v855
    %992 = vmatpush1.bf16.msra.mxu0 %v854
    %993 = vmatprep.mubr.bf16.mxu0 %v535
    %994 = vmatmul.mubr.bf16.gmra.mrb[0].mxu0 %v534
    %v995 = vpop.f32.mrb[0].mxu0
    %v996 = vadd.f32 %v229, %v995
    %v997 = vpop.f32.mrb[0].mxu0
    %v998 = vadd.f32 %v233, %v997
    %v999 = vpop.f32.mrb[0].mxu0
    %v1000 = vpop.f32.mrb[0].mxu0
    %1001 = vdwg.mxu0
    %v1002 = vmul.f32 %v955, 0.5
    %v1003 = vtanh.pop %v1002
    %v1004 = vmul.f32 %v1003, 0.5
    %v1005 = vadd.f32 %v1004, 0.5
    %v1006 = vmul.f32 %v957, 0.5
    %v1007 = vtanh.pop %v1006
    %v1008 = vmul.f32 %v1007, 0.5
    %v1009 = vadd.f32 %v1008, 0.5
    %v1010 = vtanh.pop %v996
    %v1011 = vmul.f32 %v998, 0.5
    %v1012 = vtanh.pop %v1011
    %v1013 = vmul.f32 %v1012, 0.5
    %v1014 = vadd.f32 %v1013, 0.5
    %v1015 = vmul.f32 %v1009, 0.0
    %v1016 = vmul.f32 %v1005, %v1010
    %v1017 = vadd.f32 %v1015, %v1016
    %v1018 = vtanh.pop %v1017
    %v1019 = vmul.f32 %v1014, %v1018
    %1020 = vmatprep.subr.bf16.mxu0 %v367
    %1021 = vmatpush1.bf16.msra.mxu0 %v366
    %1022 = vmatprep.subr.bf16.mxu0 %v371
    %1023 = vmatpush1.bf16.msra.mxu0 %v370
    %1024 = vmatprep.subr.bf16.mxu0 %v375
    %1025 = vmatpush1.bf16.msra.mxu0 %v374
    %1026 = vmatprep.subr.bf16.mxu0 %v379
    %1027 = vmatpush1.bf16.msra.mxu0 %v378
    %1028 = vmatprep.subr.bf16.mxu0 %v383
    %1029 = vmatpush1.bf16.msra.mxu0 %v382
    %1030 = vmatprep.subr.bf16.mxu0 %v387
    %1031 = vmatpush1.bf16.msra.mxu0 %v386
    %1032 = vmatprep.subr.bf16.mxu0 %v391
    %1033 = vmatpush1.bf16.msra.mxu0 %v390
    %1034 = vmatprep.subr.bf16.mxu0 %v395
    %1035 = vmatpush1.bf16.msra.mxu0 %v394
    %1036 = vmatprep.subr.bf16.mxu0 0
    %1037 = vmatpush1.bf16.msra.mxu0 0
    %1038 = vmatprep.subr.bf16.mxu0 0
    %1039 = vmatpush1.bf16.msra.mxu0 0
    %1040 = vmatprep.subr.bf16.mxu0 0
    %1041 = vmatpush1.bf16.msra.mxu0 0
    %1042 = vmatprep.subr.bf16.mxu0 0
    %1043 = vmatpush1.bf16.msra.mxu0 0
    %1044 = vmatprep.subr.bf16.mxu0 0
    %1045 = vmatpush1.bf16.msra.mxu0 0
    %1046 = vmatprep.subr.bf16.mxu0 0
    %1047 = vmatpush1.bf16.msra.mxu0 0
    %1048 = vmatprep.subr.bf16.mxu0 0
    %1049 = vmatpush1.bf16.msra.mxu0 0
    %1050 = vmatprep.subr.bf16.mxu0 0
    %1051 = vmatpush1.bf16.msra.mxu0 0
    %1052 = vmatprep.mubr.bf16.mxu0 0
    %1053 = vmatmul.mubr.bf16.gmra.mrb[0].mxu0 %v534
    %v1054 = vpop.f32.mrb[0].mxu0
    %v1055 = vadd.f32 0.0, %v1054
    %v1056 = vpop.f32.mrb[0].mxu0
    %v1057 = vadd.f32 0.0, %v1056
    %v1058 = vpop.f32.mrb[0].mxu0
    %v1059 = vpop.f32.mrb[0].mxu0
    %1060 = vdwg.mxu0
    %1061 = vmatprep.subr.bf16.mxu0 %v369
    %1062 = vmatpush1.bf16.msra.mxu0 %v368
    %1063 = vmatprep.subr.bf16.mxu0 %v373
    %1064 = vmatpush1.bf16.msra.mxu0 %v372
    %1065 = vmatprep.subr.bf16.mxu0 %v377
    %1066 = vmatpush1.bf16.msra.mxu0 %v376
    %1067 = vmatprep.subr.bf16.mxu0 %v381
    %1068 = vmatpush1.bf16.msra.mxu0 %v380
    %1069 = vmatprep.subr.bf16.mxu0 %v385
    %1070 = vmatpush1.bf16.msra.mxu0 %v384
    %1071 = vmatprep.subr.bf16.mxu0 %v389
    %1072 = vmatpush1.bf16.msra.mxu0 %v388
    %1073 = vmatprep.subr.bf16.mxu0 %v393
    %1074 = vmatpush1.bf16.msra.mxu0 %v392
    %1075 = vmatprep.subr.bf16.mxu0 %v397
    %1076 = vmatpush1.bf16.msra.mxu0 %v396
    %1077 = vmatprep.subr.bf16.mxu0 0
    %1078 = vmatpush1.bf16.msra.mxu0 0
    %1079 = vmatprep.subr.bf16.mxu0 0
    %1080 = vmatpush1.bf16.msra.mxu0 0
    %1081 = vmatprep.subr.bf16.mxu0 0
    %1082 = vmatpush1.bf16.msra.mxu0 0
    %1083 = vmatprep.subr.bf16.mxu0 0
    %1084 = vmatpush1.bf16.msra.mxu0 0
    %1085 = vmatprep.subr.bf16.mxu0 0
    %1086 = vmatpush1.bf16.msra.mxu0 0
    %1087 = vmatprep.subr.bf16.mxu0 0
    %1088 = vmatpush1.bf16.msra.mxu0 0
    %1089 = vmatprep.subr.bf16.mxu0 0
    %1090 = vmatpush1.bf16.msra.mxu0 0
    %1091 = vmatprep.subr.bf16.mxu0 0
    %1092 = vmatpush1.bf16.msra.mxu0 0
    %1093 = vmatprep.mubr.bf16.mxu0 0
    %1094 = vmatmul.mubr.bf16.gmra.mrb[0].mxu0 %v534
    %v1095 = vpop.f32.mrb[0].mxu0
    %v1096 = vadd.f32 0.0, %v1095
    %v1097 = vpop.f32.mrb[0].mxu0
    %v1098 = vadd.f32 0.0, %v1097
    %v1099 = vpop.f32.mrb[0].mxu0
    %v1100 = vpop.f32.mrb[0].mxu0
    %1101 = vdwg.mxu0
    %v1102 = vadd.f32 %v188, %v1055
    %v1103 = vadd.f32 %v189, %v1057
    %v1104 = vadd.f32 %v190, %v1096
    %v1105 = vadd.f32 %v191, %v1098
    %v1106 = vmul.f32 %v1102, 0.5
    %v1107 = vtanh.pop %v1106
    %v1108 = vmul.f32 %v1107, 0.5
    %v1109 = vadd.f32 %v1108, 0.5
    %v1110 = vmul.f32 %v1103, 0.5
    %v1111 = vtanh.pop %v1110
    %v1112 = vmul.f32 %v1111, 0.5
    %v1113 = vadd.f32 %v1112, 0.5
    %v1114 = vtanh.pop %v1104
    %v1115 = vmul.f32 %v1105, 0.5
    %v1116 = vtanh.pop %v1115
    %v1117 = vmul.f32 %v1116, 0.5
    %v1118 = vadd.f32 %v1117, 0.5
    %v1119 = vmul.f32 %v1113, %v531
    %v1120 = vmul.f32 %v1109, %v1114
    %v1121 = vadd.f32 %v1119, %v1120
    %v1122 = vtanh.pop %v1121
    %v1123 = vmul.f32 %v1118, %v1122
    %v1124 = vpack.c.bf16 %v1123, %v1123
    %v1125 = vpack.c.bf16 %v1019, %v1019
    %1126 = vmatprep.subr.bf16.mxu0 %v793
    %1127 = vmatpush1.bf16.msra.mxu0 %v792
    %1128 = vmatprep.subr.bf16.mxu0 %v797
    %1129 = vmatpush1.bf16.msra.mxu0 %v796
    %1130 = vmatprep.subr.bf16.mxu0 %v801
    %1131 = vmatpush1.bf16.msra.mxu0 %v800
    %1132 = vmatprep.subr.bf16.mxu0 %v805
    %1133 = vmatpush1.bf16.msra.mxu0 %v804
    %1134 = vmatprep.subr.bf16.mxu0 %v809
    %1135 = vmatpush1.bf16.msra.mxu0 %v808
    %1136 = vmatprep.subr.bf16.mxu0 %v813
    %1137 = vmatpush1.bf16.msra.mxu0 %v812
    %1138 = vmatprep.subr.bf16.mxu0 %v817
    %1139 = vmatpush1.bf16.msra.mxu0 %v816
    %1140 = vmatprep.subr.bf16.mxu0 %v821
    %1141 = vmatpush1.bf16.msra.mxu0 %v820
    %1142 = vmatprep.subr.bf16.mxu0 %v825
    %1143 = vmatpush1.bf16.msra.mxu0 %v824
    %1144 = vmatprep.subr.bf16.mxu0 %v829
    %1145 = vmatpush1.bf16.msra.mxu0 %v828
    %1146 = vmatprep.subr.bf16.mxu0 %v833
    %1147 = vmatpush1.bf16.msra.mxu0 %v832
    %1148 = vmatprep.subr.bf16.mxu0 %v837
    %1149 = vmatpush1.bf16.msra.mxu0 %v836
    %1150 = vmatprep.subr.bf16.mxu0 %v841
    %1151 = vmatpush1.bf16.msra.mxu0 %v840
    %1152 = vmatprep.subr.bf16.mxu0 %v845
    %1153 = vmatpush1.bf16.msra.mxu0 %v844
    %1154 = vmatprep.subr.bf16.mxu0 %v849
    %1155 = vmatpush1.bf16.msra.mxu0 %v848
    %1156 = vmatprep.subr.bf16.mxu0 %v853
    %1157 = vmatpush1.bf16.msra.mxu0 %v852
    %1158 = vmatprep.mubr.bf16.mxu0 %v1125
    %1159 = vmatmul.mubr.bf16.gmra.mrb[0].mxu0 %v1124
    %v1160 = vpop.f32.mrb[0].mxu0
    %v1161 = vadd.f32 %v221, %v1160
    %v1162 = vpop.f32.mrb[0].mxu0
    %v1163 = vadd.f32 %v225, %v1162
    %v1164 = vpop.f32.mrb[0].mxu0
    %v1165 = vpop.f32.mrb[0].mxu0
    %1166 = vdwg.mxu0
    %1167 = vmatprep.subr.bf16.mxu0 %v795
    %1168 = vmatpush1.bf16.msra.mxu0 %v794
    %1169 = vmatprep.subr.bf16.mxu0 %v799
    %1170 = vmatpush1.bf16.msra.mxu0 %v798
    %1171 = vmatprep.subr.bf16.mxu0 %v803
    %1172 = vmatpush1.bf16.msra.mxu0 %v802
    %1173 = vmatprep.subr.bf16.mxu0 %v807
    %1174 = vmatpush1.bf16.msra.mxu0 %v806
    %1175 = vmatprep.subr.bf16.mxu0 %v811
    %1176 = vmatpush1.bf16.msra.mxu0 %v810
    %1177 = vmatprep.subr.bf16.mxu0 %v815
    %1178 = vmatpush1.bf16.msra.mxu0 %v814
    %1179 = vmatprep.subr.bf16.mxu0 %v819
    %1180 = vmatpush1.bf16.msra.mxu0 %v818
    %1181 = vmatprep.subr.bf16.mxu0 %v823
    %1182 = vmatpush1.bf16.msra.mxu0 %v822
    %1183 = vmatprep.subr.bf16.mxu0 %v827
    %1184 = vmatpush1.bf16.msra.mxu0 %v826
    %1185 = vmatprep.subr.bf16.mxu0 %v831
    %1186 = vmatpush1.bf16.msra.mxu0 %v830
    %1187 = vmatprep.subr.bf16.mxu0 %v835
    %1188 = vmatpush1.bf16.msra.mxu0 %v834
    %1189 = vmatprep.subr.bf16.mxu0 %v839
    %1190 = vmatpush1.bf16.msra.mxu0 %v838
    %1191 = vmatprep.subr.bf16.mxu0 %v843
    %1192 = vmatpush1.bf16.msra.mxu0 %v842
    %1193 = vmatprep.subr.bf16.mxu0 %v847
    %1194 = vmatpush1.bf16.msra.mxu0 %v846
    %1195 = vmatprep.subr.bf16.mxu0 %v851
    %1196 = vmatpush1.bf16.msra.mxu0 %v850
    %1197 = vmatprep.subr.bf16.mxu0 %v855
    %1198 = vmatpush1.bf16.msra.mxu0 %v854
    %1199 = vmatprep.mubr.bf16.mxu0 %v1125
    %1200 = vmatmul.mubr.bf16.gmra.mrb[0].mxu0 %v1124
    %v1201 = vpop.f32.mrb[0].mxu0
    %v1202 = vadd.f32 %v229, %v1201
    %v1203 = vpop.f32.mrb[0].mxu0
    %v1204 = vadd.f32 %v233, %v1203
    %v1205 = vpop.f32.mrb[0].mxu0
    %v1206 = vpop.f32.mrb[0].mxu0
    %1207 = vdwg.mxu0
    %v1208 = vmul.f32 %v1161, 0.5
    %v1209 = vtanh.pop %v1208
    %v1210 = vmul.f32 %v1209, 0.5
    %v1211 = vadd.f32 %v1210, 0.5
    %v1212 = vmul.f32 %v1163, 0.5
    %v1213 = vtanh.pop %v1212
    %v1214 = vmul.f32 %v1213, 0.5
    %v1215 = vadd.f32 %v1214, 0.5
    %v1216 = vtanh.pop %v1202
    %v1217 = vmul.f32 %v1204, 0.5
    %v1218 = vtanh.pop %v1217
    %v1219 = vmul.f32 %v1218, 0.5
    %v1220 = vadd.f32 %v1219, 0.5
    %v1221 = vmul.f32 %v1215, %v1017
    %v1222 = vmul.f32 %v1211, %v1216
    %v1223 = vadd.f32 %v1221, %v1222
    %v1224 = vtanh.pop %v1223
    %v1225 = vmul.f32 %v1220, %v1224
    %1226 = vmatprep.subr.bf16.mxu0 %v367
    %1227 = vmatpush1.bf16.msra.mxu0 %v366
    %1228 = vmatprep.subr.bf16.mxu0 %v371
    %1229 = vmatpush1.bf16.msra.mxu0 %v370
    %1230 = vmatprep.subr.bf16.mxu0 %v375
    %1231 = vmatpush1.bf16.msra.mxu0 %v374
    %1232 = vmatprep.subr.bf16.mxu0 %v379
    %1233 = vmatpush1.bf16.msra.mxu0 %v378
    %1234 = vmatprep.subr.bf16.mxu0 %v383
    %1235 = vmatpush1.bf16.msra.mxu0 %v382
    %1236 = vmatprep.subr.bf16.mxu0 %v387
    %1237 = vmatpush1.bf16.msra.mxu0 %v386
    %1238 = vmatprep.subr.bf16.mxu0 %v391
    %1239 = vmatpush1.bf16.msra.mxu0 %v390
    %1240 = vmatprep.subr.bf16.mxu0 %v395
    %1241 = vmatpush1.bf16.msra.mxu0 %v394
    %1242 = vmatprep.subr.bf16.mxu0 0
    %1243 = vmatpush1.bf16.msra.mxu0 0
    %1244 = vmatprep.subr.bf16.mxu0 0
    %1245 = vmatpush1.bf16.msra.mxu0 0
    %1246 = vmatprep.subr.bf16.mxu0 0
    %1247 = vmatpush1.bf16.msra.mxu0 0
    %1248 = vmatprep.subr.bf16.mxu0 0
    %1249 = vmatpush1.bf16.msra.mxu0 0
    %1250 = vmatprep.subr.bf16.mxu0 0
    %1251 = vmatpush1.bf16.msra.mxu0 0
    %1252 = vmatprep.subr.bf16.mxu0 0
    %1253 = vmatpush1.bf16.msra.mxu0 0
    %1254 = vmatprep.subr.bf16.mxu0 0
    %1255 = vmatpush1.bf16.msra.mxu0 0
    %1256 = vmatprep.subr.bf16.mxu0 0
    %1257 = vmatpush1.bf16.msra.mxu0 0
    %1258 = vmatprep.mubr.bf16.mxu0 0
    %1259 = vmatmul.mubr.bf16.gmra.mrb[0].mxu0 %v1124
    %v1260 = vpop.f32.mrb[0].mxu0
    %v1261 = vadd.f32 0.0, %v1260
    %v1262 = vpop.f32.mrb[0].mxu0
    %v1263 = vadd.f32 0.0, %v1262
    %v1264 = vpop.f32.mrb[0].mxu0
    %v1265 = vpop.f32.mrb[0].mxu0
    %1266 = vdwg.mxu0
    %1267 = vmatprep.subr.bf16.mxu0 %v369
    %1268 = vmatpush1.bf16.msra.mxu0 %v368
    %1269 = vmatprep.subr.bf16.mxu0 %v373
    %1270 = vmatpush1.bf16.msra.mxu0 %v372
    %1271 = vmatprep.subr.bf16.mxu0 %v377
    %1272 = vmatpush1.bf16.msra.mxu0 %v376
    %1273 = vmatprep.subr.bf16.mxu0 %v381
    %1274 = vmatpush1.bf16.msra.mxu0 %v380
    %1275 = vmatprep.subr.bf16.mxu0 %v385
    %1276 = vmatpush1.bf16.msra.mxu0 %v384
    %1277 = vmatprep.subr.bf16.mxu0 %v389
    %1278 = vmatpush1.bf16.msra.mxu0 %v388
    %1279 = vmatprep.subr.bf16.mxu0 %v393
    %1280 = vmatpush1.bf16.msra.mxu0 %v392
    %1281 = vmatprep.subr.bf16.mxu0 %v397
    %1282 = vmatpush1.bf16.msra.mxu0 %v396
    %1283 = vmatprep.subr.bf16.mxu0 0
    %1284 = vmatpush1.bf16.msra.mxu0 0
    %1285 = vmatprep.subr.bf16.mxu0 0
    %1286 = vmatpush1.bf16.msra.mxu0 0
    %1287 = vmatprep.subr.bf16.mxu0 0
    %1288 = vmatpush1.bf16.msra.mxu0 0
    %1289 = vmatprep.subr.bf16.mxu0 0
    %1290 = vmatpush1.bf16.msra.mxu0 0
    %1291 = vmatprep.subr.bf16.mxu0 0
    %1292 = vmatpush1.bf16.msra.mxu0 0
    %1293 = vmatprep.subr.bf16.mxu0 0
    %1294 = vmatpush1.bf16.msra.mxu0 0
    %1295 = vmatprep.subr.bf16.mxu0 0
    %1296 = vmatpush1.bf16.msra.mxu0 0
    %1297 = vmatprep.subr.bf16.mxu0 0
    %1298 = vmatpush1.bf16.msra.mxu0 0
    %1299 = vmatprep.mubr.bf16.mxu0 0
    %1300 = vmatmul.mubr.bf16.gmra.mrb[0].mxu0 %v1124
    %v1301 = vpop.f32.mrb[0].mxu0
    %v1302 = vadd.f32 0.0, %v1301
    %v1303 = vpop.f32.mrb[0].mxu0
    %v1304 = vadd.f32 0.0, %v1303
    %v1305 = vpop.f32.mrb[0].mxu0
    %v1306 = vpop.f32.mrb[0].mxu0
    %1307 = vdwg.mxu0
    %v1308 = vadd.f32 %v192, %v1261
    %v1309 = vadd.f32 %v193, %v1263
    %v1310 = vadd.f32 %v194, %v1302
    %v1311 = vadd.f32 %v195, %v1304
    %v1312 = vmul.f32 %v1308, 0.5
    %v1313 = vtanh.pop %v1312
    %v1314 = vmul.f32 %v1313, 0.5
    %v1315 = vadd.f32 %v1314, 0.5
    %v1316 = vmul.f32 %v1309, 0.5
    %v1317 = vtanh.pop %v1316
    %v1318 = vmul.f32 %v1317, 0.5
    %v1319 = vadd.f32 %v1318, 0.5
    %v1320 = vtanh.pop %v1310
    %v1321 = vmul.f32 %v1311, 0.5
    %v1322 = vtanh.pop %v1321
    %v1323 = vmul.f32 %v1322, 0.5
    %v1324 = vadd.f32 %v1323, 0.5
    %v1325 = vmul.f32 %v1319, %v1121
    %v1326 = vmul.f32 %v1315, %v1320
    %v1327 = vadd.f32 %v1325, %v1326
    %v1328 = vtanh.pop %v1327
    %v1329 = vmul.f32 %v1324, %v1328
    %v1330 = vpack.c.bf16 %v1329, %v1329
    %v1331 = vpack.c.bf16 %v1225, %v1225
    %1332 = vmatprep.subr.bf16.mxu0 %v793
    %1333 = vmatpush1.bf16.msra.mxu0 %v792
    %1334 = vmatprep.subr.bf16.mxu0 %v797
    %1335 = vmatpush1.bf16.msra.mxu0 %v796
    %1336 = vmatprep.subr.bf16.mxu0 %v801
    %1337 = vmatpush1.bf16.msra.mxu0 %v800
    %1338 = vmatprep.subr.bf16.mxu0 %v805
    %1339 = vmatpush1.bf16.msra.mxu0 %v804
    %1340 = vmatprep.subr.bf16.mxu0 %v809
    %1341 = vmatpush1.bf16.msra.mxu0 %v808
    %1342 = vmatprep.subr.bf16.mxu0 %v813
    %1343 = vmatpush1.bf16.msra.mxu0 %v812
    %1344 = vmatprep.subr.bf16.mxu0 %v817
    %1345 = vmatpush1.bf16.msra.mxu0 %v816
    %1346 = vmatprep.subr.bf16.mxu0 %v821
    %1347 = vmatpush1.bf16.msra.mxu0 %v820
    %1348 = vmatprep.subr.bf16.mxu0 %v825
    %1349 = vmatpush1.bf16.msra.mxu0 %v824
    %1350 = vmatprep.subr.bf16.mxu0 %v829
    %1351 = vmatpush1.bf16.msra.mxu0 %v828
    %1352 = vmatprep.subr.bf16.mxu0 %v833
    %1353 = vmatpush1.bf16.msra.mxu0 %v832
    %1354 = vmatprep.subr.bf16.mxu0 %v837
    %1355 = vmatpush1.bf16.msra.mxu0 %v836
    %1356 = vmatprep.subr.bf16.mxu0 %v841
    %1357 = vmatpush1.bf16.msra.mxu0 %v840
    %1358 = vmatprep.subr.bf16.mxu0 %v845
    %1359 = vmatpush1.bf16.msra.mxu0 %v844
    %1360 = vmatprep.subr.bf16.mxu0 %v849
    %1361 = vmatpush1.bf16.msra.mxu0 %v848
    %1362 = vmatprep.subr.bf16.mxu0 %v853
    %1363 = vmatpush1.bf16.msra.mxu0 %v852
    %1364 = vmatprep.mubr.bf16.mxu0 %v1331
    %1365 = vmatmul.mubr.bf16.gmra.mrb[0].mxu0 %v1330
    %v1366 = vpop.f32.mrb[0].mxu0
    %v1367 = vadd.f32 %v221, %v1366
    %v1368 = vpop.f32.mrb[0].mxu0
    %v1369 = vadd.f32 %v225, %v1368
    %v1370 = vpop.f32.mrb[0].mxu0
    %v1371 = vpop.f32.mrb[0].mxu0
    %1372 = vdwg.mxu0
    %1373 = vmatprep.subr.bf16.mxu0 %v795
    %1374 = vmatpush1.bf16.msra.mxu0 %v794
    %1375 = vmatprep.subr.bf16.mxu0 %v799
    %1376 = vmatpush1.bf16.msra.mxu0 %v798
    %1377 = vmatprep.subr.bf16.mxu0 %v803
    %1378 = vmatpush1.bf16.msra.mxu0 %v802
    %1379 = vmatprep.subr.bf16.mxu0 %v807
    %1380 = vmatpush1.bf16.msra.mxu0 %v806
    %1381 = vmatprep.subr.bf16.mxu0 %v811
    %1382 = vmatpush1.bf16.msra.mxu0 %v810
    %1383 = vmatprep.subr.bf16.mxu0 %v815
    %1384 = vmatpush1.bf16.msra.mxu0 %v814
    %1385 = vmatprep.subr.bf16.mxu0 %v819
    %1386 = vmatpush1.bf16.msra.mxu0 %v818
    %1387 = vmatprep.subr.bf16.mxu0 %v823
    %1388 = vmatpush1.bf16.msra.mxu0 %v822
    %1389 = vmatprep.subr.bf16.mxu0 %v827
    %1390 = vmatpush1.bf16.msra.mxu0 %v826
    %1391 = vmatprep.subr.bf16.mxu0 %v831
    %1392 = vmatpush1.bf16.msra.mxu0 %v830
    %1393 = vmatprep.subr.bf16.mxu0 %v835
    %1394 = vmatpush1.bf16.msra.mxu0 %v834
    %1395 = vmatprep.subr.bf16.mxu0 %v839
    %1396 = vmatpush1.bf16.msra.mxu0 %v838
    %1397 = vmatprep.subr.bf16.mxu0 %v843
    %1398 = vmatpush1.bf16.msra.mxu0 %v842
    %1399 = vmatprep.subr.bf16.mxu0 %v847
    %1400 = vmatpush1.bf16.msra.mxu0 %v846
    %1401 = vmatprep.subr.bf16.mxu0 %v851
    %1402 = vmatpush1.bf16.msra.mxu0 %v850
    %1403 = vmatprep.subr.bf16.mxu0 %v855
    %1404 = vmatpush1.bf16.msra.mxu0 %v854
    %1405 = vmatprep.mubr.bf16.mxu0 %v1331
    %1406 = vmatmul.mubr.bf16.gmra.mrb[0].mxu0 %v1330
    %v1407 = vpop.f32.mrb[0].mxu0
    %v1408 = vadd.f32 %v229, %v1407
    %v1409 = vpop.f32.mrb[0].mxu0
    %v1410 = vadd.f32 %v233, %v1409
    %v1411 = vpop.f32.mrb[0].mxu0
    %v1412 = vpop.f32.mrb[0].mxu0
    %1413 = vdwg.mxu0
    %v1414 = vmul.f32 %v1367, 0.5
    %v1415 = vtanh.pop %v1414
    %v1416 = vmul.f32 %v1415, 0.5
    %v1417 = vadd.f32 %v1416, 0.5
    %v1418 = vmul.f32 %v1369, 0.5
    %v1419 = vtanh.pop %v1418
    %v1420 = vmul.f32 %v1419, 0.5
    %v1421 = vadd.f32 %v1420, 0.5
    %v1422 = vtanh.pop %v1408
    %v1423 = vmul.f32 %v1410, 0.5
    %v1424 = vtanh.pop %v1423
    %v1425 = vmul.f32 %v1424, 0.5
    %v1426 = vadd.f32 %v1425, 0.5
    %v1427 = vmul.f32 %v1421, %v1223
    %v1428 = vmul.f32 %v1417, %v1422
    %v1429 = vadd.f32 %v1427, %v1428
    %v1430 = vtanh.pop %v1429
    %v1431 = vmul.f32 %v1426, %v1430
    %1432 = vmatprep.subr.bf16.mxu0 %v367
    %1433 = vmatpush1.bf16.msra.mxu0 %v366
    %1434 = vmatprep.subr.bf16.mxu0 %v371
    %1435 = vmatpush1.bf16.msra.mxu0 %v370
    %1436 = vmatprep.subr.bf16.mxu0 %v375
    %1437 = vmatpush1.bf16.msra.mxu0 %v374
    %1438 = vmatprep.subr.bf16.mxu0 %v379
    %1439 = vmatpush1.bf16.msra.mxu0 %v378
    %1440 = vmatprep.subr.bf16.mxu0 %v383
    %1441 = vmatpush1.bf16.msra.mxu0 %v382
    %1442 = vmatprep.subr.bf16.mxu0 %v387
    %1443 = vmatpush1.bf16.msra.mxu0 %v386
    %1444 = vmatprep.subr.bf16.mxu0 %v391
    %1445 = vmatpush1.bf16.msra.mxu0 %v390
    %1446 = vmatprep.subr.bf16.mxu0 %v395
    %1447 = vmatpush1.bf16.msra.mxu0 %v394
    %1448 = vmatprep.subr.bf16.mxu0 0
    %1449 = vmatpush1.bf16.msra.mxu0 0
    %1450 = vmatprep.subr.bf16.mxu0 0
    %1451 = vmatpush1.bf16.msra.mxu0 0
    %1452 = vmatprep.subr.bf16.mxu0 0
    %1453 = vmatpush1.bf16.msra.mxu0 0
    %1454 = vmatprep.subr.bf16.mxu0 0
    %1455 = vmatpush1.bf16.msra.mxu0 0
    %1456 = vmatprep.subr.bf16.mxu0 0
    %1457 = vmatpush1.bf16.msra.mxu0 0
    %1458 = vmatprep.subr.bf16.mxu0 0
    %1459 = vmatpush1.bf16.msra.mxu0 0
    %1460 = vmatprep.subr.bf16.mxu0 0
    %1461 = vmatpush1.bf16.msra.mxu0 0
    %1462 = vmatprep.subr.bf16.mxu0 0
    %1463 = vmatpush1.bf16.msra.mxu0 0
    %1464 = vmatprep.mubr.bf16.mxu0 0
    %1465 = vmatmul.mubr.bf16.gmra.mrb[0].mxu0 %v1330
    %v1466 = vpop.f32.mrb[0].mxu0
    %v1467 = vadd.f32 0.0, %v1466
    %v1468 = vpop.f32.mrb[0].mxu0
    %v1469 = vadd.f32 0.0, %v1468
    %v1470 = vpop.f32.mrb[0].mxu0
    %v1471 = vpop.f32.mrb[0].mxu0
    %1472 = vdwg.mxu0
    %1473 = vmatprep.subr.bf16.mxu0 %v369
    %1474 = vmatpush1.bf16.msra.mxu0 %v368
    %1475 = vmatprep.subr.bf16.mxu0 %v373
    %1476 = vmatpush1.bf16.msra.mxu0 %v372
    %1477 = vmatprep.subr.bf16.mxu0 %v377
    %1478 = vmatpush1.bf16.msra.mxu0 %v376
    %1479 = vmatprep.subr.bf16.mxu0 %v381
    %1480 = vmatpush1.bf16.msra.mxu0 %v380
    %1481 = vmatprep.subr.bf16.mxu0 %v385
    %1482 = vmatpush1.bf16.msra.mxu0 %v384
    %1483 = vmatprep.subr.bf16.mxu0 %v389
    %1484 = vmatpush1.bf16.msra.mxu0 %v388
    %1485 = vmatprep.subr.bf16.mxu0 %v393
    %1486 = vmatpush1.bf16.msra.mxu0 %v392
    %1487 = vmatprep.subr.bf16.mxu0 %v397
    %1488 = vmatpush1.bf16.msra.mxu0 %v396
    %1489 = vmatprep.subr.bf16.mxu0 0
    %1490 = vmatpush1.bf16.msra.mxu0 0
    %1491 = vmatprep.subr.bf16.mxu0 0
    %1492 = vmatpush1.bf16.msra.mxu0 0
    %1493 = vmatprep.subr.bf16.mxu0 0
    %1494 = vmatpush1.bf16.msra.mxu0 0
    %1495 = vmatprep.subr.bf16.mxu0 0
    %1496 = vmatpush1.bf16.msra.mxu0 0
    %1497 = vmatprep.subr.bf16.mxu0 0
    %1498 = vmatpush1.bf16.msra.mxu0 0
    %1499 = vmatprep.subr.bf16.mxu0 0
    %1500 = vmatpush1.bf16.msra.mxu0 0
    %1501 = vmatprep.subr.bf16.mxu0 0
    %1502 = vmatpush1.bf16.msra.mxu0 0
    %1503 = vmatprep.subr.bf16.mxu0 0
    %1504 = vmatpush1.bf16.msra.mxu0 0
    %1505 = vmatprep.mubr.bf16.mxu0 0
    %1506 = vmatmul.mubr.bf16.gmra.mrb[0].mxu0 %v1330
    %v1507 = vpop.f32.mrb[0].mxu0
    %v1508 = vadd.f32 0.0, %v1507
    %v1509 = vpop.f32.mrb[0].mxu0
    %v1510 = vadd.f32 0.0, %v1509
    %v1511 = vpop.f32.mrb[0].mxu0
    %v1512 = vpop.f32.mrb[0].mxu0
    %1513 = vdwg.mxu0
    %v1514 = vadd.f32 %v196, %v1467
    %v1515 = vadd.f32 %v197, %v1469
    %v1516 = vadd.f32 %v198, %v1508
    %v1517 = vadd.f32 %v199, %v1510
    %v1518 = vmul.f32 %v1514, 0.5
    %v1519 = vtanh.pop %v1518
    %v1520 = vmul.f32 %v1519, 0.5
    %v1521 = vadd.f32 %v1520, 0.5
    %v1522 = vmul.f32 %v1515, 0.5
    %v1523 = vtanh.pop %v1522
    %v1524 = vmul.f32 %v1523, 0.5
    %v1525 = vadd.f32 %v1524, 0.5
    %v1526 = vtanh.pop %v1516
    %v1527 = vmul.f32 %v1517, 0.5
    %v1528 = vtanh.pop %v1527
    %v1529 = vmul.f32 %v1528, 0.5
    %v1530 = vadd.f32 %v1529, 0.5
    %v1531 = vmul.f32 %v1525, %v1327
    %v1532 = vmul.f32 %v1521, %v1526
    %v1533 = vadd.f32 %v1531, %v1532
    %v1534 = vtanh.pop %v1533
    %v1535 = vmul.f32 %v1530, %v1534
    %v1536 = vpack.c.bf16 %v1535, %v1535
    %v1537 = vpack.c.bf16 %v1431, %v1431
    %1538 = vmatprep.subr.bf16.mxu0 %v793
    %1539 = vmatpush1.bf16.msra.mxu0 %v792
    %1540 = vmatprep.subr.bf16.mxu0 %v797
    %1541 = vmatpush1.bf16.msra.mxu0 %v796
    %1542 = vmatprep.subr.bf16.mxu0 %v801
    %1543 = vmatpush1.bf16.msra.mxu0 %v800
    %1544 = vmatprep.subr.bf16.mxu0 %v805
    %1545 = vmatpush1.bf16.msra.mxu0 %v804
    %1546 = vmatprep.subr.bf16.mxu0 %v809
    %1547 = vmatpush1.bf16.msra.mxu0 %v808
    %1548 = vmatprep.subr.bf16.mxu0 %v813
    %1549 = vmatpush1.bf16.msra.mxu0 %v812
    %1550 = vmatprep.subr.bf16.mxu0 %v817
    %1551 = vmatpush1.bf16.msra.mxu0 %v816
    %1552 = vmatprep.subr.bf16.mxu0 %v821
    %1553 = vmatpush1.bf16.msra.mxu0 %v820
    %1554 = vmatprep.subr.bf16.mxu0 %v825
    %1555 = vmatpush1.bf16.msra.mxu0 %v824
    %1556 = vmatprep.subr.bf16.mxu0 %v829
    %1557 = vmatpush1.bf16.msra.mxu0 %v828
    %1558 = vmatprep.subr.bf16.mxu0 %v833
    %1559 = vmatpush1.bf16.msra.mxu0 %v832
    %1560 = vmatprep.subr.bf16.mxu0 %v837
    %1561 = vmatpush1.bf16.msra.mxu0 %v836
    %1562 = vmatprep.subr.bf16.mxu0 %v841
    %1563 = vmatpush1.bf16.msra.mxu0 %v840
    %1564 = vmatprep.subr.bf16.mxu0 %v845
    %1565 = vmatpush1.bf16.msra.mxu0 %v844
    %1566 = vmatprep.subr.bf16.mxu0 %v849
    %1567 = vmatpush1.bf16.msra.mxu0 %v848
    %1568 = vmatprep.subr.bf16.mxu0 %v853
    %1569 = vmatpush1.bf16.msra.mxu0 %v852
    %1570 = vmatprep.mubr.bf16.mxu0 %v1537
    %1571 = vmatmul.mubr.bf16.gmra.mrb[0].mxu0 %v1536
    %v1572 = vpop.f32.mrb[0].mxu0
    %v1573 = vadd.f32 %v221, %v1572
    %v1574 = vpop.f32.mrb[0].mxu0
    %v1575 = vadd.f32 %v225, %v1574
    %v1576 = vpop.f32.mrb[0].mxu0
    %v1577 = vpop.f32.mrb[0].mxu0
    %1578 = vdwg.mxu0
    %1579 = vmatprep.subr.bf16.mxu0 %v795
    %1580 = vmatpush1.bf16.msra.mxu0 %v794
    %1581 = vmatprep.subr.bf16.mxu0 %v799
    %1582 = vmatpush1.bf16.msra.mxu0 %v798
    %1583 = vmatprep.subr.bf16.mxu0 %v803
    %1584 = vmatpush1.bf16.msra.mxu0 %v802
    %1585 = vmatprep.subr.bf16.mxu0 %v807
    %1586 = vmatpush1.bf16.msra.mxu0 %v806
    %1587 = vmatprep.subr.bf16.mxu0 %v811
    %1588 = vmatpush1.bf16.msra.mxu0 %v810
    %1589 = vmatprep.subr.bf16.mxu0 %v815
    %1590 = vmatpush1.bf16.msra.mxu0 %v814
    %1591 = vmatprep.subr.bf16.mxu0 %v819
    %1592 = vmatpush1.bf16.msra.mxu0 %v818
    %1593 = vmatprep.subr.bf16.mxu0 %v823
    %1594 = vmatpush1.bf16.msra.mxu0 %v822
    %1595 = vmatprep.subr.bf16.mxu0 %v827
    %1596 = vmatpush1.bf16.msra.mxu0 %v826
    %1597 = vmatprep.subr.bf16.mxu0 %v831
    %1598 = vmatpush1.bf16.msra.mxu0 %v830
    %1599 = vmatprep.subr.bf16.mxu0 %v835
    %1600 = vmatpush1.bf16.msra.mxu0 %v834
    %1601 = vmatprep.subr.bf16.mxu0 %v839
    %1602 = vmatpush1.bf16.msra.mxu0 %v838
    %1603 = vmatprep.subr.bf16.mxu0 %v843
    %1604 = vmatpush1.bf16.msra.mxu0 %v842
    %1605 = vmatprep.subr.bf16.mxu0 %v847
    %1606 = vmatpush1.bf16.msra.mxu0 %v846
    %1607 = vmatprep.subr.bf16.mxu0 %v851
    %1608 = vmatpush1.bf16.msra.mxu0 %v850
    %1609 = vmatprep.subr.bf16.mxu0 %v855
    %1610 = vmatpush1.bf16.msra.mxu0 %v854
    %1611 = vmatprep.mubr.bf16.mxu0 %v1537
    %1612 = vmatmul.mubr.bf16.gmra.mrb[0].mxu0 %v1536
    %v1613 = vpop.f32.mrb[0].mxu0
    %v1614 = vadd.f32 %v229, %v1613
    %v1615 = vpop.f32.mrb[0].mxu0
    %v1616 = vadd.f32 %v233, %v1615
    %v1617 = vpop.f32.mrb[0].mxu0
    %v1618 = vpop.f32.mrb[0].mxu0
    %1619 = vdwg.mxu0
    %v1620 = vmul.f32 %v1573, 0.5
    %v1621 = vtanh.pop %v1620
    %v1622 = vmul.f32 %v1621, 0.5
    %v1623 = vadd.f32 %v1622, 0.5
    %v1624 = vmul.f32 %v1575, 0.5
    %v1625 = vtanh.pop %v1624
    %v1626 = vmul.f32 %v1625, 0.5
    %v1627 = vadd.f32 %v1626, 0.5
    %v1628 = vtanh.pop %v1614
    %v1629 = vmul.f32 %v1616, 0.5
    %v1630 = vtanh.pop %v1629
    %v1631 = vmul.f32 %v1630, 0.5
    %v1632 = vadd.f32 %v1631, 0.5
    %v1633 = vmul.f32 %v1627, %v1429
    %v1634 = vmul.f32 %v1623, %v1628
    %v1635 = vadd.f32 %v1633, %v1634
    %v1636 = vtanh.pop %v1635
    %v1637 = vmul.f32 %v1632, %v1636
    %1638 = vmatprep.subr.bf16.mxu0 %v367
    %1639 = vmatpush1.bf16.msra.mxu0 %v366
    %1640 = vmatprep.subr.bf16.mxu0 %v371
    %1641 = vmatpush1.bf16.msra.mxu0 %v370
    %1642 = vmatprep.subr.bf16.mxu0 %v375
    %1643 = vmatpush1.bf16.msra.mxu0 %v374
    %1644 = vmatprep.subr.bf16.mxu0 %v379
    %1645 = vmatpush1.bf16.msra.mxu0 %v378
    %1646 = vmatprep.subr.bf16.mxu0 %v383
    %1647 = vmatpush1.bf16.msra.mxu0 %v382
    %1648 = vmatprep.subr.bf16.mxu0 %v387
    %1649 = vmatpush1.bf16.msra.mxu0 %v386
    %1650 = vmatprep.subr.bf16.mxu0 %v391
    %1651 = vmatpush1.bf16.msra.mxu0 %v390
    %1652 = vmatprep.subr.bf16.mxu0 %v395
    %1653 = vmatpush1.bf16.msra.mxu0 %v394
    %1654 = vmatprep.subr.bf16.mxu0 0
    %1655 = vmatpush1.bf16.msra.mxu0 0
    %1656 = vmatprep.subr.bf16.mxu0 0
    %1657 = vmatpush1.bf16.msra.mxu0 0
    %1658 = vmatprep.subr.bf16.mxu0 0
    %1659 = vmatpush1.bf16.msra.mxu0 0
    %1660 = vmatprep.subr.bf16.mxu0 0
    %1661 = vmatpush1.bf16.msra.mxu0 0
    %1662 = vmatprep.subr.bf16.mxu0 0
    %1663 = vmatpush1.bf16.msra.mxu0 0
    %1664 = vmatprep.subr.bf16.mxu0 0
    %1665 = vmatpush1.bf16.msra.mxu0 0
    %1666 = vmatprep.subr.bf16.mxu0 0
    %1667 = vmatpush1.bf16.msra.mxu0 0
    %1668 = vmatprep.subr.bf16.mxu0 0
    %1669 = vmatpush1.bf16.msra.mxu0 0
    %1670 = vmatprep.mubr.bf16.mxu0 0
    %1671 = vmatmul.mubr.bf16.gmra.mrb[0].mxu0 %v1536
    %v1672 = vpop.f32.mrb[0].mxu0
    %v1673 = vadd.f32 0.0, %v1672
    %v1674 = vpop.f32.mrb[0].mxu0
    %v1675 = vadd.f32 0.0, %v1674
    %v1676 = vpop.f32.mrb[0].mxu0
    %v1677 = vpop.f32.mrb[0].mxu0
    %1678 = vdwg.mxu0
    %1679 = vmatprep.subr.bf16.mxu0 %v369
    %1680 = vmatpush1.bf16.msra.mxu0 %v368
    %1681 = vmatprep.subr.bf16.mxu0 %v373
    %1682 = vmatpush1.bf16.msra.mxu0 %v372
    %1683 = vmatprep.subr.bf16.mxu0 %v377
    %1684 = vmatpush1.bf16.msra.mxu0 %v376
    %1685 = vmatprep.subr.bf16.mxu0 %v381
    %1686 = vmatpush1.bf16.msra.mxu0 %v380
    %1687 = vmatprep.subr.bf16.mxu0 %v385
    %1688 = vmatpush1.bf16.msra.mxu0 %v384
    %1689 = vmatprep.subr.bf16.mxu0 %v389
    %1690 = vmatpush1.bf16.msra.mxu0 %v388
    %1691 = vmatprep.subr.bf16.mxu0 %v393
    %1692 = vmatpush1.bf16.msra.mxu0 %v392
    %1693 = vmatprep.subr.bf16.mxu0 %v397
    %1694 = vmatpush1.bf16.msra.mxu0 %v396
    %1695 = vmatprep.subr.bf16.mxu0 0
    %1696 = vmatpush1.bf16.msra.mxu0 0
    %1697 = vmatprep.subr.bf16.mxu0 0
    %1698 = vmatpush1.bf16.msra.mxu0 0
    %1699 = vmatprep.subr.bf16.mxu0 0
    %1700 = vmatpush1.bf16.msra.mxu0 0
    %1701 = vmatprep.subr.bf16.mxu0 0
    %1702 = vmatpush1.bf16.msra.mxu0 0
    %1703 = vmatprep.subr.bf16.mxu0 0
    %1704 = vmatpush1.bf16.msra.mxu0 0
    %1705 = vmatprep.subr.bf16.mxu0 0
    %1706 = vmatpush1.bf16.msra.mxu0 0
    %1707 = vmatprep.subr.bf16.mxu0 0
    %1708 = vmatpush1.bf16.msra.mxu0 0
    %1709 = vmatprep.subr.bf16.mxu0 0
    %1710 = vmatpush1.bf16.msra.mxu0 0
    %1711 = vmatprep.mubr.bf16.mxu0 0
    %1712 = vmatmul.mubr.bf16.gmra.mrb[0].mxu0 %v1536
    %v1713 = vpop.f32.mrb[0].mxu0
    %v1714 = vadd.f32 0.0, %v1713
    %v1715 = vpop.f32.mrb[0].mxu0
    %v1716 = vadd.f32 0.0, %v1715
    %v1717 = vpop.f32.mrb[0].mxu0
    %v1718 = vpop.f32.mrb[0].mxu0
    %1719 = vdwg.mxu0
    %v1720 = vadd.f32 %v200, %v1673
    %v1721 = vadd.f32 %v201, %v1675
    %v1722 = vadd.f32 %v202, %v1714
    %v1723 = vadd.f32 %v203, %v1716
    %v1724 = vmul.f32 %v1720, 0.5
    %v1725 = vtanh.pop %v1724
    %v1726 = vmul.f32 %v1725, 0.5
    %v1727 = vadd.f32 %v1726, 0.5
    %v1728 = vmul.f32 %v1721, 0.5
    %v1729 = vtanh.pop %v1728
    %v1730 = vmul.f32 %v1729, 0.5
    %v1731 = vadd.f32 %v1730, 0.5
    %v1732 = vtanh.pop %v1722
    %v1733 = vmul.f32 %v1723, 0.5
    %v1734 = vtanh.pop %v1733
    %v1735 = vmul.f32 %v1734, 0.5
    %v1736 = vadd.f32 %v1735, 0.5
    %v1737 = vmul.f32 %v1731, %v1533
    %v1738 = vmul.f32 %v1727, %v1732
    %v1739 = vadd.f32 %v1737, %v1738
    %v1740 = vtanh.pop %v1739
    %v1741 = vmul.f32 %v1736, %v1740
    %v1742 = vpack.c.bf16 %v1741, %v1741
    %v1743 = vpack.c.bf16 %v1637, %v1637
    %1744 = vmatprep.subr.bf16.mxu0 %v793
    %1745 = vmatpush1.bf16.msra.mxu0 %v792
    %1746 = vmatprep.subr.bf16.mxu0 %v797
    %1747 = vmatpush1.bf16.msra.mxu0 %v796
    %1748 = vmatprep.subr.bf16.mxu0 %v801
    %1749 = vmatpush1.bf16.msra.mxu0 %v800
    %1750 = vmatprep.subr.bf16.mxu0 %v805
    %1751 = vmatpush1.bf16.msra.mxu0 %v804
    %1752 = vmatprep.subr.bf16.mxu0 %v809
    %1753 = vmatpush1.bf16.msra.mxu0 %v808
    %1754 = vmatprep.subr.bf16.mxu0 %v813
    %1755 = vmatpush1.bf16.msra.mxu0 %v812
    %1756 = vmatprep.subr.bf16.mxu0 %v817
    %1757 = vmatpush1.bf16.msra.mxu0 %v816
    %1758 = vmatprep.subr.bf16.mxu0 %v821
    %1759 = vmatpush1.bf16.msra.mxu0 %v820
    %1760 = vmatprep.subr.bf16.mxu0 %v825
    %1761 = vmatpush1.bf16.msra.mxu0 %v824
    %1762 = vmatprep.subr.bf16.mxu0 %v829
    %1763 = vmatpush1.bf16.msra.mxu0 %v828
    %1764 = vmatprep.subr.bf16.mxu0 %v833
    %1765 = vmatpush1.bf16.msra.mxu0 %v832
    %1766 = vmatprep.subr.bf16.mxu0 %v837
    %1767 = vmatpush1.bf16.msra.mxu0 %v836
    %1768 = vmatprep.subr.bf16.mxu0 %v841
    %1769 = vmatpush1.bf16.msra.mxu0 %v840
    %1770 = vmatprep.subr.bf16.mxu0 %v845
    %1771 = vmatpush1.bf16.msra.mxu0 %v844
    %1772 = vmatprep.subr.bf16.mxu0 %v849
    %1773 = vmatpush1.bf16.msra.mxu0 %v848
    %1774 = vmatprep.subr.bf16.mxu0 %v853
    %1775 = vmatpush1.bf16.msra.mxu0 %v852
    %1776 = vmatprep.mubr.bf16.mxu0 %v1743
    %1777 = vmatmul.mubr.bf16.gmra.mrb[0].mxu0 %v1742
    %v1778 = vpop.f32.mrb[0].mxu0
    %v1779 = vadd.f32 %v221, %v1778
    %v1780 = vpop.f32.mrb[0].mxu0
    %v1781 = vadd.f32 %v225, %v1780
    %v1782 = vpop.f32.mrb[0].mxu0
    %v1783 = vpop.f32.mrb[0].mxu0
    %1784 = vdwg.mxu0
    %1785 = vmatprep.subr.bf16.mxu0 %v795
    %1786 = vmatpush1.bf16.msra.mxu0 %v794
    %1787 = vmatprep.subr.bf16.mxu0 %v799
    %1788 = vmatpush1.bf16.msra.mxu0 %v798
    %1789 = vmatprep.subr.bf16.mxu0 %v803
    %1790 = vmatpush1.bf16.msra.mxu0 %v802
    %1791 = vmatprep.subr.bf16.mxu0 %v807
    %1792 = vmatpush1.bf16.msra.mxu0 %v806
    %1793 = vmatprep.subr.bf16.mxu0 %v811
    %1794 = vmatpush1.bf16.msra.mxu0 %v810
    %1795 = vmatprep.subr.bf16.mxu0 %v815
    %1796 = vmatpush1.bf16.msra.mxu0 %v814
    %1797 = vmatprep.subr.bf16.mxu0 %v819
    %1798 = vmatpush1.bf16.msra.mxu0 %v818
    %1799 = vmatprep.subr.bf16.mxu0 %v823
    %1800 = vmatpush1.bf16.msra.mxu0 %v822
    %1801 = vmatprep.subr.bf16.mxu0 %v827
    %1802 = vmatpush1.bf16.msra.mxu0 %v826
    %1803 = vmatprep.subr.bf16.mxu0 %v831
    %1804 = vmatpush1.bf16.msra.mxu0 %v830
    %1805 = vmatprep.subr.bf16.mxu0 %v835
    %1806 = vmatpush1.bf16.msra.mxu0 %v834
    %1807 = vmatprep.subr.bf16.mxu0 %v839
    %1808 = vmatpush1.bf16.msra.mxu0 %v838
    %1809 = vmatprep.subr.bf16.mxu0 %v843
    %1810 = vmatpush1.bf16.msra.mxu0 %v842
    %1811 = vmatprep.subr.bf16.mxu0 %v847
    %1812 = vmatpush1.bf16.msra.mxu0 %v846
    %1813 = vmatprep.subr.bf16.mxu0 %v851
    %1814 = vmatpush1.bf16.msra.mxu0 %v850
    %1815 = vmatprep.subr.bf16.mxu0 %v855
    %1816 = vmatpush1.bf16.msra.mxu0 %v854
    %1817 = vmatprep.mubr.bf16.mxu0 %v1743
    %1818 = vmatmul.mubr.bf16.gmra.mrb[0].mxu0 %v1742
    %v1819 = vpop.f32.mrb[0].mxu0
    %v1820 = vadd.f32 %v229, %v1819
    %v1821 = vpop.f32.mrb[0].mxu0
    %v1822 = vadd.f32 %v233, %v1821
    %v1823 = vpop.f32.mrb[0].mxu0
    %v1824 = vpop.f32.mrb[0].mxu0
    %1825 = vdwg.mxu0
    %v1826 = vmul.f32 %v1779, 0.5
    %v1827 = vtanh.pop %v1826
    %v1828 = vmul.f32 %v1827, 0.5
    %v1829 = vadd.f32 %v1828, 0.5
    %v1830 = vmul.f32 %v1781, 0.5
    %v1831 = vtanh.pop %v1830
    %v1832 = vmul.f32 %v1831, 0.5
    %v1833 = vadd.f32 %v1832, 0.5
    %v1834 = vtanh.pop %v1820
    %v1835 = vmul.f32 %v1822, 0.5
    %v1836 = vtanh.pop %v1835
    %v1837 = vmul.f32 %v1836, 0.5
    %v1838 = vadd.f32 %v1837, 0.5
    %v1839 = vmul.f32 %v1833, %v1635
    %v1840 = vmul.f32 %v1829, %v1834
    %v1841 = vadd.f32 %v1839, %v1840
    %v1842 = vtanh.pop %v1841
    %v1843 = vmul.f32 %v1838, %v1842
    %1844 = vmatprep.subr.bf16.mxu0 %v367
    %1845 = vmatpush1.bf16.msra.mxu0 %v366
    %1846 = vmatprep.subr.bf16.mxu0 %v371
    %1847 = vmatpush1.bf16.msra.mxu0 %v370
    %1848 = vmatprep.subr.bf16.mxu0 %v375
    %1849 = vmatpush1.bf16.msra.mxu0 %v374
    %1850 = vmatprep.subr.bf16.mxu0 %v379
    %1851 = vmatpush1.bf16.msra.mxu0 %v378
    %1852 = vmatprep.subr.bf16.mxu0 %v383
    %1853 = vmatpush1.bf16.msra.mxu0 %v382
    %1854 = vmatprep.subr.bf16.mxu0 %v387
    %1855 = vmatpush1.bf16.msra.mxu0 %v386
    %1856 = vmatprep.subr.bf16.mxu0 %v391
    %1857 = vmatpush1.bf16.msra.mxu0 %v390
    %1858 = vmatprep.subr.bf16.mxu0 %v395
    %1859 = vmatpush1.bf16.msra.mxu0 %v394
    %1860 = vmatprep.subr.bf16.mxu0 0
    %1861 = vmatpush1.bf16.msra.mxu0 0
    %1862 = vmatprep.subr.bf16.mxu0 0
    %1863 = vmatpush1.bf16.msra.mxu0 0
    %1864 = vmatprep.subr.bf16.mxu0 0
    %1865 = vmatpush1.bf16.msra.mxu0 0
    %1866 = vmatprep.subr.bf16.mxu0 0
    %1867 = vmatpush1.bf16.msra.mxu0 0
    %1868 = vmatprep.subr.bf16.mxu0 0
    %1869 = vmatpush1.bf16.msra.mxu0 0
    %1870 = vmatprep.subr.bf16.mxu0 0
    %1871 = vmatpush1.bf16.msra.mxu0 0
    %1872 = vmatprep.subr.bf16.mxu0 0
    %1873 = vmatpush1.bf16.msra.mxu0 0
    %1874 = vmatprep.subr.bf16.mxu0 0
    %1875 = vmatpush1.bf16.msra.mxu0 0
    %1876 = vmatprep.mubr.bf16.mxu0 0
    %1877 = vmatmul.mubr.bf16.gmra.mrb[0].mxu0 %v1742
    %v1878 = vpop.f32.mrb[0].mxu0
    %v1879 = vadd.f32 0.0, %v1878
    %v1880 = vpop.f32.mrb[0].mxu0
    %v1881 = vadd.f32 0.0, %v1880
    %v1882 = vpop.f32.mrb[0].mxu0
    %v1883 = vpop.f32.mrb[0].mxu0
    %1884 = vdwg.mxu0
    %1885 = vmatprep.subr.bf16.mxu0 %v369
    %1886 = vmatpush1.bf16.msra.mxu0 %v368
    %1887 = vmatprep.subr.bf16.mxu0 %v373
    %1888 = vmatpush1.bf16.msra.mxu0 %v372
    %1889 = vmatprep.subr.bf16.mxu0 %v377
    %1890 = vmatpush1.bf16.msra.mxu0 %v376
    %1891 = vmatprep.subr.bf16.mxu0 %v381
    %1892 = vmatpush1.bf16.msra.mxu0 %v380
    %1893 = vmatprep.subr.bf16.mxu0 %v385
    %1894 = vmatpush1.bf16.msra.mxu0 %v384
    %1895 = vmatprep.subr.bf16.mxu0 %v389
    %1896 = vmatpush1.bf16.msra.mxu0 %v388
    %1897 = vmatprep.subr.bf16.mxu0 %v393
    %1898 = vmatpush1.bf16.msra.mxu0 %v392
    %1899 = vmatprep.subr.bf16.mxu0 %v397
    %1900 = vmatpush1.bf16.msra.mxu0 %v396
    %1901 = vmatprep.subr.bf16.mxu0 0
    %1902 = vmatpush1.bf16.msra.mxu0 0
    %1903 = vmatprep.subr.bf16.mxu0 0
    %1904 = vmatpush1.bf16.msra.mxu0 0
    %1905 = vmatprep.subr.bf16.mxu0 0
    %1906 = vmatpush1.bf16.msra.mxu0 0
    %1907 = vmatprep.subr.bf16.mxu0 0
    %1908 = vmatpush1.bf16.msra.mxu0 0
    %1909 = vmatprep.subr.bf16.mxu0 0
    %1910 = vmatpush1.bf16.msra.mxu0 0
    %1911 = vmatprep.subr.bf16.mxu0 0
    %1912 = vmatpush1.bf16.msra.mxu0 0
    %1913 = vmatprep.subr.bf16.mxu0 0
    %1914 = vmatpush1.bf16.msra.mxu0 0
    %1915 = vmatprep.subr.bf16.mxu0 0
    %1916 = vmatpush1.bf16.msra.mxu0 0
    %1917 = vmatprep.mubr.bf16.mxu0 0
    %1918 = vmatmul.mubr.bf16.gmra.mrb[0].mxu0 %v1742
    %v1919 = vpop.f32.mrb[0].mxu0
    %v1920 = vadd.f32 0.0, %v1919
    %v1921 = vpop.f32.mrb[0].mxu0
    %v1922 = vadd.f32 0.0, %v1921
    %v1923 = vpop.f32.mrb[0].mxu0
    %v1924 = vpop.f32.mrb[0].mxu0
    %1925 = vdwg.mxu0
    %v1926 = vadd.f32 %v204, %v1879
    %v1927 = vadd.f32 %v205, %v1881
    %v1928 = vadd.f32 %v206, %v1920
    %v1929 = vadd.f32 %v207, %v1922
    %v1930 = vmul.f32 %v1926, 0.5
    %v1931 = vtanh.pop %v1930
    %v1932 = vmul.f32 %v1931, 0.5
    %v1933 = vadd.f32 %v1932, 0.5
    %v1934 = vmul.f32 %v1927, 0.5
    %v1935 = vtanh.pop %v1934
    %v1936 = vmul.f32 %v1935, 0.5
    %v1937 = vadd.f32 %v1936, 0.5
    %v1938 = vtanh.pop %v1928
    %v1939 = vmul.f32 %v1929, 0.5
    %v1940 = vtanh.pop %v1939
    %v1941 = vmul.f32 %v1940, 0.5
    %v1942 = vadd.f32 %v1941, 0.5
    %v1943 = vmul.f32 %v1937, %v1739
    %v1944 = vmul.f32 %v1933, %v1938
    %v1945 = vadd.f32 %v1943, %v1944
    %v1946 = vtanh.pop %v1945
    %v1947 = vmul.f32 %v1942, %v1946
    %v1948 = vpack.c.bf16 %v1947, %v1947
    %v1949 = vpack.c.bf16 %v1843, %v1843
    %1950 = vmatprep.subr.bf16.mxu0 %v793
    %1951 = vmatpush1.bf16.msra.mxu0 %v792
    %1952 = vmatprep.subr.bf16.mxu0 %v797
    %1953 = vmatpush1.bf16.msra.mxu0 %v796
    %1954 = vmatprep.subr.bf16.mxu0 %v801
    %1955 = vmatpush1.bf16.msra.mxu0 %v800
    %1956 = vmatprep.subr.bf16.mxu0 %v805
    %1957 = vmatpush1.bf16.msra.mxu0 %v804
    %1958 = vmatprep.subr.bf16.mxu0 %v809
    %1959 = vmatpush1.bf16.msra.mxu0 %v808
    %1960 = vmatprep.subr.bf16.mxu0 %v813
    %1961 = vmatpush1.bf16.msra.mxu0 %v812
    %1962 = vmatprep.subr.bf16.mxu0 %v817
    %1963 = vmatpush1.bf16.msra.mxu0 %v816
    %1964 = vmatprep.subr.bf16.mxu0 %v821
    %1965 = vmatpush1.bf16.msra.mxu0 %v820
    %1966 = vmatprep.subr.bf16.mxu0 %v825
    %1967 = vmatpush1.bf16.msra.mxu0 %v824
    %1968 = vmatprep.subr.bf16.mxu0 %v829
    %1969 = vmatpush1.bf16.msra.mxu0 %v828
    %1970 = vmatprep.subr.bf16.mxu0 %v833
    %1971 = vmatpush1.bf16.msra.mxu0 %v832
    %1972 = vmatprep.subr.bf16.mxu0 %v837
    %1973 = vmatpush1.bf16.msra.mxu0 %v836
    %1974 = vmatprep.subr.bf16.mxu0 %v841
    %1975 = vmatpush1.bf16.msra.mxu0 %v840
    %1976 = vmatprep.subr.bf16.mxu0 %v845
    %1977 = vmatpush1.bf16.msra.mxu0 %v844
    %1978 = vmatprep.subr.bf16.mxu0 %v849
    %1979 = vmatpush1.bf16.msra.mxu0 %v848
    %1980 = vmatprep.subr.bf16.mxu0 %v853
    %1981 = vmatpush1.bf16.msra.mxu0 %v852
    %1982 = vmatprep.mubr.bf16.mxu0 %v1949
    %1983 = vmatmul.mubr.bf16.gmra.mrb[0].mxu0 %v1948
    %v1984 = vpop.f32.mrb[0].mxu0
    %v1985 = vadd.f32 %v221, %v1984
    %v1986 = vpop.f32.mrb[0].mxu0
    %v1987 = vadd.f32 %v225, %v1986
    %v1988 = vpop.f32.mrb[0].mxu0
    %v1989 = vpop.f32.mrb[0].mxu0
    %1990 = vdwg.mxu0
    %1991 = vmatprep.subr.bf16.mxu0 %v795
    %1992 = vmatpush1.bf16.msra.mxu0 %v794
    %1993 = vmatprep.subr.bf16.mxu0 %v799
    %1994 = vmatpush1.bf16.msra.mxu0 %v798
    %1995 = vmatprep.subr.bf16.mxu0 %v803
    %1996 = vmatpush1.bf16.msra.mxu0 %v802
    %1997 = vmatprep.subr.bf16.mxu0 %v807
    %1998 = vmatpush1.bf16.msra.mxu0 %v806
    %1999 = vmatprep.subr.bf16.mxu0 %v811
    %2000 = vmatpush1.bf16.msra.mxu0 %v810
    %2001 = vmatprep.subr.bf16.mxu0 %v815
    %2002 = vmatpush1.bf16.msra.mxu0 %v814
    %2003 = vmatprep.subr.bf16.mxu0 %v819
    %2004 = vmatpush1.bf16.msra.mxu0 %v818
    %2005 = vmatprep.subr.bf16.mxu0 %v823
    %2006 = vmatpush1.bf16.msra.mxu0 %v822
    %2007 = vmatprep.subr.bf16.mxu0 %v827
    %2008 = vmatpush1.bf16.msra.mxu0 %v826
    %2009 = vmatprep.subr.bf16.mxu0 %v831
    %2010 = vmatpush1.bf16.msra.mxu0 %v830
    %2011 = vmatprep.subr.bf16.mxu0 %v835
    %2012 = vmatpush1.bf16.msra.mxu0 %v834
    %2013 = vmatprep.subr.bf16.mxu0 %v839
    %2014 = vmatpush1.bf16.msra.mxu0 %v838
    %2015 = vmatprep.subr.bf16.mxu0 %v843
    %2016 = vmatpush1.bf16.msra.mxu0 %v842
    %2017 = vmatprep.subr.bf16.mxu0 %v847
    %2018 = vmatpush1.bf16.msra.mxu0 %v846
    %2019 = vmatprep.subr.bf16.mxu0 %v851
    %2020 = vmatpush1.bf16.msra.mxu0 %v850
    %2021 = vmatprep.subr.bf16.mxu0 %v855
    %2022 = vmatpush1.bf16.msra.mxu0 %v854
    %2023 = vmatprep.mubr.bf16.mxu0 %v1949
    %2024 = vmatmul.mubr.bf16.gmra.mrb[0].mxu0 %v1948
    %v2025 = vpop.f32.mrb[0].mxu0
    %v2026 = vadd.f32 %v229, %v2025
    %v2027 = vpop.f32.mrb[0].mxu0
    %v2028 = vadd.f32 %v233, %v2027
    %v2029 = vpop.f32.mrb[0].mxu0
    %v2030 = vpop.f32.mrb[0].mxu0
    %2031 = vdwg.mxu0
    %v2032 = vmul.f32 %v1985, 0.5
    %v2033 = vtanh.pop %v2032
    %v2034 = vmul.f32 %v2033, 0.5
    %v2035 = vadd.f32 %v2034, 0.5
    %v2036 = vmul.f32 %v1987, 0.5
    %v2037 = vtanh.pop %v2036
    %v2038 = vmul.f32 %v2037, 0.5
    %v2039 = vadd.f32 %v2038, 0.5
    %v2040 = vtanh.pop %v2026
    %v2041 = vmul.f32 %v2028, 0.5
    %v2042 = vtanh.pop %v2041
    %v2043 = vmul.f32 %v2042, 0.5
    %v2044 = vadd.f32 %v2043, 0.5
    %v2045 = vmul.f32 %v2039, %v1841
    %v2046 = vmul.f32 %v2035, %v2040
    %v2047 = vadd.f32 %v2045, %v2046
    %v2048 = vtanh.pop %v2047
    %v2049 = vmul.f32 %v2044, %v2048
    %2050 = vmatprep.subr.bf16.mxu0 %v367
    %2051 = vmatpush1.bf16.msra.mxu0 %v366
    %2052 = vmatprep.subr.bf16.mxu0 %v371
    %2053 = vmatpush1.bf16.msra.mxu0 %v370
    %2054 = vmatprep.subr.bf16.mxu0 %v375
    %2055 = vmatpush1.bf16.msra.mxu0 %v374
    %2056 = vmatprep.subr.bf16.mxu0 %v379
    %2057 = vmatpush1.bf16.msra.mxu0 %v378
    %2058 = vmatprep.subr.bf16.mxu0 %v383
    %2059 = vmatpush1.bf16.msra.mxu0 %v382
    %2060 = vmatprep.subr.bf16.mxu0 %v387
    %2061 = vmatpush1.bf16.msra.mxu0 %v386
    %2062 = vmatprep.subr.bf16.mxu0 %v391
    %2063 = vmatpush1.bf16.msra.mxu0 %v390
    %2064 = vmatprep.subr.bf16.mxu0 %v395
    %2065 = vmatpush1.bf16.msra.mxu0 %v394
    %2066 = vmatprep.subr.bf16.mxu0 0
    %2067 = vmatpush1.bf16.msra.mxu0 0
    %2068 = vmatprep.subr.bf16.mxu0 0
    %2069 = vmatpush1.bf16.msra.mxu0 0
    %2070 = vmatprep.subr.bf16.mxu0 0
    %2071 = vmatpush1.bf16.msra.mxu0 0
    %2072 = vmatprep.subr.bf16.mxu0 0
    %2073 = vmatpush1.bf16.msra.mxu0 0
    %2074 = vmatprep.subr.bf16.mxu0 0
    %2075 = vmatpush1.bf16.msra.mxu0 0
    %2076 = vmatprep.subr.bf16.mxu0 0
    %2077 = vmatpush1.bf16.msra.mxu0 0
    %2078 = vmatprep.subr.bf16.mxu0 0
    %2079 = vmatpush1.bf16.msra.mxu0 0
    %2080 = vmatprep.subr.bf16.mxu0 0
    %2081 = vmatpush1.bf16.msra.mxu0 0
    %2082 = vmatprep.mubr.bf16.mxu0 0
    %2083 = vmatmul.mubr.bf16.gmra.mrb[0].mxu0 %v1948
    %v2084 = vpop.f32.mrb[0].mxu0
    %v2085 = vadd.f32 0.0, %v2084
    %v2086 = vpop.f32.mrb[0].mxu0
    %v2087 = vadd.f32 0.0, %v2086
    %v2088 = vpop.f32.mrb[0].mxu0
    %v2089 = vpop.f32.mrb[0].mxu0
    %2090 = vdwg.mxu0
    %2091 = vmatprep.subr.bf16.mxu0 %v369
    %2092 = vmatpush1.bf16.msra.mxu0 %v368
    %2093 = vmatprep.subr.bf16.mxu0 %v373
    %2094 = vmatpush1.bf16.msra.mxu0 %v372
    %2095 = vmatprep.subr.bf16.mxu0 %v377
    %2096 = vmatpush1.bf16.msra.mxu0 %v376
    %2097 = vmatprep.subr.bf16.mxu0 %v381
    %2098 = vmatpush1.bf16.msra.mxu0 %v380
    %2099 = vmatprep.subr.bf16.mxu0 %v385
    %2100 = vmatpush1.bf16.msra.mxu0 %v384
    %2101 = vmatprep.subr.bf16.mxu0 %v389
    %2102 = vmatpush1.bf16.msra.mxu0 %v388
    %2103 = vmatprep.subr.bf16.mxu0 %v393
    %2104 = vmatpush1.bf16.msra.mxu0 %v392
    %2105 = vmatprep.subr.bf16.mxu0 %v397
    %2106 = vmatpush1.bf16.msra.mxu0 %v396
    %2107 = vmatprep.subr.bf16.mxu0 0
    %2108 = vmatpush1.bf16.msra.mxu0 0
    %2109 = vmatprep.subr.bf16.mxu0 0
    %2110 = vmatpush1.bf16.msra.mxu0 0
    %2111 = vmatprep.subr.bf16.mxu0 0
    %2112 = vmatpush1.bf16.msra.mxu0 0
    %2113 = vmatprep.subr.bf16.mxu0 0
    %2114 = vmatpush1.bf16.msra.mxu0 0
    %2115 = vmatprep.subr.bf16.mxu0 0
    %2116 = vmatpush1.bf16.msra.mxu0 0
    %2117 = vmatprep.subr.bf16.mxu0 0
    %2118 = vmatpush1.bf16.msra.mxu0 0
    %2119 = vmatprep.subr.bf16.mxu0 0
    %2120 = vmatpush1.bf16.msra.mxu0 0
    %2121 = vmatprep.subr.bf16.mxu0 0
    %2122 = vmatpush1.bf16.msra.mxu0 0
    %2123 = vmatprep.mubr.bf16.mxu0 0
    %2124 = vmatmul.mubr.bf16.gmra.mrb[0].mxu0 %v1948
    %v2125 = vpop.f32.mrb[0].mxu0
    %v2126 = vadd.f32 0.0, %v2125
    %v2127 = vpop.f32.mrb[0].mxu0
    %v2128 = vadd.f32 0.0, %v2127
    %v2129 = vpop.f32.mrb[0].mxu0
    %v2130 = vpop.f32.mrb[0].mxu0
    %2131 = vdwg.mxu0
    %v2132 = vadd.f32 %v208, %v2085
    %v2133 = vadd.f32 %v209, %v2087
    %v2134 = vadd.f32 %v210, %v2126
    %v2135 = vadd.f32 %v211, %v2128
    %v2136 = vmul.f32 %v2132, 0.5
    %v2137 = vtanh.pop %v2136
    %v2138 = vmul.f32 %v2137, 0.5
    %v2139 = vadd.f32 %v2138, 0.5
    %v2140 = vmul.f32 %v2133, 0.5
    %v2141 = vtanh.pop %v2140
    %v2142 = vmul.f32 %v2141, 0.5
    %v2143 = vadd.f32 %v2142, 0.5
    %v2144 = vtanh.pop %v2134
    %v2145 = vmul.f32 %v2135, 0.5
    %v2146 = vtanh.pop %v2145
    %v2147 = vmul.f32 %v2146, 0.5
    %v2148 = vadd.f32 %v2147, 0.5
    %v2149 = vmul.f32 %v2143, %v1945
    %v2150 = vmul.f32 %v2139, %v2144
    %v2151 = vadd.f32 %v2149, %v2150
    %v2152 = vtanh.pop %v2151
    %v2153 = vmul.f32 %v2148, %v2152
    %v2154 = vpack.c.bf16 %v2153, %v2153
    %v2155 = vpack.c.bf16 %v2049, %v2049
    %2156 = vmatprep.subr.bf16.mxu0 %v793
    %2157 = vmatpush1.bf16.msra.mxu0 %v792
    %2158 = vmatprep.subr.bf16.mxu0 %v797
    %2159 = vmatpush1.bf16.msra.mxu0 %v796
    %2160 = vmatprep.subr.bf16.mxu0 %v801
    %2161 = vmatpush1.bf16.msra.mxu0 %v800
    %2162 = vmatprep.subr.bf16.mxu0 %v805
    %2163 = vmatpush1.bf16.msra.mxu0 %v804
    %2164 = vmatprep.subr.bf16.mxu0 %v809
    %2165 = vmatpush1.bf16.msra.mxu0 %v808
    %2166 = vmatprep.subr.bf16.mxu0 %v813
    %2167 = vmatpush1.bf16.msra.mxu0 %v812
    %2168 = vmatprep.subr.bf16.mxu0 %v817
    %2169 = vmatpush1.bf16.msra.mxu0 %v816
    %2170 = vmatprep.subr.bf16.mxu0 %v821
    %2171 = vmatpush1.bf16.msra.mxu0 %v820
    %2172 = vmatprep.subr.bf16.mxu0 %v825
    %2173 = vmatpush1.bf16.msra.mxu0 %v824
    %2174 = vmatprep.subr.bf16.mxu0 %v829
    %2175 = vmatpush1.bf16.msra.mxu0 %v828
    %2176 = vmatprep.subr.bf16.mxu0 %v833
    %2177 = vmatpush1.bf16.msra.mxu0 %v832
    %2178 = vmatprep.subr.bf16.mxu0 %v837
    %2179 = vmatpush1.bf16.msra.mxu0 %v836
    %2180 = vmatprep.subr.bf16.mxu0 %v841
    %2181 = vmatpush1.bf16.msra.mxu0 %v840
    %2182 = vmatprep.subr.bf16.mxu0 %v845
    %2183 = vmatpush1.bf16.msra.mxu0 %v844
    %2184 = vmatprep.subr.bf16.mxu0 %v849
    %2185 = vmatpush1.bf16.msra.mxu0 %v848
    %2186 = vmatprep.subr.bf16.mxu0 %v853
    %2187 = vmatpush1.bf16.msra.mxu0 %v852
    %2188 = vmatprep.mubr.bf16.mxu0 %v2155
    %2189 = vmatmul.mubr.bf16.gmra.mrb[0].mxu0 %v2154
    %v2190 = vpop.f32.mrb[0].mxu0
    %v2191 = vadd.f32 %v221, %v2190
    %v2192 = vpop.f32.mrb[0].mxu0
    %v2193 = vadd.f32 %v225, %v2192
    %v2194 = vpop.f32.mrb[0].mxu0
    %v2195 = vpop.f32.mrb[0].mxu0
    %2196 = vdwg.mxu0
    %2197 = vmatprep.subr.bf16.mxu0 %v795
    %2198 = vmatpush1.bf16.msra.mxu0 %v794
    %2199 = vmatprep.subr.bf16.mxu0 %v799
    %2200 = vmatpush1.bf16.msra.mxu0 %v798
    %2201 = vmatprep.subr.bf16.mxu0 %v803
    %2202 = vmatpush1.bf16.msra.mxu0 %v802
    %2203 = vmatprep.subr.bf16.mxu0 %v807
    %2204 = vmatpush1.bf16.msra.mxu0 %v806
    %2205 = vmatprep.subr.bf16.mxu0 %v811
    %2206 = vmatpush1.bf16.msra.mxu0 %v810
    %2207 = vmatprep.subr.bf16.mxu0 %v815
    %2208 = vmatpush1.bf16.msra.mxu0 %v814
    %2209 = vmatprep.subr.bf16.mxu0 %v819
    %2210 = vmatpush1.bf16.msra.mxu0 %v818
    %2211 = vmatprep.subr.bf16.mxu0 %v823
    %2212 = vmatpush1.bf16.msra.mxu0 %v822
    %2213 = vmatprep.subr.bf16.mxu0 %v827
    %2214 = vmatpush1.bf16.msra.mxu0 %v826
    %2215 = vmatprep.subr.bf16.mxu0 %v831
    %2216 = vmatpush1.bf16.msra.mxu0 %v830
    %2217 = vmatprep.subr.bf16.mxu0 %v835
    %2218 = vmatpush1.bf16.msra.mxu0 %v834
    %2219 = vmatprep.subr.bf16.mxu0 %v839
    %2220 = vmatpush1.bf16.msra.mxu0 %v838
    %2221 = vmatprep.subr.bf16.mxu0 %v843
    %2222 = vmatpush1.bf16.msra.mxu0 %v842
    %2223 = vmatprep.subr.bf16.mxu0 %v847
    %2224 = vmatpush1.bf16.msra.mxu0 %v846
    %2225 = vmatprep.subr.bf16.mxu0 %v851
    %2226 = vmatpush1.bf16.msra.mxu0 %v850
    %2227 = vmatprep.subr.bf16.mxu0 %v855
    %2228 = vmatpush1.bf16.msra.mxu0 %v854
    %2229 = vmatprep.mubr.bf16.mxu0 %v2155
    %2230 = vmatmul.mubr.bf16.gmra.mrb[0].mxu0 %v2154
    %v2231 = vpop.f32.mrb[0].mxu0
    %v2232 = vadd.f32 %v229, %v2231
    %v2233 = vpop.f32.mrb[0].mxu0
    %v2234 = vadd.f32 %v233, %v2233
    %v2235 = vpop.f32.mrb[0].mxu0
    %v2236 = vpop.f32.mrb[0].mxu0
    %2237 = vdwg.mxu0
    %v2238 = vmul.f32 %v2191, 0.5
    %v2239 = vtanh.pop %v2238
    %v2240 = vmul.f32 %v2239, 0.5
    %v2241 = vadd.f32 %v2240, 0.5
    %v2242 = vmul.f32 %v2193, 0.5
    %v2243 = vtanh.pop %v2242
    %v2244 = vmul.f32 %v2243, 0.5
    %v2245 = vadd.f32 %v2244, 0.5
    %v2246 = vtanh.pop %v2232
    %v2247 = vmul.f32 %v2234, 0.5
    %v2248 = vtanh.pop %v2247
    %v2249 = vmul.f32 %v2248, 0.5
    %v2250 = vadd.f32 %v2249, 0.5
    %v2251 = vmul.f32 %v2245, %v2047
    %v2252 = vmul.f32 %v2241, %v2246
    %v2253 = vadd.f32 %v2251, %v2252
    %v2254 = vtanh.pop %v2253
    %v2255 = vmul.f32 %v2250, %v2254
    %2256 = vmatprep.subr.bf16.mxu0 %v367
    %2257 = vmatpush1.bf16.msra.mxu0 %v366
    %2258 = vmatprep.subr.bf16.mxu0 %v371
    %2259 = vmatpush1.bf16.msra.mxu0 %v370
    %2260 = vmatprep.subr.bf16.mxu0 %v375
    %2261 = vmatpush1.bf16.msra.mxu0 %v374
    %2262 = vmatprep.subr.bf16.mxu0 %v379
    %2263 = vmatpush1.bf16.msra.mxu0 %v378
    %2264 = vmatprep.subr.bf16.mxu0 %v383
    %2265 = vmatpush1.bf16.msra.mxu0 %v382
    %2266 = vmatprep.subr.bf16.mxu0 %v387
    %2267 = vmatpush1.bf16.msra.mxu0 %v386
    %2268 = vmatprep.subr.bf16.mxu0 %v391
    %2269 = vmatpush1.bf16.msra.mxu0 %v390
    %2270 = vmatprep.subr.bf16.mxu0 %v395
    %2271 = vmatpush1.bf16.msra.mxu0 %v394
    %2272 = vmatprep.subr.bf16.mxu0 0
    %2273 = vmatpush1.bf16.msra.mxu0 0
    %2274 = vmatprep.subr.bf16.mxu0 0
    %2275 = vmatpush1.bf16.msra.mxu0 0
    %2276 = vmatprep.subr.bf16.mxu0 0
    %2277 = vmatpush1.bf16.msra.mxu0 0
    %2278 = vmatprep.subr.bf16.mxu0 0
    %2279 = vmatpush1.bf16.msra.mxu0 0
    %2280 = vmatprep.subr.bf16.mxu0 0
    %2281 = vmatpush1.bf16.msra.mxu0 0
    %2282 = vmatprep.subr.bf16.mxu0 0
    %2283 = vmatpush1.bf16.msra.mxu0 0
    %2284 = vmatprep.subr.bf16.mxu0 0
    %2285 = vmatpush1.bf16.msra.mxu0 0
    %2286 = vmatprep.subr.bf16.mxu0 0
    %2287 = vmatpush1.bf16.msra.mxu0 0
    %2288 = vmatprep.mubr.bf16.mxu0 0
    %2289 = vmatmul.mubr.bf16.gmra.mrb[0].mxu0 %v2154
    %v2290 = vpop.f32.mrb[0].mxu0
    %v2291 = vadd.f32 0.0, %v2290
    %v2292 = vpop.f32.mrb[0].mxu0
    %v2293 = vadd.f32 0.0, %v2292
    %v2294 = vpop.f32.mrb[0].mxu0
    %v2295 = vpop.f32.mrb[0].mxu0
    %2296 = vdwg.mxu0
    %2297 = vmatprep.subr.bf16.mxu0 %v369
    %2298 = vmatpush1.bf16.msra.mxu0 %v368
    %2299 = vmatprep.subr.bf16.mxu0 %v373
    %2300 = vmatpush1.bf16.msra.mxu0 %v372
    %2301 = vmatprep.subr.bf16.mxu0 %v377
    %2302 = vmatpush1.bf16.msra.mxu0 %v376
    %2303 = vmatprep.subr.bf16.mxu0 %v381
    %2304 = vmatpush1.bf16.msra.mxu0 %v380
    %2305 = vmatprep.subr.bf16.mxu0 %v385
    %2306 = vmatpush1.bf16.msra.mxu0 %v384
    %2307 = vmatprep.subr.bf16.mxu0 %v389
    %2308 = vmatpush1.bf16.msra.mxu0 %v388
    %2309 = vmatprep.subr.bf16.mxu0 %v393
    %2310 = vmatpush1.bf16.msra.mxu0 %v392
    %2311 = vmatprep.subr.bf16.mxu0 %v397
    %2312 = vmatpush1.bf16.msra.mxu0 %v396
    %2313 = vmatprep.subr.bf16.mxu0 0
    %2314 = vmatpush1.bf16.msra.mxu0 0
    %2315 = vmatprep.subr.bf16.mxu0 0
    %2316 = vmatpush1.bf16.msra.mxu0 0
    %2317 = vmatprep.subr.bf16.mxu0 0
    %2318 = vmatpush1.bf16.msra.mxu0 0
    %2319 = vmatprep.subr.bf16.mxu0 0
    %2320 = vmatpush1.bf16.msra.mxu0 0
    %2321 = vmatprep.subr.bf16.mxu0 0
    %2322 = vmatpush1.bf16.msra.mxu0 0
    %2323 = vmatprep.subr.bf16.mxu0 0
    %2324 = vmatpush1.bf16.msra.mxu0 0
    %2325 = vmatprep.subr.bf16.mxu0 0
    %2326 = vmatpush1.bf16.msra.mxu0 0
    %2327 = vmatprep.subr.bf16.mxu0 0
    %2328 = vmatpush1.bf16.msra.mxu0 0
    %2329 = vmatprep.mubr.bf16.mxu0 0
    %2330 = vmatmul.mubr.bf16.gmra.mrb[0].mxu0 %v2154
    %v2331 = vpop.f32.mrb[0].mxu0
    %v2332 = vadd.f32 0.0, %v2331
    %v2333 = vpop.f32.mrb[0].mxu0
    %v2334 = vadd.f32 0.0, %v2333
    %v2335 = vpop.f32.mrb[0].mxu0
    %v2336 = vpop.f32.mrb[0].mxu0
    %2337 = vdwg.mxu0
    %v2338 = vadd.f32 %v212, %v2291
    %v2339 = vadd.f32 %v213, %v2293
    %v2340 = vadd.f32 %v214, %v2332
    %v2341 = vadd.f32 %v215, %v2334
    %v2342 = vmul.f32 %v2338, 0.5
    %v2343 = vtanh.pop %v2342
    %v2344 = vmul.f32 %v2343, 0.5
    %v2345 = vadd.f32 %v2344, 0.5
    %v2346 = vmul.f32 %v2339, 0.5
    %v2347 = vtanh.pop %v2346
    %v2348 = vmul.f32 %v2347, 0.5
    %v2349 = vadd.f32 %v2348, 0.5
    %v2350 = vtanh.pop %v2340
    %v2351 = vmul.f32 %v2341, 0.5
    %v2352 = vtanh.pop %v2351
    %v2353 = vmul.f32 %v2352, 0.5
    %v2354 = vadd.f32 %v2353, 0.5
    %v2355 = vmul.f32 %v2349, %v2151
    %v2356 = vmul.f32 %v2345, %v2350
    %v2357 = vadd.f32 %v2355, %v2356
    %v2358 = vtanh.pop %v2357
    %v2359 = vmul.f32 %v2354, %v2358
    %v2360 = vpack.c.bf16 %v2359, %v2359
    %v2361 = vpack.c.bf16 %v2255, %v2255
    %2362 = vmatprep.subr.bf16.mxu0 %v793
    %2363 = vmatpush1.bf16.msra.mxu0 %v792
    %2364 = vmatprep.subr.bf16.mxu0 %v797
    %2365 = vmatpush1.bf16.msra.mxu0 %v796
    %2366 = vmatprep.subr.bf16.mxu0 %v801
    %2367 = vmatpush1.bf16.msra.mxu0 %v800
    %2368 = vmatprep.subr.bf16.mxu0 %v805
    %2369 = vmatpush1.bf16.msra.mxu0 %v804
    %2370 = vmatprep.subr.bf16.mxu0 %v809
    %2371 = vmatpush1.bf16.msra.mxu0 %v808
    %2372 = vmatprep.subr.bf16.mxu0 %v813
    %2373 = vmatpush1.bf16.msra.mxu0 %v812
    %2374 = vmatprep.subr.bf16.mxu0 %v817
    %2375 = vmatpush1.bf16.msra.mxu0 %v816
    %2376 = vmatprep.subr.bf16.mxu0 %v821
    %2377 = vmatpush1.bf16.msra.mxu0 %v820
    %2378 = vmatprep.subr.bf16.mxu0 %v825
    %2379 = vmatpush1.bf16.msra.mxu0 %v824
    %2380 = vmatprep.subr.bf16.mxu0 %v829
    %2381 = vmatpush1.bf16.msra.mxu0 %v828
    %2382 = vmatprep.subr.bf16.mxu0 %v833
    %2383 = vmatpush1.bf16.msra.mxu0 %v832
    %2384 = vmatprep.subr.bf16.mxu0 %v837
    %2385 = vmatpush1.bf16.msra.mxu0 %v836
    %2386 = vmatprep.subr.bf16.mxu0 %v841
    %2387 = vmatpush1.bf16.msra.mxu0 %v840
    %2388 = vmatprep.subr.bf16.mxu0 %v845
    %2389 = vmatpush1.bf16.msra.mxu0 %v844
    %2390 = vmatprep.subr.bf16.mxu0 %v849
    %2391 = vmatpush1.bf16.msra.mxu0 %v848
    %2392 = vmatprep.subr.bf16.mxu0 %v853
    %2393 = vmatpush1.bf16.msra.mxu0 %v852
    %2394 = vmatprep.mubr.bf16.mxu0 %v2361
    %2395 = vmatmul.mubr.bf16.gmra.mrb[0].mxu0 %v2360
    %v2396 = vpop.f32.mrb[0].mxu0
    %v2397 = vadd.f32 %v221, %v2396
    %v2398 = vpop.f32.mrb[0].mxu0
    %v2399 = vadd.f32 %v225, %v2398
    %v2400 = vpop.f32.mrb[0].mxu0
    %v2401 = vpop.f32.mrb[0].mxu0
    %2402 = vdwg.mxu0
    %2403 = vmatprep.subr.bf16.mxu0 %v795
    %2404 = vmatpush1.bf16.msra.mxu0 %v794
    %2405 = vmatprep.subr.bf16.mxu0 %v799
    %2406 = vmatpush1.bf16.msra.mxu0 %v798
    %2407 = vmatprep.subr.bf16.mxu0 %v803
    %2408 = vmatpush1.bf16.msra.mxu0 %v802
    %2409 = vmatprep.subr.bf16.mxu0 %v807
    %2410 = vmatpush1.bf16.msra.mxu0 %v806
    %2411 = vmatprep.subr.bf16.mxu0 %v811
    %2412 = vmatpush1.bf16.msra.mxu0 %v810
    %2413 = vmatprep.subr.bf16.mxu0 %v815
    %2414 = vmatpush1.bf16.msra.mxu0 %v814
    %2415 = vmatprep.subr.bf16.mxu0 %v819
    %2416 = vmatpush1.bf16.msra.mxu0 %v818
    %2417 = vmatprep.subr.bf16.mxu0 %v823
    %2418 = vmatpush1.bf16.msra.mxu0 %v822
    %2419 = vmatprep.subr.bf16.mxu0 %v827
    %2420 = vmatpush1.bf16.msra.mxu0 %v826
    %2421 = vmatprep.subr.bf16.mxu0 %v831
    %2422 = vmatpush1.bf16.msra.mxu0 %v830
    %2423 = vmatprep.subr.bf16.mxu0 %v835
    %2424 = vmatpush1.bf16.msra.mxu0 %v834
    %2425 = vmatprep.subr.bf16.mxu0 %v839
    %2426 = vmatpush1.bf16.msra.mxu0 %v838
    %2427 = vmatprep.subr.bf16.mxu0 %v843
    %2428 = vmatpush1.bf16.msra.mxu0 %v842
    %2429 = vmatprep.subr.bf16.mxu0 %v847
    %2430 = vmatpush1.bf16.msra.mxu0 %v846
    %2431 = vmatprep.subr.bf16.mxu0 %v851
    %2432 = vmatpush1.bf16.msra.mxu0 %v850
    %2433 = vmatprep.subr.bf16.mxu0 %v855
    %2434 = vmatpush1.bf16.msra.mxu0 %v854
    %2435 = vmatprep.mubr.bf16.mxu0 %v2361
    %2436 = vmatmul.mubr.bf16.gmra.mrb[0].mxu0 %v2360
    %v2437 = vpop.f32.mrb[0].mxu0
    %v2438 = vadd.f32 %v229, %v2437
    %v2439 = vpop.f32.mrb[0].mxu0
    %v2440 = vadd.f32 %v233, %v2439
    %v2441 = vpop.f32.mrb[0].mxu0
    %v2442 = vpop.f32.mrb[0].mxu0
    %2443 = vdwg.mxu0
    %v2444 = vmul.f32 %v2397, 0.5
    %v2445 = vtanh.pop %v2444
    %v2446 = vmul.f32 %v2445, 0.5
    %v2447 = vadd.f32 %v2446, 0.5
    %v2448 = vmul.f32 %v2399, 0.5
    %v2449 = vtanh.pop %v2448
    %v2450 = vmul.f32 %v2449, 0.5
    %v2451 = vadd.f32 %v2450, 0.5
    %v2452 = vtanh.pop %v2438
    %v2453 = vmul.f32 %v2440, 0.5
    %v2454 = vtanh.pop %v2453
    %v2455 = vmul.f32 %v2454, 0.5
    %v2456 = vadd.f32 %v2455, 0.5
    %v2457 = vmul.f32 %v2451, %v2253
    %v2458 = vmul.f32 %v2447, %v2452
    %v2459 = vadd.f32 %v2457, %v2458
    %v2460 = vtanh.pop %v2459
    %v2461 = vmul.f32 %v2456, %v2460
    %v2462 = vld [vmem:[%s6] sm:$0x1]
    %v2464 = vlaneseq
    %v2465 = vshrl.u32 %v2464, 7
    %v2466 = vsub.s32 0, %v2465
    %v2467 = vrot.slane %v2462, %v2466
    %v2469 = vmul.f32 %v2461, %v2467
    %vm2470 = vcmask 1041408
    %v2471 = vsel %vm2470, %v2469, 0.0
    %2472 = vadd.xlane.f32.xlu0 %v2471
    %v2473 = vpop.xlane.xlu0 %2472
    %v2474 = vld [vmem:[#allocation2] sm:$0x1]
    %v2476 = vlaneseq
    %v2477 = vshrl.u32 %v2476, 7
    %v2478 = vsub.s32 0, %v2477
    %v2479 = vrot.slane %v2474, %v2478
    %v2481 = vadd.f32 %v2473, %v2479
    %vm2482 = vcmask 1024
    %2483 = vst.msk [vmem:[%s8] sm:$0x3] %vm2482, %v2481
    // Predicated region
    $region42: #{tpu_custom_call.1} parent=1 // pred_check
      _
    $region43: #{tpu_custom_call.1} parent=1 // pred_check_branch
      %2485 = sbr.rel (0) target = $region45
    $region44: #{tpu_custom_call.1} parent=1 // pred_region
      _
    $region45: #{tpu_custom_call.1} parent=1 // pred_fallthru
      _
    // Predicated region
    $region46: #{tpu_custom_call.1} parent=1 // pred_check
      _
    $region47: #{tpu_custom_call.1} parent=1 // pred_check_branch
      %2487 = sbr.rel (0) target = $region49
    $region48: #{tpu_custom_call.1} parent=1 // pred_region
      _
    $region49: #{tpu_custom_call.1} parent=1 // pred_fallthru
      _
    %2488 = vsyncpa [#allocation4], 1
    %2489 = vsyncpa [#allocation6], 1

</llo_original>
